<compile_context>
chip_gen: v7x
topology: tpu7x:2x2x1
jax: 0.10.0
libtpu: 0.0.40
codegen_flags: <defaults>
</compile_context>

<pallas_src>
import functools

import jax
import jax.numpy as jnp
from jax import lax
from jax.experimental import pallas as pl
from jax.experimental.pallas import tpu as pltpu


# -----------------------------------------------------------------------------
# Kernel
# -----------------------------------------------------------------------------
def gru_kernel(
    x_ref,        # (t_chunk, Bp, D)   f32  time-major input chunk
    wih0_ref,     # (D, 3*Hp)          bf16 layer-0 input proj (gate blocks at Hp bounds)
    whh0_ref,     # (Hp, 3*Hp)         bf16 layer-0 recurrent weights
    wih1_ref,     # (Hp, 3*Hp)         bf16 layer-1 input proj
    whh1_ref,     # (Hp, 3*Hp)         bf16 layer-1 recurrent weights
    bx0_ref,      # (1, 3*Hp)          f32  b_ih0 with b_hh0[r,z] pre-fused
    bn0_ref,      # (1, Hp)            f32  b_hh0[n]
    bx1_ref,      # (1, 3*Hp)          f32  b_ih1 with b_hh1[r,z] pre-fused
    bn1_ref,      # (1, Hp)            f32  b_hh1[n]
    wfc_ref,      # (1, Hp)            f32  fc_out weight (row)
    bfc_ref,      # (1, 1)             f32  fc_out bias
    out_ref,      # (Bp, 1)            f32
    gx0_ref,      # scratch (t_chunk, Bp, 3*Hp) f32  hoisted layer-0 gate inputs
    h_ref,        # scratch (2, Bp, Hp) f32          hidden state, persists over grid
    *,
    seq_len,      # true T (static)
    padded_len,   # n_chunks * t_chunk (static)
):
    t = pl.program_id(0)
    tc, Bp, D = x_ref.shape
    Hp = whh0_ref.shape[0]

    @pl.when(t == 0)
    def _init():
        h_ref[...] = jnp.zeros_like(h_ref)

    # ---- hoisted layer-0 input projection: one MXU matmul for the whole chunk
    # (independent of the recurrence, so it overlaps with the serial loop).
    x_flat = x_ref[...].reshape(tc * Bp, D).astype(jnp.bfloat16)
    gx0_all = (
        jnp.dot(x_flat, wih0_ref[...], preferred_element_type=jnp.float32)
        + bx0_ref[...]
    )
    gx0_ref[...] = gx0_all.reshape(tc, Bp, 3 * Hp)

    def step(i, carry):
        h0, h1 = carry
        gx0 = gx0_ref[i]                                   # (Bp, 3Hp) f32

        # --- layer 0: recurrent matmul depends only on h0 (short dep chain) ---
        gh0 = jnp.dot(h0.astype(jnp.bfloat16), whh0_ref[...],
                      preferred_element_type=jnp.float32)  # (Bp, 3Hp)
        r0 = jax.nn.sigmoid(gx0[:, 0:Hp] + gh0[:, 0:Hp])
        z0 = jax.nn.sigmoid(gx0[:, Hp:2 * Hp] + gh0[:, Hp:2 * Hp])
        n0 = jnp.tanh(gx0[:, 2 * Hp:3 * Hp]
                      + r0 * (gh0[:, 2 * Hp:3 * Hp] + bn0_ref[...]))
        h0n = (1.0 - z0) * n0 + z0 * h0

        # --- layer 1: input is the fresh layer-0 output ---
        h0n_b = h0n.astype(jnp.bfloat16)
        gx1 = (jnp.dot(h0n_b, wih1_ref[...], preferred_element_type=jnp.float32)
               + bx1_ref[...])
        gh1 = jnp.dot(h1.astype(jnp.bfloat16), whh1_ref[...],
                      preferred_element_type=jnp.float32)
        r1 = jax.nn.sigmoid(gx1[:, 0:Hp] + gh1[:, 0:Hp])
        z1 = jax.nn.sigmoid(gx1[:, Hp:2 * Hp] + gh1[:, Hp:2 * Hp])
        n1 = jnp.tanh(gx1[:, 2 * Hp:3 * Hp]
                      + r1 * (gh1[:, 2 * Hp:3 * Hp] + bn1_ref[...]))
        h1n = (1.0 - z1) * n1 + z1 * h1

        # Mask padded tail timesteps (only traced when T was padded).
        if padded_len != seq_len:
            valid = (t * tc + i) < seq_len
            h0n = jnp.where(valid, h0n, h0)
            h1n = jnp.where(valid, h1n, h1)
        return (h0n, h1n)

    # Partial unroll: scheduler visibility without blowing vreg pressure.
    h0, h1 = lax.fori_loop(0, tc, step, (h_ref[0], h_ref[1]),
                           unroll=min(8, tc))
    h_ref[0] = h0
    h_ref[1] = h1

    @pl.when(t == pl.num_programs(0) - 1)
    def _final():
        # fc_out on the last top-layer state: VPU lane reduction, no MXU.
        out_ref[...] = (
            jnp.sum(h1 * wfc_ref[...], axis=-1, keepdims=True) + bfc_ref[...]
        )


# -----------------------------------------------------------------------------
# Parameter packing: pad H -> Hp (multiple of 128), fuse r/z biases, bf16 weights
# -----------------------------------------------------------------------------
def _pad_gate_cols(w, H, Hp):
    """(in_dim, 3H) -> (in_dim, 3Hp) with each r/z/n gate block at an Hp boundary."""
    out = jnp.zeros((w.shape[0], 3 * Hp), jnp.float32)
    for g in range(3):
        out = out.at[:, g * Hp:g * Hp + H].set(w[:, g * H:(g + 1) * H])
    return out


def _pad_rows(w, rows_pad):
    return jnp.pad(w, ((0, rows_pad - w.shape[0]), (0, 0)))


def pack_params(params, hidden):
    H = hidden
    Hp = ((H + 127) // 128) * 128

    wih0_p = _pad_gate_cols(params["wih0"], H, Hp)                    # (D, 3Hp)
    wih1_p = _pad_rows(_pad_gate_cols(params["wih1"], H, Hp), Hp)     # (Hp, 3Hp)
    whh0_p = _pad_rows(_pad_gate_cols(params["whh0"], H, Hp), Hp)     # (Hp, 3Hp)
    whh1_p = _pad_rows(_pad_gate_cols(params["whh1"], H, Hp), Hp)     # (Hp, 3Hp)

    bih0_p = _pad_gate_cols(params["bih0"], H, Hp)
    bhh0_p = _pad_gate_cols(params["bhh0"], H, Hp)
    bih1_p = _pad_gate_cols(params["bih1"], H, Hp)
    bhh1_p = _pad_gate_cols(params["bhh1"], H, Hp)

    # Fuse b_hh into b_ih for the r/z gates; keep the n-gate b_hh separate
    # (needed for r * (W_hn h + b_hn)).
    bx0 = bih0_p.at[:, :2 * Hp].add(bhh0_p[:, :2 * Hp])
    bn0 = bhh0_p[:, 2 * Hp:]
    bx1 = bih1_p.at[:, :2 * Hp].add(bhh1_p[:, :2 * Hp])
    bn1 = bhh1_p[:, 2 * Hp:]

    wfc_row = jnp.zeros((1, Hp), jnp.float32).at[0, :H].set(params["wfc"][:, 0])

    # MXU operands in bf16 (f32 accumulation happens in-kernel); biases / fc f32.
    bf = jnp.bfloat16
    return {
        "wih0": wih0_p.astype(bf), "whh0": whh0_p.astype(bf),
        "wih1": wih1_p.astype(bf), "whh1": whh1_p.astype(bf),
        "bx0": bx0, "bn0": bn0, "bx1": bx1, "bn1": bn1,
        "wfc": wfc_row, "bfc": params["bfc"],
    }


# -----------------------------------------------------------------------------
# Wrapper
# -----------------------------------------------------------------------------
@jax.jit
def gru_model_forward(x, packed):
    """x: (B, T, D) float32 batch-first (PyTorch convention). Returns squeeze((B,1))."""
    B, T, D = x.shape
    Hp = packed["whh0"].shape[0]
    Bp = ((B + 7) // 8) * 8                      # pad batch to sublane width

    # Time chunking: target <= 64 steps/chunk, no divisor-search cliff.
    n_chunks = -(-T // 64)
    t_chunk = -(-T // n_chunks)
    t_pad_total = n_chunks * t_chunk             # >= T; tail steps masked in-kernel

    # NOTE(perf review): this host-side transpose+pad costs one extra HBM pass
    # over x; at these shapes it's negligible.  For long sequences, fuse it
    # into the producer of x or reorder inside the kernel.
    x_tm = jnp.transpose(x, (1, 0, 2))           # (T, B, D) time-major
    if (t_pad_total != T) or (Bp != B):
        x_tm = jnp.pad(x_tm, ((0, t_pad_total - T), (0, Bp - B), (0, 0)))

    full = lambda a: pl.BlockSpec(a.shape, lambda t: (0,) * a.ndim)

    kernel = functools.partial(gru_kernel, seq_len=T, padded_len=t_pad_total)

    out = pl.pallas_call(
        kernel,
        out_shape=jax.ShapeDtypeStruct((Bp, 1), jnp.float32),
        grid=(n_chunks,),
        in_specs=[
            pl.BlockSpec((t_chunk, Bp, D), lambda t: (t, 0, 0)),   # streamed x
            full(packed["wih0"]), full(packed["whh0"]),
            full(packed["wih1"]), full(packed["whh1"]),
            full(packed["bx0"]), full(packed["bn0"]),
            full(packed["bx1"]), full(packed["bn1"]),
            full(packed["wfc"]), full(packed["bfc"]),
        ],
        out_specs=pl.BlockSpec((Bp, 1), lambda t: (0, 0)),
        scratch_shapes=[
            pltpu.VMEM((t_chunk, Bp, 3 * Hp), jnp.float32),   # hoisted gx0
            pltpu.VMEM((2, Bp, Hp), jnp.float32),             # h0, h1 carry
        ],
        compiler_params=pltpu.CompilerParams(
            dimension_semantics=("arbitrary",),               # time is sequential
        ),
    )(
        x_tm,
        packed["wih0"], packed["whh0"], packed["wih1"], packed["whh1"],
        packed["bx0"], packed["bn0"], packed["bx1"], packed["bn1"],
        packed["wfc"], packed["bfc"],
    )
    # PyTorch .squeeze(): (B,1) -> (B,) for B>1, scalar for B==1.
    return jnp.squeeze(out[:B])


# -----------------------------------------------------------------------------
# Deterministic parameter init (PyTorch-like uniform(-1/sqrt(H), 1/sqrt(H)))
# Natural (unpadded) shapes; weights stored transposed (in, 3H); gate order r,z,n
# -----------------------------------------------------------------------------
def init_params(key, d_feat, hidden):
    k = 1.0 / jnp.sqrt(jnp.float32(hidden))
    keys = jax.random.split(key, 10)

    def u(rk, shape):
        return jax.random.uniform(rk, shape, jnp.float32, -k, k)

    return {
        "wih0": u(keys[0], (d_feat, 3 * hidden)),
        "whh0": u(keys[1], (hidden, 3 * hidden)),
        "bih0": u(keys[2], (1, 3 * hidden)),
        "bhh0": u(keys[3], (1, 3 * hidden)),
        "wih1": u(keys[4], (hidden, 3 * hidden)),
        "whh1": u(keys[5], (hidden, 3 * hidden)),
        "bih1": u(keys[6], (1, 3 * hidden)),
        "bhh1": u(keys[7], (1, 3 * hidden)),
        "wfc": u(keys[8], (hidden, 1)),
        "bfc": u(keys[9], (1, 1)),
    }


# -----------------------------------------------------------------------------
# Pure-JAX reference (unpadded f32 math) for correctness check
# -----------------------------------------------------------------------------
def reference_forward(x, params, hidden):
    B, T, D = x.shape
    hi = jax.lax.Precision.HIGHEST
    h0 = jnp.zeros((B, hidden), jnp.float32)
    h1 = jnp.zeros((B, hidden), jnp.float32)

    def cell(x_t, h, w_ih, w_hh, b_ih, b_hh):
        gx = jnp.dot(x_t, w_ih, precision=hi) + b_ih
        gh = jnp.dot(h, w_hh, precision=hi) + b_hh
        r = jax.nn.sigmoid(gx[:, :hidden] + gh[:, :hidden])
        z = jax.nn.sigmoid(gx[:, hidden:2 * hidden] + gh[:, hidden:2 * hidden])
        n = jnp.tanh(gx[:, 2 * hidden:] + r * gh[:, 2 * hidden:])
        return (1.0 - z) * n + z * h

    for t in range(T):
        x_t = x[:, t, :]
        h0 = cell(x_t, h0, params["wih0"], params["whh0"],
                  params["bih0"], params["bhh0"])
        h1 = cell(h0, h1, params["wih1"], params["whh1"],
                  params["bih1"], params["bhh1"])
    return jnp.squeeze(jnp.dot(h1, params["wfc"], precision=hi) + params["bfc"])


# -----------------------------------------------------------------------------
if __name__ == "__main__":
    B, T, D, H = 2, 8, 6, 64   # small shapes consistent with the module defaults

    key = jax.random.PRNGKey(0)
    kx, kp = jax.random.split(key)
    x = jax.random.normal(kx, (B, T, D), jnp.float32)
    params = init_params(kp, d_feat=D, hidden=H)
    packed = jax.tree_util.tree_map(jax.block_until_ready, pack_params(params, H))

    y = gru_model_forward(x, packed)
    y = jax.block_until_ready(y)

    y_ref = reference_forward(x, params, H)
    assert y.shape == (B,), y.shape
    # bf16 MXU operands (f32 accumulation) -> looser tolerance vs f32 reference.
    assert jnp.allclose(y, y_ref, atol=3e-2, rtol=3e-2), (y, y_ref)

    print("KERNEL_OK")
</pallas_src>

<mosaic_0001>
module attributes {stable_mosaic.version = 11 : i64} {
  func.func @gru_kernel(%arg0: i32, %arg1: memref<8x8x6xf32, #tpu.memory_space<vmem>>, %arg2: memref<6x384xbf16, #tpu.memory_space<vmem>>, %arg3: memref<128x384xbf16, #tpu.memory_space<vmem>>, %arg4: memref<128x384xbf16, #tpu.memory_space<vmem>>, %arg5: memref<128x384xbf16, #tpu.memory_space<vmem>>, %arg6: memref<1x384xf32, #tpu.memory_space<vmem>>, %arg7: memref<1x128xf32, #tpu.memory_space<vmem>>, %arg8: memref<1x384xf32, #tpu.memory_space<vmem>>, %arg9: memref<1x128xf32, #tpu.memory_space<vmem>>, %arg10: memref<1x128xf32, #tpu.memory_space<vmem>>, %arg11: memref<1x1xf32, #tpu.memory_space<vmem>>, %arg12: memref<8x1xf32, #tpu.memory_space<vmem>>, %arg13: memref<8x8x384xf32, #tpu.memory_space<vmem>>, %arg14: memref<2x8x128xf32, #tpu.memory_space<vmem>>) attributes {dimension_semantics = [#tpu.dimension_semantics<arbitrary>], iteration_bounds = array<i64: 1>, scalar_prefetch = 0 : i64, scratch_operands = 2 : i64, tpu.core_type = #tpu.core_type<tc>, window_params = [{transform_indices = @transform_0, window_bounds = array<i64: 8, 8, 6>}, {pipeline_mode = #tpu.pipeline_mode<synchronous>, transform_indices = @transform_1, window_bounds = array<i64: 6, 384>}, {pipeline_mode = #tpu.pipeline_mode<synchronous>, transform_indices = @transform_2, window_bounds = array<i64: 128, 384>}, {pipeline_mode = #tpu.pipeline_mode<synchronous>, transform_indices = @transform_3, window_bounds = array<i64: 128, 384>}, {pipeline_mode = #tpu.pipeline_mode<synchronous>, transform_indices = @transform_4, window_bounds = array<i64: 128, 384>}, {pipeline_mode = #tpu.pipeline_mode<synchronous>, transform_indices = @transform_5, window_bounds = array<i64: 1, 384>}, {pipeline_mode = #tpu.pipeline_mode<synchronous>, transform_indices = @transform_6, window_bounds = array<i64: 1, 128>}, {pipeline_mode = #tpu.pipeline_mode<synchronous>, transform_indices = @transform_7, window_bounds = array<i64: 1, 384>}, {pipeline_mode = #tpu.pipeline_mode<synchronous>, transform_indices = @transform_8, window_bounds = array<i64: 1, 128>}, {pipeline_mode = #tpu.pipeline_mode<synchronous>, transform_indices = @transform_9, window_bounds = array<i64: 1, 128>}, {pipeline_mode = #tpu.pipeline_mode<synchronous>, transform_indices = @transform_10, window_bounds = array<i64: 1, 1>}, {pipeline_mode = #tpu.pipeline_mode<synchronous>, transform_indices = @transform_11, window_bounds = array<i64: 8, 1>}]} {
    %c0_i32 = arith.constant 0 : i32
    %0 = arith.cmpi eq, %arg0, %c0_i32 : i32
    %1 = arith.extui %0 : i1 to i32
    %c0_i32_0 = arith.constant 0 : i32
    %2 = arith.cmpi ne, %1, %c0_i32_0 : i32
    scf.if %2 {
      %cst_208 = arith.constant 0.000000e+00 : f32
      %610 = vector.broadcast %cst_208 : f32 to vector<2x8x128xf32>
      %c0_209 = arith.constant 0 : index
      %c0_210 = arith.constant 0 : index
      %c0_211 = arith.constant 0 : index
      %611 = vector.load %arg14[%c0_209, %c0_210, %c0_211] : memref<2x8x128xf32, #tpu.memory_space<vmem>>, vector<2x8x128xf32>
      tpu.vector_store %arg14[%c0_209, %c0_210, %c0_211], %610 {strides = array<i32>} : memref<2x8x128xf32, #tpu.memory_space<vmem>>, vector<2x8x128xf32>,
    } else {
    }
    %c0 = arith.constant 0 : index
    %c0_1 = arith.constant 0 : index
    %c0_2 = arith.constant 0 : index
    %3 = vector.load %arg1[%c0, %c0_1, %c0_2] : memref<8x8x6xf32, #tpu.memory_space<vmem>>, vector<8x8x6xf32>
    %4 = vector.shape_cast %3 : vector<8x8x6xf32> to vector<64x6xf32>
    %5 = arith.truncf %4 : vector<64x6xf32> to vector<64x6xbf16>
    %c0_3 = arith.constant 0 : index
    %c0_4 = arith.constant 0 : index
    %6 = vector.load %arg2[%c0_3, %c0_4] : memref<6x384xbf16, #tpu.memory_space<vmem>>, vector<6x384xbf16>
    %cst = arith.constant dense<0.000000e+00> : vector<64x384xf32>
    %7 = tpu.matmul %5, %6, %cst {dimension_numbers = #tpu.dot_dimension_numbers<[1], [0], [0], [1], [0, 0, 1, 1], [], []>} : vector<64x6xbf16>, vector<6x384xbf16>, vector<64x384xf32> -> vector<64x384xf32>
    %c0_5 = arith.constant 0 : index
    %c0_6 = arith.constant 0 : index
    %8 = vector.load %arg6[%c0_5, %c0_6] : memref<1x384xf32, #tpu.memory_space<vmem>>, vector<1x384xf32>
    %9 = vector.broadcast %8 : vector<1x384xf32> to vector<64x384xf32>
    %10 = arith.addf %7, %9 : vector<64x384xf32>
    %11 = vector.shape_cast %10 : vector<64x384xf32> to vector<8x8x384xf32>
    %c0_7 = arith.constant 0 : index
    %c0_8 = arith.constant 0 : index
    %c0_9 = arith.constant 0 : index
    %12 = vector.load %arg13[%c0_7, %c0_8, %c0_9] : memref<8x8x384xf32, #tpu.memory_space<vmem>>, vector<8x8x384xf32>
    tpu.vector_store %arg13[%c0_7, %c0_8, %c0_9], %11 {strides = array<i32>} : memref<8x8x384xf32, #tpu.memory_space<vmem>>, vector<8x8x384xf32>,
    %c0_10 = arith.constant 0 : index
    %c0_11 = arith.constant 0 : index
    %c0_12 = arith.constant 0 : index
    %13 = vector.load %arg14[%c0_10, %c0_11, %c0_12] : memref<2x8x128xf32, #tpu.memory_space<vmem>>, vector<1x8x128xf32>
    %14 = vector.shape_cast %13 : vector<1x8x128xf32> to vector<8x128xf32>
    %c1 = arith.constant 1 : index
    %c0_13 = arith.constant 0 : index
    %c0_14 = arith.constant 0 : index
    %15 = vector.load %arg14[%c1, %c0_13, %c0_14] : memref<2x8x128xf32, #tpu.memory_space<vmem>>, vector<1x8x128xf32>
    %16 = vector.shape_cast %15 : vector<1x8x128xf32> to vector<8x128xf32>
    %c0_i32_15 = arith.constant 0 : i32
    %17 = arith.index_cast %c0_i32_15 : i32 to index
    %c0_16 = arith.constant 0 : index
    %c0_17 = arith.constant 0 : index
    %18 = vector.load %arg13[%17, %c0_16, %c0_17] : memref<8x8x384xf32, #tpu.memory_space<vmem>>, vector<1x8x384xf32>
    %19 = vector.shape_cast %18 : vector<1x8x384xf32> to vector<8x384xf32>
    %20 = arith.truncf %14 : vector<8x128xf32> to vector<8x128xbf16>
    %c0_18 = arith.constant 0 : index
    %c0_19 = arith.constant 0 : index
    %21 = vector.load %arg3[%c0_18, %c0_19] : memref<128x384xbf16, #tpu.memory_space<vmem>>, vector<128x384xbf16>
    %cst_20 = arith.constant dense<0.000000e+00> : vector<8x384xf32>
    %22 = tpu.matmul %20, %21, %cst_20 {dimension_numbers = #tpu.dot_dimension_numbers<[1], [0], [0], [1], [0, 0, 1, 1], [], []>} : vector<8x128xbf16>, vector<128x384xbf16>, vector<8x384xf32> -> vector<8x384xf32>
    %23 = vector.extract_strided_slice %19 {offsets = [0, 0], sizes = [8, 128], strides = [1, 1]} : vector<8x384xf32> to vector<8x128xf32>
    %24 = vector.extract_strided_slice %22 {offsets = [0, 0], sizes = [8, 128], strides = [1, 1]} : vector<8x384xf32> to vector<8x128xf32>
    %25 = arith.addf %23, %24 : vector<8x128xf32>
    %26 = arith.negf %25 : vector<8x128xf32>
    %27 = math.exp %26 : vector<8x128xf32>
    %cst_21 = arith.constant 1.000000e+00 : f32
    %28 = vector.broadcast %cst_21 : f32 to vector<8x128xf32>
    %29 = arith.addf %28, %27 : vector<8x128xf32>
    %30 = arith.divf %28, %29 : vector<8x128xf32>
    %31 = vector.extract_strided_slice %19 {offsets = [0, 128], sizes = [8, 128], strides = [1, 1]} : vector<8x384xf32> to vector<8x128xf32>
    %32 = vector.extract_strided_slice %22 {offsets = [0, 128], sizes = [8, 128], strides = [1, 1]} : vector<8x384xf32> to vector<8x128xf32>
    %33 = arith.addf %31, %32 : vector<8x128xf32>
    %34 = arith.negf %33 : vector<8x128xf32>
    %35 = math.exp %34 : vector<8x128xf32>
    %cst_22 = arith.constant 1.000000e+00 : f32
    %36 = vector.broadcast %cst_22 : f32 to vector<8x128xf32>
    %37 = arith.addf %36, %35 : vector<8x128xf32>
    %38 = arith.divf %36, %37 : vector<8x128xf32>
    %39 = vector.extract_strided_slice %19 {offsets = [0, 256], sizes = [8, 128], strides = [1, 1]} : vector<8x384xf32> to vector<8x128xf32>
    %40 = vector.extract_strided_slice %22 {offsets = [0, 256], sizes = [8, 128], strides = [1, 1]} : vector<8x384xf32> to vector<8x128xf32>
    %c0_23 = arith.constant 0 : index
    %c0_24 = arith.constant 0 : index
    %41 = vector.load %arg7[%c0_23, %c0_24] : memref<1x128xf32, #tpu.memory_space<vmem>>, vector<1x128xf32>
    %42 = vector.broadcast %41 : vector<1x128xf32> to vector<8x128xf32>
    %43 = arith.addf %40, %42 : vector<8x128xf32>
    %44 = arith.mulf %30, %43 : vector<8x128xf32>
    %45 = arith.addf %39, %44 : vector<8x128xf32>
    %46 = math.tanh %45 : vector<8x128xf32>
    %cst_25 = arith.constant 1.000000e+00 : f32
    %47 = vector.broadcast %cst_25 : f32 to vector<8x128xf32>
    %48 = arith.subf %47, %38 : vector<8x128xf32>
    %49 = arith.mulf %48, %46 : vector<8x128xf32>
    %50 = arith.mulf %38, %14 : vector<8x128xf32>
    %51 = arith.addf %49, %50 : vector<8x128xf32>
    %52 = arith.truncf %51 : vector<8x128xf32> to vector<8x128xbf16>
    %c0_26 = arith.constant 0 : index
    %c0_27 = arith.constant 0 : index
    %53 = vector.load %arg4[%c0_26, %c0_27] : memref<128x384xbf16, #tpu.memory_space<vmem>>, vector<128x384xbf16>
    %cst_28 = arith.constant dense<0.000000e+00> : vector<8x384xf32>
    %54 = tpu.matmul %52, %53, %cst_28 {dimension_numbers = #tpu.dot_dimension_numbers<[1], [0], [0], [1], [0, 0, 1, 1], [], []>} : vector<8x128xbf16>, vector<128x384xbf16>, vector<8x384xf32> -> vector<8x384xf32>
    %c0_29 = arith.constant 0 : index
    %c0_30 = arith.constant 0 : index
    %55 = vector.load %arg8[%c0_29, %c0_30] : memref<1x384xf32, #tpu.memory_space<vmem>>, vector<1x384xf32>
    %56 = vector.broadcast %55 : vector<1x384xf32> to vector<8x384xf32>
    %57 = arith.addf %54, %56 : vector<8x384xf32>
    %58 = arith.truncf %16 : vector<8x128xf32> to vector<8x128xbf16>
    %c0_31 = arith.constant 0 : index
    %c0_32 = arith.constant 0 : index
    %59 = vector.load %arg5[%c0_31, %c0_32] : memref<128x384xbf16, #tpu.memory_space<vmem>>, vector<128x384xbf16>
    %cst_33 = arith.constant dense<0.000000e+00> : vector<8x384xf32>
    %60 = tpu.matmul %58, %59, %cst_33 {dimension_numbers = #tpu.dot_dimension_numbers<[1], [0], [0], [1], [0, 0, 1, 1], [], []>} : vector<8x128xbf16>, vector<128x384xbf16>, vector<8x384xf32> -> vector<8x384xf32>
    %61 = vector.extract_strided_slice %57 {offsets = [0, 0], sizes = [8, 128], strides = [1, 1]} : vector<8x384xf32> to vector<8x128xf32>
    %62 = vector.extract_strided_slice %60 {offsets = [0, 0], sizes = [8, 128], strides = [1, 1]} : vector<8x384xf32> to vector<8x128xf32>
    %63 = arith.addf %61, %62 : vector<8x128xf32>
    %64 = arith.negf %63 : vector<8x128xf32>
    %65 = math.exp %64 : vector<8x128xf32>
    %cst_34 = arith.constant 1.000000e+00 : f32
    %66 = vector.broadcast %cst_34 : f32 to vector<8x128xf32>
    %67 = arith.addf %66, %65 : vector<8x128xf32>
    %68 = arith.divf %66, %67 : vector<8x128xf32>
    %69 = vector.extract_strided_slice %57 {offsets = [0, 128], sizes = [8, 128], strides = [1, 1]} : vector<8x384xf32> to vector<8x128xf32>
    %70 = vector.extract_strided_slice %60 {offsets = [0, 128], sizes = [8, 128], strides = [1, 1]} : vector<8x384xf32> to vector<8x128xf32>
    %71 = arith.addf %69, %70 : vector<8x128xf32>
    %72 = arith.negf %71 : vector<8x128xf32>
    %73 = math.exp %72 : vector<8x128xf32>
    %cst_35 = arith.constant 1.000000e+00 : f32
    %74 = vector.broadcast %cst_35 : f32 to vector<8x128xf32>
    %75 = arith.addf %74, %73 : vector<8x128xf32>
    %76 = arith.divf %74, %75 : vector<8x128xf32>
    %77 = vector.extract_strided_slice %57 {offsets = [0, 256], sizes = [8, 128], strides = [1, 1]} : vector<8x384xf32> to vector<8x128xf32>
    %78 = vector.extract_strided_slice %60 {offsets = [0, 256], sizes = [8, 128], strides = [1, 1]} : vector<8x384xf32> to vector<8x128xf32>
    %c0_36 = arith.constant 0 : index
    %c0_37 = arith.constant 0 : index
    %79 = vector.load %arg9[%c0_36, %c0_37] : memref<1x128xf32, #tpu.memory_space<vmem>>, vector<1x128xf32>
    %80 = vector.broadcast %79 : vector<1x128xf32> to vector<8x128xf32>
    %81 = arith.addf %78, %80 : vector<8x128xf32>
    %82 = arith.mulf %68, %81 : vector<8x128xf32>
    %83 = arith.addf %77, %82 : vector<8x128xf32>
    %84 = math.tanh %83 : vector<8x128xf32>
    %cst_38 = arith.constant 1.000000e+00 : f32
    %85 = vector.broadcast %cst_38 : f32 to vector<8x128xf32>
    %86 = arith.subf %85, %76 : vector<8x128xf32>
    %87 = arith.mulf %86, %84 : vector<8x128xf32>
    %88 = arith.mulf %76, %16 : vector<8x128xf32>
    %89 = arith.addf %87, %88 : vector<8x128xf32>
    %c1_i32 = arith.constant 1 : i32
    %90 = arith.index_cast %c1_i32 : i32 to index
    %c0_39 = arith.constant 0 : index
    %c0_40 = arith.constant 0 : index
    %91 = vector.load %arg13[%90, %c0_39, %c0_40] : memref<8x8x384xf32, #tpu.memory_space<vmem>>, vector<1x8x384xf32>
    %92 = vector.shape_cast %91 : vector<1x8x384xf32> to vector<8x384xf32>
    %93 = arith.truncf %51 : vector<8x128xf32> to vector<8x128xbf16>
    %c0_41 = arith.constant 0 : index
    %c0_42 = arith.constant 0 : index
    %94 = vector.load %arg3[%c0_41, %c0_42] : memref<128x384xbf16, #tpu.memory_space<vmem>>, vector<128x384xbf16>
    %cst_43 = arith.constant dense<0.000000e+00> : vector<8x384xf32>
    %95 = tpu.matmul %93, %94, %cst_43 {dimension_numbers = #tpu.dot_dimension_numbers<[1], [0], [0], [1], [0, 0, 1, 1], [], []>} : vector<8x128xbf16>, vector<128x384xbf16>, vector<8x384xf32> -> vector<8x384xf32>
    %96 = vector.extract_strided_slice %92 {offsets = [0, 0], sizes = [8, 128], strides = [1, 1]} : vector<8x384xf32> to vector<8x128xf32>
    %97 = vector.extract_strided_slice %95 {offsets = [0, 0], sizes = [8, 128], strides = [1, 1]} : vector<8x384xf32> to vector<8x128xf32>
    %98 = arith.addf %96, %97 : vector<8x128xf32>
    %99 = arith.negf %98 : vector<8x128xf32>
    %100 = math.exp %99 : vector<8x128xf32>
    %cst_44 = arith.constant 1.000000e+00 : f32
    %101 = vector.broadcast %cst_44 : f32 to vector<8x128xf32>
    %102 = arith.addf %101, %100 : vector<8x128xf32>
    %103 = arith.divf %101, %102 : vector<8x128xf32>
    %104 = vector.extract_strided_slice %92 {offsets = [0, 128], sizes = [8, 128], strides = [1, 1]} : vector<8x384xf32> to vector<8x128xf32>
    %105 = vector.extract_strided_slice %95 {offsets = [0, 128], sizes = [8, 128], strides = [1, 1]} : vector<8x384xf32> to vector<8x128xf32>
    %106 = arith.addf %104, %105 : vector<8x128xf32>
    %107 = arith.negf %106 : vector<8x128xf32>
    %108 = math.exp %107 : vector<8x128xf32>
    %cst_45 = arith.constant 1.000000e+00 : f32
    %109 = vector.broadcast %cst_45 : f32 to vector<8x128xf32>
    %110 = arith.addf %109, %108 : vector<8x128xf32>
    %111 = arith.divf %109, %110 : vector<8x128xf32>
    %112 = vector.extract_strided_slice %92 {offsets = [0, 256], sizes = [8, 128], strides = [1, 1]} : vector<8x384xf32> to vector<8x128xf32>
    %113 = vector.extract_strided_slice %95 {offsets = [0, 256], sizes = [8, 128], strides = [1, 1]} : vector<8x384xf32> to vector<8x128xf32>
    %c0_46 = arith.constant 0 : index
    %c0_47 = arith.constant 0 : index
    %114 = vector.load %arg7[%c0_46, %c0_47] : memref<1x128xf32, #tpu.memory_space<vmem>>, vector<1x128xf32>
    %115 = vector.broadcast %114 : vector<1x128xf32> to vector<8x128xf32>
    %116 = arith.addf %113, %115 : vector<8x128xf32>
    %117 = arith.mulf %103, %116 : vector<8x128xf32>
    %118 = arith.addf %112, %117 : vector<8x128xf32>
    %119 = math.tanh %118 : vector<8x128xf32>
    %cst_48 = arith.constant 1.000000e+00 : f32
    %120 = vector.broadcast %cst_48 : f32 to vector<8x128xf32>
    %121 = arith.subf %120, %111 : vector<8x128xf32>
    %122 = arith.mulf %121, %119 : vector<8x128xf32>
    %123 = arith.mulf %111, %51 : vector<8x128xf32>
    %124 = arith.addf %122, %123 : vector<8x128xf32>
    %125 = arith.truncf %124 : vector<8x128xf32> to vector<8x128xbf16>
    %c0_49 = arith.constant 0 : index
    %c0_50 = arith.constant 0 : index
    %126 = vector.load %arg4[%c0_49, %c0_50] : memref<128x384xbf16, #tpu.memory_space<vmem>>, vector<128x384xbf16>
    %cst_51 = arith.constant dense<0.000000e+00> : vector<8x384xf32>
    %127 = tpu.matmul %125, %126, %cst_51 {dimension_numbers = #tpu.dot_dimension_numbers<[1], [0], [0], [1], [0, 0, 1, 1], [], []>} : vector<8x128xbf16>, vector<128x384xbf16>, vector<8x384xf32> -> vector<8x384xf32>
    %c0_52 = arith.constant 0 : index
    %c0_53 = arith.constant 0 : index
    %128 = vector.load %arg8[%c0_52, %c0_53] : memref<1x384xf32, #tpu.memory_space<vmem>>, vector<1x384xf32>
    %129 = vector.broadcast %128 : vector<1x384xf32> to vector<8x384xf32>
    %130 = arith.addf %127, %129 : vector<8x384xf32>
    %131 = arith.truncf %89 : vector<8x128xf32> to vector<8x128xbf16>
    %c0_54 = arith.constant 0 : index
    %c0_55 = arith.constant 0 : index
    %132 = vector.load %arg5[%c0_54, %c0_55] : memref<128x384xbf16, #tpu.memory_space<vmem>>, vector<128x384xbf16>
    %cst_56 = arith.constant dense<0.000000e+00> : vector<8x384xf32>
    %133 = tpu.matmul %131, %132, %cst_56 {dimension_numbers = #tpu.dot_dimension_numbers<[1], [0], [0], [1], [0, 0, 1, 1], [], []>} : vector<8x128xbf16>, vector<128x384xbf16>, vector<8x384xf32> -> vector<8x384xf32>
    %134 = vector.extract_strided_slice %130 {offsets = [0, 0], sizes = [8, 128], strides = [1, 1]} : vector<8x384xf32> to vector<8x128xf32>
    %135 = vector.extract_strided_slice %133 {offsets = [0, 0], sizes = [8, 128], strides = [1, 1]} : vector<8x384xf32> to vector<8x128xf32>
    %136 = arith.addf %134, %135 : vector<8x128xf32>
    %137 = arith.negf %136 : vector<8x128xf32>
    %138 = math.exp %137 : vector<8x128xf32>
    %cst_57 = arith.constant 1.000000e+00 : f32
    %139 = vector.broadcast %cst_57 : f32 to vector<8x128xf32>
    %140 = arith.addf %139, %138 : vector<8x128xf32>
    %141 = arith.divf %139, %140 : vector<8x128xf32>
    %142 = vector.extract_strided_slice %130 {offsets = [0, 128], sizes = [8, 128], strides = [1, 1]} : vector<8x384xf32> to vector<8x128xf32>
    %143 = vector.extract_strided_slice %133 {offsets = [0, 128], sizes = [8, 128], strides = [1, 1]} : vector<8x384xf32> to vector<8x128xf32>
    %144 = arith.addf %142, %143 : vector<8x128xf32>
    %145 = arith.negf %144 : vector<8x128xf32>
    %146 = math.exp %145 : vector<8x128xf32>
    %cst_58 = arith.constant 1.000000e+00 : f32
    %147 = vector.broadcast %cst_58 : f32 to vector<8x128xf32>
    %148 = arith.addf %147, %146 : vector<8x128xf32>
    %149 = arith.divf %147, %148 : vector<8x128xf32>
    %150 = vector.extract_strided_slice %130 {offsets = [0, 256], sizes = [8, 128], strides = [1, 1]} : vector<8x384xf32> to vector<8x128xf32>
    %151 = vector.extract_strided_slice %133 {offsets = [0, 256], sizes = [8, 128], strides = [1, 1]} : vector<8x384xf32> to vector<8x128xf32>
    %c0_59 = arith.constant 0 : index
    %c0_60 = arith.constant 0 : index
    %152 = vector.load %arg9[%c0_59, %c0_60] : memref<1x128xf32, #tpu.memory_space<vmem>>, vector<1x128xf32>
    %153 = vector.broadcast %152 : vector<1x128xf32> to vector<8x128xf32>
    %154 = arith.addf %151, %153 : vector<8x128xf32>
    %155 = arith.mulf %141, %154 : vector<8x128xf32>
    %156 = arith.addf %150, %155 : vector<8x128xf32>
    %157 = math.tanh %156 : vector<8x128xf32>
    %cst_61 = arith.constant 1.000000e+00 : f32
    %158 = vector.broadcast %cst_61 : f32 to vector<8x128xf32>
    %159 = arith.subf %158, %149 : vector<8x128xf32>
    %160 = arith.mulf %159, %157 : vector<8x128xf32>
    %161 = arith.mulf %149, %89 : vector<8x128xf32>
    %162 = arith.addf %160, %161 : vector<8x128xf32>
    %c2_i32 = arith.constant 2 : i32
    %163 = arith.index_cast %c2_i32 : i32 to index
    %c0_62 = arith.constant 0 : index
    %c0_63 = arith.constant 0 : index
    %164 = vector.load %arg13[%163, %c0_62, %c0_63] : memref<8x8x384xf32, #tpu.memory_space<vmem>>, vector<1x8x384xf32>
    %165 = vector.shape_cast %164 : vector<1x8x384xf32> to vector<8x384xf32>
    %166 = arith.truncf %124 : vector<8x128xf32> to vector<8x128xbf16>
    %c0_64 = arith.constant 0 : index
    %c0_65 = arith.constant 0 : index
    %167 = vector.load %arg3[%c0_64, %c0_65] : memref<128x384xbf16, #tpu.memory_space<vmem>>, vector<128x384xbf16>
    %cst_66 = arith.constant dense<0.000000e+00> : vector<8x384xf32>
    %168 = tpu.matmul %166, %167, %cst_66 {dimension_numbers = #tpu.dot_dimension_numbers<[1], [0], [0], [1], [0, 0, 1, 1], [], []>} : vector<8x128xbf16>, vector<128x384xbf16>, vector<8x384xf32> -> vector<8x384xf32>
    %169 = vector.extract_strided_slice %165 {offsets = [0, 0], sizes = [8, 128], strides = [1, 1]} : vector<8x384xf32> to vector<8x128xf32>
    %170 = vector.extract_strided_slice %168 {offsets = [0, 0], sizes = [8, 128], strides = [1, 1]} : vector<8x384xf32> to vector<8x128xf32>
    %171 = arith.addf %169, %170 : vector<8x128xf32>
    %172 = arith.negf %171 : vector<8x128xf32>
    %173 = math.exp %172 : vector<8x128xf32>
    %cst_67 = arith.constant 1.000000e+00 : f32
    %174 = vector.broadcast %cst_67 : f32 to vector<8x128xf32>
    %175 = arith.addf %174, %173 : vector<8x128xf32>
    %176 = arith.divf %174, %175 : vector<8x128xf32>
    %177 = vector.extract_strided_slice %165 {offsets = [0, 128], sizes = [8, 128], strides = [1, 1]} : vector<8x384xf32> to vector<8x128xf32>
    %178 = vector.extract_strided_slice %168 {offsets = [0, 128], sizes = [8, 128], strides = [1, 1]} : vector<8x384xf32> to vector<8x128xf32>
    %179 = arith.addf %177, %178 : vector<8x128xf32>
    %180 = arith.negf %179 : vector<8x128xf32>
    %181 = math.exp %180 : vector<8x128xf32>
    %cst_68 = arith.constant 1.000000e+00 : f32
    %182 = vector.broadcast %cst_68 : f32 to vector<8x128xf32>
    %183 = arith.addf %182, %181 : vector<8x128xf32>
    %184 = arith.divf %182, %183 : vector<8x128xf32>
    %185 = vector.extract_strided_slice %165 {offsets = [0, 256], sizes = [8, 128], strides = [1, 1]} : vector<8x384xf32> to vector<8x128xf32>
    %186 = vector.extract_strided_slice %168 {offsets = [0, 256], sizes = [8, 128], strides = [1, 1]} : vector<8x384xf32> to vector<8x128xf32>
    %c0_69 = arith.constant 0 : index
    %c0_70 = arith.constant 0 : index
    %187 = vector.load %arg7[%c0_69, %c0_70] : memref<1x128xf32, #tpu.memory_space<vmem>>, vector<1x128xf32>
    %188 = vector.broadcast %187 : vector<1x128xf32> to vector<8x128xf32>
    %189 = arith.addf %186, %188 : vector<8x128xf32>
    %190 = arith.mulf %176, %189 : vector<8x128xf32>
    %191 = arith.addf %185, %190 : vector<8x128xf32>
    %192 = math.tanh %191 : vector<8x128xf32>
    %cst_71 = arith.constant 1.000000e+00 : f32
    %193 = vector.broadcast %cst_71 : f32 to vector<8x128xf32>
    %194 = arith.subf %193, %184 : vector<8x128xf32>
    %195 = arith.mulf %194, %192 : vector<8x128xf32>
    %196 = arith.mulf %184, %124 : vector<8x128xf32>
    %197 = arith.addf %195, %196 : vector<8x128xf32>
    %198 = arith.truncf %197 : vector<8x128xf32> to vector<8x128xbf16>
    %c0_72 = arith.constant 0 : index
    %c0_73 = arith.constant 0 : index
    %199 = vector.load %arg4[%c0_72, %c0_73] : memref<128x384xbf16, #tpu.memory_space<vmem>>, vector<128x384xbf16>
    %cst_74 = arith.constant dense<0.000000e+00> : vector<8x384xf32>
    %200 = tpu.matmul %198, %199, %cst_74 {dimension_numbers = #tpu.dot_dimension_numbers<[1], [0], [0], [1], [0, 0, 1, 1], [], []>} : vector<8x128xbf16>, vector<128x384xbf16>, vector<8x384xf32> -> vector<8x384xf32>
    %c0_75 = arith.constant 0 : index
    %c0_76 = arith.constant 0 : index
    %201 = vector.load %arg8[%c0_75, %c0_76] : memref<1x384xf32, #tpu.memory_space<vmem>>, vector<1x384xf32>
    %202 = vector.broadcast %201 : vector<1x384xf32> to vector<8x384xf32>
    %203 = arith.addf %200, %202 : vector<8x384xf32>
    %204 = arith.truncf %162 : vector<8x128xf32> to vector<8x128xbf16>
    %c0_77 = arith.constant 0 : index
    %c0_78 = arith.constant 0 : index
    %205 = vector.load %arg5[%c0_77, %c0_78] : memref<128x384xbf16, #tpu.memory_space<vmem>>, vector<128x384xbf16>
    %cst_79 = arith.constant dense<0.000000e+00> : vector<8x384xf32>
    %206 = tpu.matmul %204, %205, %cst_79 {dimension_numbers = #tpu.dot_dimension_numbers<[1], [0], [0], [1], [0, 0, 1, 1], [], []>} : vector<8x128xbf16>, vector<128x384xbf16>, vector<8x384xf32> -> vector<8x384xf32>
    %207 = vector.extract_strided_slice %203 {offsets = [0, 0], sizes = [8, 128], strides = [1, 1]} : vector<8x384xf32> to vector<8x128xf32>
    %208 = vector.extract_strided_slice %206 {offsets = [0, 0], sizes = [8, 128], strides = [1, 1]} : vector<8x384xf32> to vector<8x128xf32>
    %209 = arith.addf %207, %208 : vector<8x128xf32>
    %210 = arith.negf %209 : vector<8x128xf32>
    %211 = math.exp %210 : vector<8x128xf32>
    %cst_80 = arith.constant 1.000000e+00 : f32
    %212 = vector.broadcast %cst_80 : f32 to vector<8x128xf32>
    %213 = arith.addf %212, %211 : vector<8x128xf32>
    %214 = arith.divf %212, %213 : vector<8x128xf32>
    %215 = vector.extract_strided_slice %203 {offsets = [0, 128], sizes = [8, 128], strides = [1, 1]} : vector<8x384xf32> to vector<8x128xf32>
    %216 = vector.extract_strided_slice %206 {offsets = [0, 128], sizes = [8, 128], strides = [1, 1]} : vector<8x384xf32> to vector<8x128xf32>
    %217 = arith.addf %215, %216 : vector<8x128xf32>
    %218 = arith.negf %217 : vector<8x128xf32>
    %219 = math.exp %218 : vector<8x128xf32>
    %cst_81 = arith.constant 1.000000e+00 : f32
    %220 = vector.broadcast %cst_81 : f32 to vector<8x128xf32>
    %221 = arith.addf %220, %219 : vector<8x128xf32>
    %222 = arith.divf %220, %221 : vector<8x128xf32>
    %223 = vector.extract_strided_slice %203 {offsets = [0, 256], sizes = [8, 128], strides = [1, 1]} : vector<8x384xf32> to vector<8x128xf32>
    %224 = vector.extract_strided_slice %206 {offsets = [0, 256], sizes = [8, 128], strides = [1, 1]} : vector<8x384xf32> to vector<8x128xf32>
    %c0_82 = arith.constant 0 : index
    %c0_83 = arith.constant 0 : index
    %225 = vector.load %arg9[%c0_82, %c0_83] : memref<1x128xf32, #tpu.memory_space<vmem>>, vector<1x128xf32>
    %226 = vector.broadcast %225 : vector<1x128xf32> to vector<8x128xf32>
    %227 = arith.addf %224, %226 : vector<8x128xf32>
    %228 = arith.mulf %214, %227 : vector<8x128xf32>
    %229 = arith.addf %223, %228 : vector<8x128xf32>
    %230 = math.tanh %229 : vector<8x128xf32>
    %cst_84 = arith.constant 1.000000e+00 : f32
    %231 = vector.broadcast %cst_84 : f32 to vector<8x128xf32>
    %232 = arith.subf %231, %222 : vector<8x128xf32>
    %233 = arith.mulf %232, %230 : vector<8x128xf32>
    %234 = arith.mulf %222, %162 : vector<8x128xf32>
    %235 = arith.addf %233, %234 : vector<8x128xf32>
    %c3_i32 = arith.constant 3 : i32
    %236 = arith.index_cast %c3_i32 : i32 to index
    %c0_85 = arith.constant 0 : index
    %c0_86 = arith.constant 0 : index
    %237 = vector.load %arg13[%236, %c0_85, %c0_86] : memref<8x8x384xf32, #tpu.memory_space<vmem>>, vector<1x8x384xf32>
    %238 = vector.shape_cast %237 : vector<1x8x384xf32> to vector<8x384xf32>
    %239 = arith.truncf %197 : vector<8x128xf32> to vector<8x128xbf16>
    %c0_87 = arith.constant 0 : index
    %c0_88 = arith.constant 0 : index
    %240 = vector.load %arg3[%c0_87, %c0_88] : memref<128x384xbf16, #tpu.memory_space<vmem>>, vector<128x384xbf16>
    %cst_89 = arith.constant dense<0.000000e+00> : vector<8x384xf32>
    %241 = tpu.matmul %239, %240, %cst_89 {dimension_numbers = #tpu.dot_dimension_numbers<[1], [0], [0], [1], [0, 0, 1, 1], [], []>} : vector<8x128xbf16>, vector<128x384xbf16>, vector<8x384xf32> -> vector<8x384xf32>
    %242 = vector.extract_strided_slice %238 {offsets = [0, 0], sizes = [8, 128], strides = [1, 1]} : vector<8x384xf32> to vector<8x128xf32>
    %243 = vector.extract_strided_slice %241 {offsets = [0, 0], sizes = [8, 128], strides = [1, 1]} : vector<8x384xf32> to vector<8x128xf32>
    %244 = arith.addf %242, %243 : vector<8x128xf32>
    %245 = arith.negf %244 : vector<8x128xf32>
    %246 = math.exp %245 : vector<8x128xf32>
    %cst_90 = arith.constant 1.000000e+00 : f32
    %247 = vector.broadcast %cst_90 : f32 to vector<8x128xf32>
    %248 = arith.addf %247, %246 : vector<8x128xf32>
    %249 = arith.divf %247, %248 : vector<8x128xf32>
    %250 = vector.extract_strided_slice %238 {offsets = [0, 128], sizes = [8, 128], strides = [1, 1]} : vector<8x384xf32> to vector<8x128xf32>
    %251 = vector.extract_strided_slice %241 {offsets = [0, 128], sizes = [8, 128], strides = [1, 1]} : vector<8x384xf32> to vector<8x128xf32>
    %252 = arith.addf %250, %251 : vector<8x128xf32>
    %253 = arith.negf %252 : vector<8x128xf32>
    %254 = math.exp %253 : vector<8x128xf32>
    %cst_91 = arith.constant 1.000000e+00 : f32
    %255 = vector.broadcast %cst_91 : f32 to vector<8x128xf32>
    %256 = arith.addf %255, %254 : vector<8x128xf32>
    %257 = arith.divf %255, %256 : vector<8x128xf32>
    %258 = vector.extract_strided_slice %238 {offsets = [0, 256], sizes = [8, 128], strides = [1, 1]} : vector<8x384xf32> to vector<8x128xf32>
    %259 = vector.extract_strided_slice %241 {offsets = [0, 256], sizes = [8, 128], strides = [1, 1]} : vector<8x384xf32> to vector<8x128xf32>
    %c0_92 = arith.constant 0 : index
    %c0_93 = arith.constant 0 : index
    %260 = vector.load %arg7[%c0_92, %c0_93] : memref<1x128xf32, #tpu.memory_space<vmem>>, vector<1x128xf32>
    %261 = vector.broadcast %260 : vector<1x128xf32> to vector<8x128xf32>
    %262 = arith.addf %259, %261 : vector<8x128xf32>
    %263 = arith.mulf %249, %262 : vector<8x128xf32>
    %264 = arith.addf %258, %263 : vector<8x128xf32>
    %265 = math.tanh %264 : vector<8x128xf32>
    %cst_94 = arith.constant 1.000000e+00 : f32
    %266 = vector.broadcast %cst_94 : f32 to vector<8x128xf32>
    %267 = arith.subf %266, %257 : vector<8x128xf32>
    %268 = arith.mulf %267, %265 : vector<8x128xf32>
    %269 = arith.mulf %257, %197 : vector<8x128xf32>
    %270 = arith.addf %268, %269 : vector<8x128xf32>
    %271 = arith.truncf %270 : vector<8x128xf32> to vector<8x128xbf16>
    %c0_95 = arith.constant 0 : index
    %c0_96 = arith.constant 0 : index
    %272 = vector.load %arg4[%c0_95, %c0_96] : memref<128x384xbf16, #tpu.memory_space<vmem>>, vector<128x384xbf16>
    %cst_97 = arith.constant dense<0.000000e+00> : vector<8x384xf32>
    %273 = tpu.matmul %271, %272, %cst_97 {dimension_numbers = #tpu.dot_dimension_numbers<[1], [0], [0], [1], [0, 0, 1, 1], [], []>} : vector<8x128xbf16>, vector<128x384xbf16>, vector<8x384xf32> -> vector<8x384xf32>
    %c0_98 = arith.constant 0 : index
    %c0_99 = arith.constant 0 : index
    %274 = vector.load %arg8[%c0_98, %c0_99] : memref<1x384xf32, #tpu.memory_space<vmem>>, vector<1x384xf32>
    %275 = vector.broadcast %274 : vector<1x384xf32> to vector<8x384xf32>
    %276 = arith.addf %273, %275 : vector<8x384xf32>
    %277 = arith.truncf %235 : vector<8x128xf32> to vector<8x128xbf16>
    %c0_100 = arith.constant 0 : index
    %c0_101 = arith.constant 0 : index
    %278 = vector.load %arg5[%c0_100, %c0_101] : memref<128x384xbf16, #tpu.memory_space<vmem>>, vector<128x384xbf16>
    %cst_102 = arith.constant dense<0.000000e+00> : vector<8x384xf32>
    %279 = tpu.matmul %277, %278, %cst_102 {dimension_numbers = #tpu.dot_dimension_numbers<[1], [0], [0], [1], [0, 0, 1, 1], [], []>} : vector<8x128xbf16>, vector<128x384xbf16>, vector<8x384xf32> -> vector<8x384xf32>
    %280 = vector.extract_strided_slice %276 {offsets = [0, 0], sizes = [8, 128], strides = [1, 1]} : vector<8x384xf32> to vector<8x128xf32>
    %281 = vector.extract_strided_slice %279 {offsets = [0, 0], sizes = [8, 128], strides = [1, 1]} : vector<8x384xf32> to vector<8x128xf32>
    %282 = arith.addf %280, %281 : vector<8x128xf32>
    %283 = arith.negf %282 : vector<8x128xf32>
    %284 = math.exp %283 : vector<8x128xf32>
    %cst_103 = arith.constant 1.000000e+00 : f32
    %285 = vector.broadcast %cst_103 : f32 to vector<8x128xf32>
    %286 = arith.addf %285, %284 : vector<8x128xf32>
    %287 = arith.divf %285, %286 : vector<8x128xf32>
    %288 = vector.extract_strided_slice %276 {offsets = [0, 128], sizes = [8, 128], strides = [1, 1]} : vector<8x384xf32> to vector<8x128xf32>
    %289 = vector.extract_strided_slice %279 {offsets = [0, 128], sizes = [8, 128], strides = [1, 1]} : vector<8x384xf32> to vector<8x128xf32>
    %290 = arith.addf %288, %289 : vector<8x128xf32>
    %291 = arith.negf %290 : vector<8x128xf32>
    %292 = math.exp %291 : vector<8x128xf32>
    %cst_104 = arith.constant 1.000000e+00 : f32
    %293 = vector.broadcast %cst_104 : f32 to vector<8x128xf32>
    %294 = arith.addf %293, %292 : vector<8x128xf32>
    %295 = arith.divf %293, %294 : vector<8x128xf32>
    %296 = vector.extract_strided_slice %276 {offsets = [0, 256], sizes = [8, 128], strides = [1, 1]} : vector<8x384xf32> to vector<8x128xf32>
    %297 = vector.extract_strided_slice %279 {offsets = [0, 256], sizes = [8, 128], strides = [1, 1]} : vector<8x384xf32> to vector<8x128xf32>
    %c0_105 = arith.constant 0 : index
    %c0_106 = arith.constant 0 : index
    %298 = vector.load %arg9[%c0_105, %c0_106] : memref<1x128xf32, #tpu.memory_space<vmem>>, vector<1x128xf32>
    %299 = vector.broadcast %298 : vector<1x128xf32> to vector<8x128xf32>
    %300 = arith.addf %297, %299 : vector<8x128xf32>
    %301 = arith.mulf %287, %300 : vector<8x128xf32>
    %302 = arith.addf %296, %301 : vector<8x128xf32>
    %303 = math.tanh %302 : vector<8x128xf32>
    %cst_107 = arith.constant 1.000000e+00 : f32
    %304 = vector.broadcast %cst_107 : f32 to vector<8x128xf32>
    %305 = arith.subf %304, %295 : vector<8x128xf32>
    %306 = arith.mulf %305, %303 : vector<8x128xf32>
    %307 = arith.mulf %295, %235 : vector<8x128xf32>
    %308 = arith.addf %306, %307 : vector<8x128xf32>
    %c4_i32 = arith.constant 4 : i32
    %309 = arith.index_cast %c4_i32 : i32 to index
    %c0_108 = arith.constant 0 : index
    %c0_109 = arith.constant 0 : index
    %310 = vector.load %arg13[%309, %c0_108, %c0_109] : memref<8x8x384xf32, #tpu.memory_space<vmem>>, vector<1x8x384xf32>
    %311 = vector.shape_cast %310 : vector<1x8x384xf32> to vector<8x384xf32>
    %312 = arith.truncf %270 : vector<8x128xf32> to vector<8x128xbf16>
    %c0_110 = arith.constant 0 : index
    %c0_111 = arith.constant 0 : index
    %313 = vector.load %arg3[%c0_110, %c0_111] : memref<128x384xbf16, #tpu.memory_space<vmem>>, vector<128x384xbf16>
    %cst_112 = arith.constant dense<0.000000e+00> : vector<8x384xf32>
    %314 = tpu.matmul %312, %313, %cst_112 {dimension_numbers = #tpu.dot_dimension_numbers<[1], [0], [0], [1], [0, 0, 1, 1], [], []>} : vector<8x128xbf16>, vector<128x384xbf16>, vector<8x384xf32> -> vector<8x384xf32>
    %315 = vector.extract_strided_slice %311 {offsets = [0, 0], sizes = [8, 128], strides = [1, 1]} : vector<8x384xf32> to vector<8x128xf32>
    %316 = vector.extract_strided_slice %314 {offsets = [0, 0], sizes = [8, 128], strides = [1, 1]} : vector<8x384xf32> to vector<8x128xf32>
    %317 = arith.addf %315, %316 : vector<8x128xf32>
    %318 = arith.negf %317 : vector<8x128xf32>
    %319 = math.exp %318 : vector<8x128xf32>
    %cst_113 = arith.constant 1.000000e+00 : f32
    %320 = vector.broadcast %cst_113 : f32 to vector<8x128xf32>
    %321 = arith.addf %320, %319 : vector<8x128xf32>
    %322 = arith.divf %320, %321 : vector<8x128xf32>
    %323 = vector.extract_strided_slice %311 {offsets = [0, 128], sizes = [8, 128], strides = [1, 1]} : vector<8x384xf32> to vector<8x128xf32>
    %324 = vector.extract_strided_slice %314 {offsets = [0, 128], sizes = [8, 128], strides = [1, 1]} : vector<8x384xf32> to vector<8x128xf32>
    %325 = arith.addf %323, %324 : vector<8x128xf32>
    %326 = arith.negf %325 : vector<8x128xf32>
    %327 = math.exp %326 : vector<8x128xf32>
    %cst_114 = arith.constant 1.000000e+00 : f32
    %328 = vector.broadcast %cst_114 : f32 to vector<8x128xf32>
    %329 = arith.addf %328, %327 : vector<8x128xf32>
    %330 = arith.divf %328, %329 : vector<8x128xf32>
    %331 = vector.extract_strided_slice %311 {offsets = [0, 256], sizes = [8, 128], strides = [1, 1]} : vector<8x384xf32> to vector<8x128xf32>
    %332 = vector.extract_strided_slice %314 {offsets = [0, 256], sizes = [8, 128], strides = [1, 1]} : vector<8x384xf32> to vector<8x128xf32>
    %c0_115 = arith.constant 0 : index
    %c0_116 = arith.constant 0 : index
    %333 = vector.load %arg7[%c0_115, %c0_116] : memref<1x128xf32, #tpu.memory_space<vmem>>, vector<1x128xf32>
    %334 = vector.broadcast %333 : vector<1x128xf32> to vector<8x128xf32>
    %335 = arith.addf %332, %334 : vector<8x128xf32>
    %336 = arith.mulf %322, %335 : vector<8x128xf32>
    %337 = arith.addf %331, %336 : vector<8x128xf32>
    %338 = math.tanh %337 : vector<8x128xf32>
    %cst_117 = arith.constant 1.000000e+00 : f32
    %339 = vector.broadcast %cst_117 : f32 to vector<8x128xf32>
    %340 = arith.subf %339, %330 : vector<8x128xf32>
    %341 = arith.mulf %340, %338 : vector<8x128xf32>
    %342 = arith.mulf %330, %270 : vector<8x128xf32>
    %343 = arith.addf %341, %342 : vector<8x128xf32>
    %344 = arith.truncf %343 : vector<8x128xf32> to vector<8x128xbf16>
    %c0_118 = arith.constant 0 : index
    %c0_119 = arith.constant 0 : index
    %345 = vector.load %arg4[%c0_118, %c0_119] : memref<128x384xbf16, #tpu.memory_space<vmem>>, vector<128x384xbf16>
    %cst_120 = arith.constant dense<0.000000e+00> : vector<8x384xf32>
    %346 = tpu.matmul %344, %345, %cst_120 {dimension_numbers = #tpu.dot_dimension_numbers<[1], [0], [0], [1], [0, 0, 1, 1], [], []>} : vector<8x128xbf16>, vector<128x384xbf16>, vector<8x384xf32> -> vector<8x384xf32>
    %c0_121 = arith.constant 0 : index
    %c0_122 = arith.constant 0 : index
    %347 = vector.load %arg8[%c0_121, %c0_122] : memref<1x384xf32, #tpu.memory_space<vmem>>, vector<1x384xf32>
    %348 = vector.broadcast %347 : vector<1x384xf32> to vector<8x384xf32>
    %349 = arith.addf %346, %348 : vector<8x384xf32>
    %350 = arith.truncf %308 : vector<8x128xf32> to vector<8x128xbf16>
    %c0_123 = arith.constant 0 : index
    %c0_124 = arith.constant 0 : index
    %351 = vector.load %arg5[%c0_123, %c0_124] : memref<128x384xbf16, #tpu.memory_space<vmem>>, vector<128x384xbf16>
    %cst_125 = arith.constant dense<0.000000e+00> : vector<8x384xf32>
    %352 = tpu.matmul %350, %351, %cst_125 {dimension_numbers = #tpu.dot_dimension_numbers<[1], [0], [0], [1], [0, 0, 1, 1], [], []>} : vector<8x128xbf16>, vector<128x384xbf16>, vector<8x384xf32> -> vector<8x384xf32>
    %353 = vector.extract_strided_slice %349 {offsets = [0, 0], sizes = [8, 128], strides = [1, 1]} : vector<8x384xf32> to vector<8x128xf32>
    %354 = vector.extract_strided_slice %352 {offsets = [0, 0], sizes = [8, 128], strides = [1, 1]} : vector<8x384xf32> to vector<8x128xf32>
    %355 = arith.addf %353, %354 : vector<8x128xf32>
    %356 = arith.negf %355 : vector<8x128xf32>
    %357 = math.exp %356 : vector<8x128xf32>
    %cst_126 = arith.constant 1.000000e+00 : f32
    %358 = vector.broadcast %cst_126 : f32 to vector<8x128xf32>
    %359 = arith.addf %358, %357 : vector<8x128xf32>
    %360 = arith.divf %358, %359 : vector<8x128xf32>
    %361 = vector.extract_strided_slice %349 {offsets = [0, 128], sizes = [8, 128], strides = [1, 1]} : vector<8x384xf32> to vector<8x128xf32>
    %362 = vector.extract_strided_slice %352 {offsets = [0, 128], sizes = [8, 128], strides = [1, 1]} : vector<8x384xf32> to vector<8x128xf32>
    %363 = arith.addf %361, %362 : vector<8x128xf32>
    %364 = arith.negf %363 : vector<8x128xf32>
    %365 = math.exp %364 : vector<8x128xf32>
    %cst_127 = arith.constant 1.000000e+00 : f32
    %366 = vector.broadcast %cst_127 : f32 to vector<8x128xf32>
    %367 = arith.addf %366, %365 : vector<8x128xf32>
    %368 = arith.divf %366, %367 : vector<8x128xf32>
    %369 = vector.extract_strided_slice %349 {offsets = [0, 256], sizes = [8, 128], strides = [1, 1]} : vector<8x384xf32> to vector<8x128xf32>
    %370 = vector.extract_strided_slice %352 {offsets = [0, 256], sizes = [8, 128], strides = [1, 1]} : vector<8x384xf32> to vector<8x128xf32>
    %c0_128 = arith.constant 0 : index
    %c0_129 = arith.constant 0 : index
    %371 = vector.load %arg9[%c0_128, %c0_129] : memref<1x128xf32, #tpu.memory_space<vmem>>, vector<1x128xf32>
    %372 = vector.broadcast %371 : vector<1x128xf32> to vector<8x128xf32>
    %373 = arith.addf %370, %372 : vector<8x128xf32>
    %374 = arith.mulf %360, %373 : vector<8x128xf32>
    %375 = arith.addf %369, %374 : vector<8x128xf32>
    %376 = math.tanh %375 : vector<8x128xf32>
    %cst_130 = arith.constant 1.000000e+00 : f32
    %377 = vector.broadcast %cst_130 : f32 to vector<8x128xf32>
    %378 = arith.subf %377, %368 : vector<8x128xf32>
    %379 = arith.mulf %378, %376 : vector<8x128xf32>
    %380 = arith.mulf %368, %308 : vector<8x128xf32>
    %381 = arith.addf %379, %380 : vector<8x128xf32>
    %c5_i32 = arith.constant 5 : i32
    %382 = arith.index_cast %c5_i32 : i32 to index
    %c0_131 = arith.constant 0 : index
    %c0_132 = arith.constant 0 : index
    %383 = vector.load %arg13[%382, %c0_131, %c0_132] : memref<8x8x384xf32, #tpu.memory_space<vmem>>, vector<1x8x384xf32>
    %384 = vector.shape_cast %383 : vector<1x8x384xf32> to vector<8x384xf32>
    %385 = arith.truncf %343 : vector<8x128xf32> to vector<8x128xbf16>
    %c0_133 = arith.constant 0 : index
    %c0_134 = arith.constant 0 : index
    %386 = vector.load %arg3[%c0_133, %c0_134] : memref<128x384xbf16, #tpu.memory_space<vmem>>, vector<128x384xbf16>
    %cst_135 = arith.constant dense<0.000000e+00> : vector<8x384xf32>
    %387 = tpu.matmul %385, %386, %cst_135 {dimension_numbers = #tpu.dot_dimension_numbers<[1], [0], [0], [1], [0, 0, 1, 1], [], []>} : vector<8x128xbf16>, vector<128x384xbf16>, vector<8x384xf32> -> vector<8x384xf32>
    %388 = vector.extract_strided_slice %384 {offsets = [0, 0], sizes = [8, 128], strides = [1, 1]} : vector<8x384xf32> to vector<8x128xf32>
    %389 = vector.extract_strided_slice %387 {offsets = [0, 0], sizes = [8, 128], strides = [1, 1]} : vector<8x384xf32> to vector<8x128xf32>
    %390 = arith.addf %388, %389 : vector<8x128xf32>
    %391 = arith.negf %390 : vector<8x128xf32>
    %392 = math.exp %391 : vector<8x128xf32>
    %cst_136 = arith.constant 1.000000e+00 : f32
    %393 = vector.broadcast %cst_136 : f32 to vector<8x128xf32>
    %394 = arith.addf %393, %392 : vector<8x128xf32>
    %395 = arith.divf %393, %394 : vector<8x128xf32>
    %396 = vector.extract_strided_slice %384 {offsets = [0, 128], sizes = [8, 128], strides = [1, 1]} : vector<8x384xf32> to vector<8x128xf32>
    %397 = vector.extract_strided_slice %387 {offsets = [0, 128], sizes = [8, 128], strides = [1, 1]} : vector<8x384xf32> to vector<8x128xf32>
    %398 = arith.addf %396, %397 : vector<8x128xf32>
    %399 = arith.negf %398 : vector<8x128xf32>
    %400 = math.exp %399 : vector<8x128xf32>
    %cst_137 = arith.constant 1.000000e+00 : f32
    %401 = vector.broadcast %cst_137 : f32 to vector<8x128xf32>
    %402 = arith.addf %401, %400 : vector<8x128xf32>
    %403 = arith.divf %401, %402 : vector<8x128xf32>
    %404 = vector.extract_strided_slice %384 {offsets = [0, 256], sizes = [8, 128], strides = [1, 1]} : vector<8x384xf32> to vector<8x128xf32>
    %405 = vector.extract_strided_slice %387 {offsets = [0, 256], sizes = [8, 128], strides = [1, 1]} : vector<8x384xf32> to vector<8x128xf32>
    %c0_138 = arith.constant 0 : index
    %c0_139 = arith.constant 0 : index
    %406 = vector.load %arg7[%c0_138, %c0_139] : memref<1x128xf32, #tpu.memory_space<vmem>>, vector<1x128xf32>
    %407 = vector.broadcast %406 : vector<1x128xf32> to vector<8x128xf32>
    %408 = arith.addf %405, %407 : vector<8x128xf32>
    %409 = arith.mulf %395, %408 : vector<8x128xf32>
    %410 = arith.addf %404, %409 : vector<8x128xf32>
    %411 = math.tanh %410 : vector<8x128xf32>
    %cst_140 = arith.constant 1.000000e+00 : f32
    %412 = vector.broadcast %cst_140 : f32 to vector<8x128xf32>
    %413 = arith.subf %412, %403 : vector<8x128xf32>
    %414 = arith.mulf %413, %411 : vector<8x128xf32>
    %415 = arith.mulf %403, %343 : vector<8x128xf32>
    %416 = arith.addf %414, %415 : vector<8x128xf32>
    %417 = arith.truncf %416 : vector<8x128xf32> to vector<8x128xbf16>
    %c0_141 = arith.constant 0 : index
    %c0_142 = arith.constant 0 : index
    %418 = vector.load %arg4[%c0_141, %c0_142] : memref<128x384xbf16, #tpu.memory_space<vmem>>, vector<128x384xbf16>
    %cst_143 = arith.constant dense<0.000000e+00> : vector<8x384xf32>
    %419 = tpu.matmul %417, %418, %cst_143 {dimension_numbers = #tpu.dot_dimension_numbers<[1], [0], [0], [1], [0, 0, 1, 1], [], []>} : vector<8x128xbf16>, vector<128x384xbf16>, vector<8x384xf32> -> vector<8x384xf32>
    %c0_144 = arith.constant 0 : index
    %c0_145 = arith.constant 0 : index
    %420 = vector.load %arg8[%c0_144, %c0_145] : memref<1x384xf32, #tpu.memory_space<vmem>>, vector<1x384xf32>
    %421 = vector.broadcast %420 : vector<1x384xf32> to vector<8x384xf32>
    %422 = arith.addf %419, %421 : vector<8x384xf32>
    %423 = arith.truncf %381 : vector<8x128xf32> to vector<8x128xbf16>
    %c0_146 = arith.constant 0 : index
    %c0_147 = arith.constant 0 : index
    %424 = vector.load %arg5[%c0_146, %c0_147] : memref<128x384xbf16, #tpu.memory_space<vmem>>, vector<128x384xbf16>
    %cst_148 = arith.constant dense<0.000000e+00> : vector<8x384xf32>
    %425 = tpu.matmul %423, %424, %cst_148 {dimension_numbers = #tpu.dot_dimension_numbers<[1], [0], [0], [1], [0, 0, 1, 1], [], []>} : vector<8x128xbf16>, vector<128x384xbf16>, vector<8x384xf32> -> vector<8x384xf32>
    %426 = vector.extract_strided_slice %422 {offsets = [0, 0], sizes = [8, 128], strides = [1, 1]} : vector<8x384xf32> to vector<8x128xf32>
    %427 = vector.extract_strided_slice %425 {offsets = [0, 0], sizes = [8, 128], strides = [1, 1]} : vector<8x384xf32> to vector<8x128xf32>
    %428 = arith.addf %426, %427 : vector<8x128xf32>
    %429 = arith.negf %428 : vector<8x128xf32>
    %430 = math.exp %429 : vector<8x128xf32>
    %cst_149 = arith.constant 1.000000e+00 : f32
    %431 = vector.broadcast %cst_149 : f32 to vector<8x128xf32>
    %432 = arith.addf %431, %430 : vector<8x128xf32>
    %433 = arith.divf %431, %432 : vector<8x128xf32>
    %434 = vector.extract_strided_slice %422 {offsets = [0, 128], sizes = [8, 128], strides = [1, 1]} : vector<8x384xf32> to vector<8x128xf32>
    %435 = vector.extract_strided_slice %425 {offsets = [0, 128], sizes = [8, 128], strides = [1, 1]} : vector<8x384xf32> to vector<8x128xf32>
    %436 = arith.addf %434, %435 : vector<8x128xf32>
    %437 = arith.negf %436 : vector<8x128xf32>
    %438 = math.exp %437 : vector<8x128xf32>
    %cst_150 = arith.constant 1.000000e+00 : f32
    %439 = vector.broadcast %cst_150 : f32 to vector<8x128xf32>
    %440 = arith.addf %439, %438 : vector<8x128xf32>
    %441 = arith.divf %439, %440 : vector<8x128xf32>
    %442 = vector.extract_strided_slice %422 {offsets = [0, 256], sizes = [8, 128], strides = [1, 1]} : vector<8x384xf32> to vector<8x128xf32>
    %443 = vector.extract_strided_slice %425 {offsets = [0, 256], sizes = [8, 128], strides = [1, 1]} : vector<8x384xf32> to vector<8x128xf32>
    %c0_151 = arith.constant 0 : index
    %c0_152 = arith.constant 0 : index
    %444 = vector.load %arg9[%c0_151, %c0_152] : memref<1x128xf32, #tpu.memory_space<vmem>>, vector<1x128xf32>
    %445 = vector.broadcast %444 : vector<1x128xf32> to vector<8x128xf32>
    %446 = arith.addf %443, %445 : vector<8x128xf32>
    %447 = arith.mulf %433, %446 : vector<8x128xf32>
    %448 = arith.addf %442, %447 : vector<8x128xf32>
    %449 = math.tanh %448 : vector<8x128xf32>
    %cst_153 = arith.constant 1.000000e+00 : f32
    %450 = vector.broadcast %cst_153 : f32 to vector<8x128xf32>
    %451 = arith.subf %450, %441 : vector<8x128xf32>
    %452 = arith.mulf %451, %449 : vector<8x128xf32>
    %453 = arith.mulf %441, %381 : vector<8x128xf32>
    %454 = arith.addf %452, %453 : vector<8x128xf32>
    %c6_i32 = arith.constant 6 : i32
    %455 = arith.index_cast %c6_i32 : i32 to index
    %c0_154 = arith.constant 0 : index
    %c0_155 = arith.constant 0 : index
    %456 = vector.load %arg13[%455, %c0_154, %c0_155] : memref<8x8x384xf32, #tpu.memory_space<vmem>>, vector<1x8x384xf32>
    %457 = vector.shape_cast %456 : vector<1x8x384xf32> to vector<8x384xf32>
    %458 = arith.truncf %416 : vector<8x128xf32> to vector<8x128xbf16>
    %c0_156 = arith.constant 0 : index
    %c0_157 = arith.constant 0 : index
    %459 = vector.load %arg3[%c0_156, %c0_157] : memref<128x384xbf16, #tpu.memory_space<vmem>>, vector<128x384xbf16>
    %cst_158 = arith.constant dense<0.000000e+00> : vector<8x384xf32>
    %460 = tpu.matmul %458, %459, %cst_158 {dimension_numbers = #tpu.dot_dimension_numbers<[1], [0], [0], [1], [0, 0, 1, 1], [], []>} : vector<8x128xbf16>, vector<128x384xbf16>, vector<8x384xf32> -> vector<8x384xf32>
    %461 = vector.extract_strided_slice %457 {offsets = [0, 0], sizes = [8, 128], strides = [1, 1]} : vector<8x384xf32> to vector<8x128xf32>
    %462 = vector.extract_strided_slice %460 {offsets = [0, 0], sizes = [8, 128], strides = [1, 1]} : vector<8x384xf32> to vector<8x128xf32>
    %463 = arith.addf %461, %462 : vector<8x128xf32>
    %464 = arith.negf %463 : vector<8x128xf32>
    %465 = math.exp %464 : vector<8x128xf32>
    %cst_159 = arith.constant 1.000000e+00 : f32
    %466 = vector.broadcast %cst_159 : f32 to vector<8x128xf32>
    %467 = arith.addf %466, %465 : vector<8x128xf32>
    %468 = arith.divf %466, %467 : vector<8x128xf32>
    %469 = vector.extract_strided_slice %457 {offsets = [0, 128], sizes = [8, 128], strides = [1, 1]} : vector<8x384xf32> to vector<8x128xf32>
    %470 = vector.extract_strided_slice %460 {offsets = [0, 128], sizes = [8, 128], strides = [1, 1]} : vector<8x384xf32> to vector<8x128xf32>
    %471 = arith.addf %469, %470 : vector<8x128xf32>
    %472 = arith.negf %471 : vector<8x128xf32>
    %473 = math.exp %472 : vector<8x128xf32>
    %cst_160 = arith.constant 1.000000e+00 : f32
    %474 = vector.broadcast %cst_160 : f32 to vector<8x128xf32>
    %475 = arith.addf %474, %473 : vector<8x128xf32>
    %476 = arith.divf %474, %475 : vector<8x128xf32>
    %477 = vector.extract_strided_slice %457 {offsets = [0, 256], sizes = [8, 128], strides = [1, 1]} : vector<8x384xf32> to vector<8x128xf32>
    %478 = vector.extract_strided_slice %460 {offsets = [0, 256], sizes = [8, 128], strides = [1, 1]} : vector<8x384xf32> to vector<8x128xf32>
    %c0_161 = arith.constant 0 : index
    %c0_162 = arith.constant 0 : index
    %479 = vector.load %arg7[%c0_161, %c0_162] : memref<1x128xf32, #tpu.memory_space<vmem>>, vector<1x128xf32>
    %480 = vector.broadcast %479 : vector<1x128xf32> to vector<8x128xf32>
    %481 = arith.addf %478, %480 : vector<8x128xf32>
    %482 = arith.mulf %468, %481 : vector<8x128xf32>
    %483 = arith.addf %477, %482 : vector<8x128xf32>
    %484 = math.tanh %483 : vector<8x128xf32>
    %cst_163 = arith.constant 1.000000e+00 : f32
    %485 = vector.broadcast %cst_163 : f32 to vector<8x128xf32>
    %486 = arith.subf %485, %476 : vector<8x128xf32>
    %487 = arith.mulf %486, %484 : vector<8x128xf32>
    %488 = arith.mulf %476, %416 : vector<8x128xf32>
    %489 = arith.addf %487, %488 : vector<8x128xf32>
    %490 = arith.truncf %489 : vector<8x128xf32> to vector<8x128xbf16>
    %c0_164 = arith.constant 0 : index
    %c0_165 = arith.constant 0 : index
    %491 = vector.load %arg4[%c0_164, %c0_165] : memref<128x384xbf16, #tpu.memory_space<vmem>>, vector<128x384xbf16>
    %cst_166 = arith.constant dense<0.000000e+00> : vector<8x384xf32>
    %492 = tpu.matmul %490, %491, %cst_166 {dimension_numbers = #tpu.dot_dimension_numbers<[1], [0], [0], [1], [0, 0, 1, 1], [], []>} : vector<8x128xbf16>, vector<128x384xbf16>, vector<8x384xf32> -> vector<8x384xf32>
    %c0_167 = arith.constant 0 : index
    %c0_168 = arith.constant 0 : index
    %493 = vector.load %arg8[%c0_167, %c0_168] : memref<1x384xf32, #tpu.memory_space<vmem>>, vector<1x384xf32>
    %494 = vector.broadcast %493 : vector<1x384xf32> to vector<8x384xf32>
    %495 = arith.addf %492, %494 : vector<8x384xf32>
    %496 = arith.truncf %454 : vector<8x128xf32> to vector<8x128xbf16>
    %c0_169 = arith.constant 0 : index
    %c0_170 = arith.constant 0 : index
    %497 = vector.load %arg5[%c0_169, %c0_170] : memref<128x384xbf16, #tpu.memory_space<vmem>>, vector<128x384xbf16>
    %cst_171 = arith.constant dense<0.000000e+00> : vector<8x384xf32>
    %498 = tpu.matmul %496, %497, %cst_171 {dimension_numbers = #tpu.dot_dimension_numbers<[1], [0], [0], [1], [0, 0, 1, 1], [], []>} : vector<8x128xbf16>, vector<128x384xbf16>, vector<8x384xf32> -> vector<8x384xf32>
    %499 = vector.extract_strided_slice %495 {offsets = [0, 0], sizes = [8, 128], strides = [1, 1]} : vector<8x384xf32> to vector<8x128xf32>
    %500 = vector.extract_strided_slice %498 {offsets = [0, 0], sizes = [8, 128], strides = [1, 1]} : vector<8x384xf32> to vector<8x128xf32>
    %501 = arith.addf %499, %500 : vector<8x128xf32>
    %502 = arith.negf %501 : vector<8x128xf32>
    %503 = math.exp %502 : vector<8x128xf32>
    %cst_172 = arith.constant 1.000000e+00 : f32
    %504 = vector.broadcast %cst_172 : f32 to vector<8x128xf32>
    %505 = arith.addf %504, %503 : vector<8x128xf32>
    %506 = arith.divf %504, %505 : vector<8x128xf32>
    %507 = vector.extract_strided_slice %495 {offsets = [0, 128], sizes = [8, 128], strides = [1, 1]} : vector<8x384xf32> to vector<8x128xf32>
    %508 = vector.extract_strided_slice %498 {offsets = [0, 128], sizes = [8, 128], strides = [1, 1]} : vector<8x384xf32> to vector<8x128xf32>
    %509 = arith.addf %507, %508 : vector<8x128xf32>
    %510 = arith.negf %509 : vector<8x128xf32>
    %511 = math.exp %510 : vector<8x128xf32>
    %cst_173 = arith.constant 1.000000e+00 : f32
    %512 = vector.broadcast %cst_173 : f32 to vector<8x128xf32>
    %513 = arith.addf %512, %511 : vector<8x128xf32>
    %514 = arith.divf %512, %513 : vector<8x128xf32>
    %515 = vector.extract_strided_slice %495 {offsets = [0, 256], sizes = [8, 128], strides = [1, 1]} : vector<8x384xf32> to vector<8x128xf32>
    %516 = vector.extract_strided_slice %498 {offsets = [0, 256], sizes = [8, 128], strides = [1, 1]} : vector<8x384xf32> to vector<8x128xf32>
    %c0_174 = arith.constant 0 : index
    %c0_175 = arith.constant 0 : index
    %517 = vector.load %arg9[%c0_174, %c0_175] : memref<1x128xf32, #tpu.memory_space<vmem>>, vector<1x128xf32>
    %518 = vector.broadcast %517 : vector<1x128xf32> to vector<8x128xf32>
    %519 = arith.addf %516, %518 : vector<8x128xf32>
    %520 = arith.mulf %506, %519 : vector<8x128xf32>
    %521 = arith.addf %515, %520 : vector<8x128xf32>
    %522 = math.tanh %521 : vector<8x128xf32>
    %cst_176 = arith.constant 1.000000e+00 : f32
    %523 = vector.broadcast %cst_176 : f32 to vector<8x128xf32>
    %524 = arith.subf %523, %514 : vector<8x128xf32>
    %525 = arith.mulf %524, %522 : vector<8x128xf32>
    %526 = arith.mulf %514, %454 : vector<8x128xf32>
    %527 = arith.addf %525, %526 : vector<8x128xf32>
    %c7_i32 = arith.constant 7 : i32
    %528 = arith.index_cast %c7_i32 : i32 to index
    %c0_177 = arith.constant 0 : index
    %c0_178 = arith.constant 0 : index
    %529 = vector.load %arg13[%528, %c0_177, %c0_178] : memref<8x8x384xf32, #tpu.memory_space<vmem>>, vector<1x8x384xf32>
    %530 = vector.shape_cast %529 : vector<1x8x384xf32> to vector<8x384xf32>
    %531 = arith.truncf %489 : vector<8x128xf32> to vector<8x128xbf16>
    %c0_179 = arith.constant 0 : index
    %c0_180 = arith.constant 0 : index
    %532 = vector.load %arg3[%c0_179, %c0_180] : memref<128x384xbf16, #tpu.memory_space<vmem>>, vector<128x384xbf16>
    %cst_181 = arith.constant dense<0.000000e+00> : vector<8x384xf32>
    %533 = tpu.matmul %531, %532, %cst_181 {dimension_numbers = #tpu.dot_dimension_numbers<[1], [0], [0], [1], [0, 0, 1, 1], [], []>} : vector<8x128xbf16>, vector<128x384xbf16>, vector<8x384xf32> -> vector<8x384xf32>
    %534 = vector.extract_strided_slice %530 {offsets = [0, 0], sizes = [8, 128], strides = [1, 1]} : vector<8x384xf32> to vector<8x128xf32>
    %535 = vector.extract_strided_slice %533 {offsets = [0, 0], sizes = [8, 128], strides = [1, 1]} : vector<8x384xf32> to vector<8x128xf32>
    %536 = arith.addf %534, %535 : vector<8x128xf32>
    %537 = arith.negf %536 : vector<8x128xf32>
    %538 = math.exp %537 : vector<8x128xf32>
    %cst_182 = arith.constant 1.000000e+00 : f32
    %539 = vector.broadcast %cst_182 : f32 to vector<8x128xf32>
    %540 = arith.addf %539, %538 : vector<8x128xf32>
    %541 = arith.divf %539, %540 : vector<8x128xf32>
    %542 = vector.extract_strided_slice %530 {offsets = [0, 128], sizes = [8, 128], strides = [1, 1]} : vector<8x384xf32> to vector<8x128xf32>
    %543 = vector.extract_strided_slice %533 {offsets = [0, 128], sizes = [8, 128], strides = [1, 1]} : vector<8x384xf32> to vector<8x128xf32>
    %544 = arith.addf %542, %543 : vector<8x128xf32>
    %545 = arith.negf %544 : vector<8x128xf32>
    %546 = math.exp %545 : vector<8x128xf32>
    %cst_183 = arith.constant 1.000000e+00 : f32
    %547 = vector.broadcast %cst_183 : f32 to vector<8x128xf32>
    %548 = arith.addf %547, %546 : vector<8x128xf32>
    %549 = arith.divf %547, %548 : vector<8x128xf32>
    %550 = vector.extract_strided_slice %530 {offsets = [0, 256], sizes = [8, 128], strides = [1, 1]} : vector<8x384xf32> to vector<8x128xf32>
    %551 = vector.extract_strided_slice %533 {offsets = [0, 256], sizes = [8, 128], strides = [1, 1]} : vector<8x384xf32> to vector<8x128xf32>
    %c0_184 = arith.constant 0 : index
    %c0_185 = arith.constant 0 : index
    %552 = vector.load %arg7[%c0_184, %c0_185] : memref<1x128xf32, #tpu.memory_space<vmem>>, vector<1x128xf32>
    %553 = vector.broadcast %552 : vector<1x128xf32> to vector<8x128xf32>
    %554 = arith.addf %551, %553 : vector<8x128xf32>
    %555 = arith.mulf %541, %554 : vector<8x128xf32>
    %556 = arith.addf %550, %555 : vector<8x128xf32>
    %557 = math.tanh %556 : vector<8x128xf32>
    %cst_186 = arith.constant 1.000000e+00 : f32
    %558 = vector.broadcast %cst_186 : f32 to vector<8x128xf32>
    %559 = arith.subf %558, %549 : vector<8x128xf32>
    %560 = arith.mulf %559, %557 : vector<8x128xf32>
    %561 = arith.mulf %549, %489 : vector<8x128xf32>
    %562 = arith.addf %560, %561 : vector<8x128xf32>
    %563 = arith.truncf %562 : vector<8x128xf32> to vector<8x128xbf16>
    %c0_187 = arith.constant 0 : index
    %c0_188 = arith.constant 0 : index
    %564 = vector.load %arg4[%c0_187, %c0_188] : memref<128x384xbf16, #tpu.memory_space<vmem>>, vector<128x384xbf16>
    %cst_189 = arith.constant dense<0.000000e+00> : vector<8x384xf32>
    %565 = tpu.matmul %563, %564, %cst_189 {dimension_numbers = #tpu.dot_dimension_numbers<[1], [0], [0], [1], [0, 0, 1, 1], [], []>} : vector<8x128xbf16>, vector<128x384xbf16>, vector<8x384xf32> -> vector<8x384xf32>
    %c0_190 = arith.constant 0 : index
    %c0_191 = arith.constant 0 : index
    %566 = vector.load %arg8[%c0_190, %c0_191] : memref<1x384xf32, #tpu.memory_space<vmem>>, vector<1x384xf32>
    %567 = vector.broadcast %566 : vector<1x384xf32> to vector<8x384xf32>
    %568 = arith.addf %565, %567 : vector<8x384xf32>
    %569 = arith.truncf %527 : vector<8x128xf32> to vector<8x128xbf16>
    %c0_192 = arith.constant 0 : index
    %c0_193 = arith.constant 0 : index
    %570 = vector.load %arg5[%c0_192, %c0_193] : memref<128x384xbf16, #tpu.memory_space<vmem>>, vector<128x384xbf16>
    %cst_194 = arith.constant dense<0.000000e+00> : vector<8x384xf32>
    %571 = tpu.matmul %569, %570, %cst_194 {dimension_numbers = #tpu.dot_dimension_numbers<[1], [0], [0], [1], [0, 0, 1, 1], [], []>} : vector<8x128xbf16>, vector<128x384xbf16>, vector<8x384xf32> -> vector<8x384xf32>
    %572 = vector.extract_strided_slice %568 {offsets = [0, 0], sizes = [8, 128], strides = [1, 1]} : vector<8x384xf32> to vector<8x128xf32>
    %573 = vector.extract_strided_slice %571 {offsets = [0, 0], sizes = [8, 128], strides = [1, 1]} : vector<8x384xf32> to vector<8x128xf32>
    %574 = arith.addf %572, %573 : vector<8x128xf32>
    %575 = arith.negf %574 : vector<8x128xf32>
    %576 = math.exp %575 : vector<8x128xf32>
    %cst_195 = arith.constant 1.000000e+00 : f32
    %577 = vector.broadcast %cst_195 : f32 to vector<8x128xf32>
    %578 = arith.addf %577, %576 : vector<8x128xf32>
    %579 = arith.divf %577, %578 : vector<8x128xf32>
    %580 = vector.extract_strided_slice %568 {offsets = [0, 128], sizes = [8, 128], strides = [1, 1]} : vector<8x384xf32> to vector<8x128xf32>
    %581 = vector.extract_strided_slice %571 {offsets = [0, 128], sizes = [8, 128], strides = [1, 1]} : vector<8x384xf32> to vector<8x128xf32>
    %582 = arith.addf %580, %581 : vector<8x128xf32>
    %583 = arith.negf %582 : vector<8x128xf32>
    %584 = math.exp %583 : vector<8x128xf32>
    %cst_196 = arith.constant 1.000000e+00 : f32
    %585 = vector.broadcast %cst_196 : f32 to vector<8x128xf32>
    %586 = arith.addf %585, %584 : vector<8x128xf32>
    %587 = arith.divf %585, %586 : vector<8x128xf32>
    %588 = vector.extract_strided_slice %568 {offsets = [0, 256], sizes = [8, 128], strides = [1, 1]} : vector<8x384xf32> to vector<8x128xf32>
    %589 = vector.extract_strided_slice %571 {offsets = [0, 256], sizes = [8, 128], strides = [1, 1]} : vector<8x384xf32> to vector<8x128xf32>
    %c0_197 = arith.constant 0 : index
    %c0_198 = arith.constant 0 : index
    %590 = vector.load %arg9[%c0_197, %c0_198] : memref<1x128xf32, #tpu.memory_space<vmem>>, vector<1x128xf32>
    %591 = vector.broadcast %590 : vector<1x128xf32> to vector<8x128xf32>
    %592 = arith.addf %589, %591 : vector<8x128xf32>
    %593 = arith.mulf %579, %592 : vector<8x128xf32>
    %594 = arith.addf %588, %593 : vector<8x128xf32>
    %595 = math.tanh %594 : vector<8x128xf32>
    %cst_199 = arith.constant 1.000000e+00 : f32
    %596 = vector.broadcast %cst_199 : f32 to vector<8x128xf32>
    %597 = arith.subf %596, %587 : vector<8x128xf32>
    %598 = arith.mulf %597, %595 : vector<8x128xf32>
    %599 = arith.mulf %587, %527 : vector<8x128xf32>
    %600 = arith.addf %598, %599 : vector<8x128xf32>
    %c8_i32 = arith.constant 8 : i32
    %c0_200 = arith.constant 0 : index
    %c0_201 = arith.constant 0 : index
    %c0_202 = arith.constant 0 : index
    %601 = vector.load %arg14[%c0_200, %c0_201, %c0_202] : memref<2x8x128xf32, #tpu.memory_space<vmem>>, vector<1x8x128xf32>
    %602 = vector.shape_cast %601 : vector<1x8x128xf32> to vector<8x128xf32>
    %603 = vector.shape_cast %562 : vector<8x128xf32> to vector<1x8x128xf32>
    tpu.vector_store %arg14[%c0_200, %c0_201, %c0_202], %603 {strides = array<i32>} : memref<2x8x128xf32, #tpu.memory_space<vmem>>, vector<1x8x128xf32>,
    %c1_203 = arith.constant 1 : index
    %c0_204 = arith.constant 0 : index
    %c0_205 = arith.constant 0 : index
    %604 = vector.load %arg14[%c1_203, %c0_204, %c0_205] : memref<2x8x128xf32, #tpu.memory_space<vmem>>, vector<1x8x128xf32>
    %605 = vector.shape_cast %604 : vector<1x8x128xf32> to vector<8x128xf32>
    %606 = vector.shape_cast %600 : vector<8x128xf32> to vector<1x8x128xf32>
    tpu.vector_store %arg14[%c1_203, %c0_204, %c0_205], %606 {strides = array<i32>} : memref<2x8x128xf32, #tpu.memory_space<vmem>>, vector<1x8x128xf32>,
    %c0_i32_206 = arith.constant 0 : i32
    %607 = arith.cmpi eq, %arg0, %c0_i32_206 : i32
    %608 = arith.extui %607 : i1 to i32
    %c0_i32_207 = arith.constant 0 : i32
    %609 = arith.cmpi ne, %608, %c0_i32_207 : i32
    scf.if %609 {
      %c0_208 = arith.constant 0 : index
      %c0_209 = arith.constant 0 : index
      %610 = vector.load %arg10[%c0_208, %c0_209] : memref<1x128xf32, #tpu.memory_space<vmem>>, vector<1x128xf32>
      %611 = vector.broadcast %610 : vector<1x128xf32> to vector<8x128xf32>
      %612 = arith.mulf %600, %611 : vector<8x128xf32>
      %cst_210 = arith.constant dense<0.000000e+00> : vector<8xf32>
      %613 = vector.multi_reduction <add>, %612, %cst_210 [1] : vector<8x128xf32> to vector<8xf32>
      %614 = vector.shape_cast %613 : vector<8xf32> to vector<8x1xf32>
      %c0_211 = arith.constant 0 : index
      %c0_212 = arith.constant 0 : index
      %615 = vector.load %arg11[%c0_211, %c0_212] : memref<1x1xf32, #tpu.memory_space<vmem>>, vector<1x1xf32>
      %616 = vector.broadcast %615 : vector<1x1xf32> to vector<8x1xf32>
      %617 = arith.addf %614, %616 : vector<8x1xf32>
      %c0_213 = arith.constant 0 : index
      %c0_214 = arith.constant 0 : index
      %618 = vector.load %arg12[%c0_213, %c0_214] : memref<8x1xf32, #tpu.memory_space<vmem>>, vector<8x1xf32>
      tpu.vector_store %arg12[%c0_213, %c0_214], %617 {strides = array<i32>} : memref<8x1xf32, #tpu.memory_space<vmem>>, vector<8x1xf32>,
    } else {
    }
    return
  }
  func.func @transform_0(%arg0: i32) -> (i32, i32, i32) {
    %c0_i32 = arith.constant 0 : i32
    %c0_i32_0 = arith.constant 0 : i32
    %c0_i32_1 = arith.constant 0 : i32
    return %arg0, %c0_i32, %c0_i32_0 : i32, i32, i32
  }
  func.func @transform_1(%arg0: i32) -> (i32, i32) {
    %c0_i32 = arith.constant 0 : i32
    %c0_i32_0 = arith.constant 0 : i32
    %c0_i32_1 = arith.constant 0 : i32
    return %c0_i32, %c0_i32_0 : i32, i32
  }
  func.func @transform_2(%arg0: i32) -> (i32, i32) {
    %c0_i32 = arith.constant 0 : i32
    %c0_i32_0 = arith.constant 0 : i32
    %c0_i32_1 = arith.constant 0 : i32
    return %c0_i32, %c0_i32_0 : i32, i32
  }
  func.func @transform_3(%arg0: i32) -> (i32, i32) {
    %c0_i32 = arith.constant 0 : i32
    %c0_i32_0 = arith.constant 0 : i32
    %c0_i32_1 = arith.constant 0 : i32
    return %c0_i32, %c0_i32_0 : i32, i32
  }
  func.func @transform_4(%arg0: i32) -> (i32, i32) {
    %c0_i32 = arith.constant 0 : i32
    %c0_i32_0 = arith.constant 0 : i32
    %c0_i32_1 = arith.constant 0 : i32
    return %c0_i32, %c0_i32_0 : i32, i32
  }
  func.func @transform_5(%arg0: i32) -> (i32, i32) {
    %c0_i32 = arith.constant 0 : i32
    %c0_i32_0 = arith.constant 0 : i32
    %c0_i32_1 = arith.constant 0 : i32
    return %c0_i32, %c0_i32_0 : i32, i32
  }
  func.func @transform_6(%arg0: i32) -> (i32, i32) {
    %c0_i32 = arith.constant 0 : i32
    %c0_i32_0 = arith.constant 0 : i32
    %c0_i32_1 = arith.constant 0 : i32
    return %c0_i32, %c0_i32_0 : i32, i32
  }
  func.func @transform_7(%arg0: i32) -> (i32, i32) {
    %c0_i32 = arith.constant 0 : i32
    %c0_i32_0 = arith.constant 0 : i32
    %c0_i32_1 = arith.constant 0 : i32
    return %c0_i32, %c0_i32_0 : i32, i32
  }
  func.func @transform_8(%arg0: i32) -> (i32, i32) {
    %c0_i32 = arith.constant 0 : i32
    %c0_i32_0 = arith.constant 0 : i32
    %c0_i32_1 = arith.constant 0 : i32
    return %c0_i32, %c0_i32_0 : i32, i32
  }
  func.func @transform_9(%arg0: i32) -> (i32, i32) {
    %c0_i32 = arith.constant 0 : i32
    %c0_i32_0 = arith.constant 0 : i32
    %c0_i32_1 = arith.constant 0 : i32
    return %c0_i32, %c0_i32_0 : i32, i32
  }
  func.func @transform_10(%arg0: i32) -> (i32, i32) {
    %c0_i32 = arith.constant 0 : i32
    %c0_i32_0 = arith.constant 0 : i32
    %c0_i32_1 = arith.constant 0 : i32
    return %c0_i32, %c0_i32_0 : i32, i32
  }
  func.func @transform_11(%arg0: i32) -> (i32, i32) {
    %c0_i32 = arith.constant 0 : i32
    %c0_i32_0 = arith.constant 0 : i32
    %c0_i32_1 = arith.constant 0 : i32
    return %c0_i32, %c0_i32_0 : i32, i32
  }
}

</mosaic_0001>

<llo_original>
// kernel: gru_model_forward.1
$region0: #{gru_model_forward.1}
  #allocation0 [shape = 'u32[]', space=smem, size = 0x4, offset = 0x4, fixed_abs, tag = 'smem constant byte address 0x4 - core index']
  #allocation1 [shape = 'u32[144,128]{1,0:T(1,128)}', space=vmem, size = 0x12000, scoped, tag = 'internal scratch']
  #allocation2 [shape = 'f32[8,8,384]{2,1,0:T(8,128)}', space=vmem, size = 0x18000, scoped, tag = 'scratch operand']
  #allocation3 [shape = 'f32[2,8,128]{2,1,0:T(8,128)}', space=vmem, size = 0x2000, scoped, tag = 'scratch operand']
  #allocation4 [shape = 'f32[1,1]{1,0:T(1,128)S(1)}', space=vmem, size = 0x200, scoped, tag = 'scoped memory for gru_model_forward.1']
  %s0 = inlined_call_operand.vmem [shape: f32[8,8,6], index: 0, kind: input, shape index: {}]
  %s1 = inlined_call_operand.vmem [shape: bf16[6,384], index: 1, kind: input, shape index: {}]
  %s2 = inlined_call_operand.hbm [shape: bf16[128,384], index: 2, kind: input, shape index: {}]
  %s3 = inlined_call_operand.hbm [shape: bf16[128,384], index: 3, kind: input, shape index: {}]
  %s4 = inlined_call_operand.hbm [shape: bf16[128,384], index: 4, kind: input, shape index: {}]
  %s5 = inlined_call_operand.vmem [shape: f32[1,384], index: 5, kind: input, shape index: {}]
  %s6 = inlined_call_operand.vmem [shape: f32[1,128], index: 6, kind: input, shape index: {}]
  %s7 = inlined_call_operand.vmem [shape: f32[1,384], index: 7, kind: input, shape index: {}]
  %s8 = inlined_call_operand.vmem [shape: f32[1,128], index: 8, kind: input, shape index: {}]
  %s9 = inlined_call_operand.vmem [shape: f32[1,128], index: 9, kind: input, shape index: {}]
  %s10 = inlined_call_operand.<no memory space> [shape: f32[1,1], index: 10, kind: input, shape index: {}]
  %s11 = inlined_call_operand.vmem [shape: f32[8,1], index: 11, kind: output, shape index: {}]
  %s12 = sld [smem:[#allocation0]]
  $region74: #{gru_model_forward.1} parent=0
    _
  %s14 = ssub.s32 1, %s12
  %s15 = scalar_select 0, %s14, %s12
  %v16 = vstv %s10
  %17 = vst [vmem:[#allocation4] sm:$0x1] %v16
  $region1: #{gru_model_forward.1} parent=0
    #allocation5 [shape = 'u8[98304]{0}', space=vmem, size = 0x18000, scoped, tag = 'input window, operand 2, single buffered']
    #allocation6 [shape = 's32[1]{0}', space=sflag, size = 0x4, scoped, tag = 'scoped memory for gru_model_forward.1']
    #allocation7 [shape = 'u8[98304]{0}', space=vmem, size = 0x18000, scoped, tag = 'input window, operand 3, single buffered']
    #allocation8 [shape = 's32[1]{0}', space=sflag, size = 0x4, scoped, tag = 'scoped memory for gru_model_forward.1']
    #allocation9 [shape = 'u8[98304]{0}', space=vmem, size = 0x18000, scoped, tag = 'input window, operand 4, single buffered']
    %18 = vsyncpa [#allocation6], 0
    %19 = vsyncpa [#allocation8], 0
    // Predicated region
    $region2: #{gru_model_forward.1} parent=1 // pred_check
      _
    $region3: #{gru_model_forward.1} parent=1 // pred_check_branch
      %21 = sbr.rel (0) target = $region5
    $region4: #{gru_model_forward.1} parent=1 // pred_region
      _
    $region5: #{gru_model_forward.1} parent=1 // pred_fallthru
      _
    // Predicated region
    $region6: #{gru_model_forward.1} parent=1 // pred_check
      _
    $region7: #{gru_model_forward.1} parent=1 // pred_check_branch
      %23 = sbr.rel (0) target = $region9
    $region8: #{gru_model_forward.1} parent=1 // pred_region
      _
    $region9: #{gru_model_forward.1} parent=1 // pred_fallthru
      _
    // Predicated region
    $region10: #{gru_model_forward.1} parent=1 // pred_check
      _
    $region11: #{gru_model_forward.1} parent=1 // pred_check_branch
      %25 = sbr.rel (0) target = $region13
    $region12: #{gru_model_forward.1} parent=1 // pred_region
      %s27 = ssub.s32 3072, 3072
      %28 = vsyncadd [#allocation6], %s27
      %s29 = sshll.u32 [#allocation5], 4
      %s30 = int_to_ptr.vmem [resolvable:$true] %s29
      %35 = dma.hbm_to_vmem [thread:$0]  %s2, 3072, %s30, [#allocation6], 192, 192, 12
    $region13: #{gru_model_forward.1} parent=1 // pred_fallthru
      _
    // Predicated region
    $region14: #{gru_model_forward.1} parent=1 // pred_check
      _
    $region15: #{gru_model_forward.1} parent=1 // pred_check_branch
      %37 = sbr.rel (0) target = $region17
    $region16: #{gru_model_forward.1} parent=1 // pred_region
      %s39 = ssub.s32 3072, 3072
      %40 = vsyncadd [#allocation8], %s39
      %s41 = sshll.u32 [#allocation7], 4
      %s42 = int_to_ptr.vmem [resolvable:$true] %s41
      %47 = dma.hbm_to_vmem [thread:$0]  %s3, 3072, %s42, [#allocation8], 192, 192, 12
    $region17: #{gru_model_forward.1} parent=1 // pred_fallthru
      _
    // Predicated region
    $region18: #{gru_model_forward.1} parent=1 // pred_check
      _
    $region19: #{gru_model_forward.1} parent=1 // pred_check_branch
      %49 = sbr.rel (0) target = $region21
    $region20: #{gru_model_forward.1} parent=1 // pred_region
      %s51 = ssub.s32 3072, 3072
      %52 = vsyncadd [#allocation8], %s51
      %s53 = sshll.u32 [#allocation9], 4
      %s54 = int_to_ptr.vmem [resolvable:$true] %s53
      %59 = dma.hbm_to_vmem [thread:$0]  %s4, 3072, %s54, [#allocation8], 192, 192, 12
    $region21: #{gru_model_forward.1} parent=1 // pred_fallthru
      _
    // Predicated region
    $region22: #{gru_model_forward.1} parent=1 // pred_check
      _
    $region23: #{gru_model_forward.1} parent=1 // pred_check_branch
      %61 = sbr.rel (0) target = $region25
    $region24: #{gru_model_forward.1} parent=1 // pred_region
      _
    $region25: #{gru_model_forward.1} parent=1 // pred_fallthru
      _
    // Predicated region
    $region26: #{gru_model_forward.1} parent=1 // pred_check
      _
    $region27: #{gru_model_forward.1} parent=1 // pred_check_branch
      %63 = sbr.rel (0) target = $region29
    $region28: #{gru_model_forward.1} parent=1 // pred_region
      _
    $region29: #{gru_model_forward.1} parent=1 // pred_fallthru
      _
    // Predicated region
    $region30: #{gru_model_forward.1} parent=1 // pred_check
      _
    $region31: #{gru_model_forward.1} parent=1 // pred_check_branch
      %65 = sbr.rel (0) target = $region33
    $region32: #{gru_model_forward.1} parent=1 // pred_region
      _
    $region33: #{gru_model_forward.1} parent=1 // pred_fallthru
      _
    // Predicated region
    $region34: #{gru_model_forward.1} parent=1 // pred_check
      _
    $region35: #{gru_model_forward.1} parent=1 // pred_check_branch
      %67 = sbr.rel (0) target = $region37
    $region36: #{gru_model_forward.1} parent=1 // pred_region
      _
    $region37: #{gru_model_forward.1} parent=1 // pred_fallthru
      _
    // Predicated region
    $region38: #{gru_model_forward.1} parent=1 // pred_check
      _
    $region39: #{gru_model_forward.1} parent=1 // pred_check_branch
      %69 = sbr.rel (0) target = $region41
    $region40: #{gru_model_forward.1} parent=1 // pred_region
      _
    $region41: #{gru_model_forward.1} parent=1 // pred_fallthru
      _
    // Predicated region
    $region42: #{gru_model_forward.1} parent=1 // pred_check
      _
    $region43: #{gru_model_forward.1} parent=1 // pred_check_branch
      %71 = sbr.rel (0) target = $region45
    $region44: #{gru_model_forward.1} parent=1 // pred_region
      _
    $region45: #{gru_model_forward.1} parent=1 // pred_fallthru
      _
    // Predicated region
    $region46: #{gru_model_forward.1} parent=1 // pred_check
      _
    $region47: #{gru_model_forward.1} parent=1 // pred_check_branch
      %73 = sbr.rel (0) target = $region49
    $region48: #{gru_model_forward.1} parent=1 // pred_region
      %74 = dma.done [#allocation6], 3072
    $region49: #{gru_model_forward.1} parent=1 // pred_fallthru
      _
    // Predicated region
    $region50: #{gru_model_forward.1} parent=1 // pred_check
      _
    $region51: #{gru_model_forward.1} parent=1 // pred_check_branch
      %76 = sbr.rel (0) target = $region53
    $region52: #{gru_model_forward.1} parent=1 // pred_region
      %77 = dma.done [#allocation8], 3072
    $region53: #{gru_model_forward.1} parent=1 // pred_fallthru
      _
    // Predicated region
    $region54: #{gru_model_forward.1} parent=1 // pred_check
      _
    $region55: #{gru_model_forward.1} parent=1 // pred_check_branch
      %79 = sbr.rel (0) target = $region57
    $region56: #{gru_model_forward.1} parent=1 // pred_region
      %80 = dma.done [#allocation8], 3072
    $region57: #{gru_model_forward.1} parent=1 // pred_fallthru
      _
    %p82 = scmp.eq.s32.totalorder 0, 0
    // Predicated region
    $region58: #{gru_model_forward.1} parent=1 // pred_check
      %p83 = pneg %p82
    $region59: #{gru_model_forward.1} parent=1 // pred_check_branch
      %85 = sbr.rel (%p83) target = $region61
    $region60: #{gru_model_forward.1} parent=1 // pred_region
      %86 = vst [vmem:[#allocation3] sm:$0xff] 0.0
      %87 = vst [vmem:[#allocation3 + $0x8] sm:$0xff] 0.0
    $region61: #{gru_model_forward.1} parent=1 // pred_fallthru
      _
    %v88 = vld [vmem:[%s0] sm:$0xff]
    %v89 = vld [vmem:[%s0 + $0x8] sm:$0xff]
    %v90 = vld [vmem:[%s0 + $0x10] sm:$0xff]
    %v91 = vld [vmem:[%s0 + $0x18] sm:$0xff]
    %v92 = vld [vmem:[%s0 + $0x20] sm:$0xff]
    %v93 = vld [vmem:[%s0 + $0x28] sm:$0xff]
    %v94 = vld [vmem:[%s0 + $0x30] sm:$0xff]
    %v95 = vld [vmem:[%s0 + $0x38] sm:$0xff]
    %v96 = vpack.c.bf16 %v89, %v88
    %v97 = vpack.c.bf16 %v91, %v90
    %v98 = vpack.c.bf16 %v93, %v92
    %v99 = vpack.c.bf16 %v95, %v94
    %v100 = vld [vmem:[%s1] sm:$0x77]
    %v101 = vld [vmem:[%s1 + $0x8] sm:$0x7]
    %v102 = vld [vmem:[%s5] sm:$0x7]
    %v104 = vlaneseq
    %v105 = vshrl.u32 %v104, 7
    %v106 = vsub.s32 0, %v105
    %v107 = vrot.slane %v102, %v106
    %v108 = vlaneseq
    %v109 = vshrl.u32 %v108, 7
    %v110 = vsub.s32 1, %v109
    %v111 = vrot.slane %v102, %v110
    %v112 = vlaneseq
    %v113 = vshrl.u32 %v112, 7
    %v114 = vsub.s32 2, %v113
    %v115 = vrot.slane %v102, %v114
    %v121 = vunpack.c.l.b16 %v100
    %v122 = vunpack.c.h.b16 %v100
    %v123 = vunpack.c.l.b16 %v101
    %v124 = vpack.c.b16 %v121, %v121
    %v125 = vpack.c.b16 %v122, %v122
    %v126 = vpack.c.b16 %v123, %v123
    %vm127 = vcmask 48128
    %v129 = vsel %vm127, %v96, 0
    %v132 = vsel %vm127, %v97, 0
    %v135 = vsel %vm127, %v98, 0
    %v138 = vsel %vm127, %v99, 0
    %vm140 = vcmask 1042432
    %v142 = vsel %vm140, %v124, 0
    %v145 = vsel %vm140, %v125, 0
    %v148 = vsel %vm140, %v126, 0
    %150 = vmatprep.subr.bf16.mxu0 %v145
    %151 = vmatpush1.bf16.msra.mxu0 %v142
    %152 = vmatprep.subr.bf16.mxu0 0
    %153 = vmatpush1.bf16.msra.mxu0 0
    %154 = vmatprep.subr.bf16.mxu0 0
    %155 = vmatpush1.bf16.msra.mxu0 0
    %156 = vmatprep.subr.bf16.mxu0 0
    %157 = vmatpush1.bf16.msra.mxu0 0
    %158 = vmatprep.subr.bf16.mxu0 0
    %159 = vmatpush1.bf16.msra.mxu0 0
    %160 = vmatprep.subr.bf16.mxu0 0
    %161 = vmatpush1.bf16.msra.mxu0 0
    %162 = vmatprep.subr.bf16.mxu0 0
    %163 = vmatpush1.bf16.msra.mxu0 0
    %164 = vmatprep.subr.bf16.mxu0 0
    %165 = vmatpush1.bf16.msra.mxu0 0
    %166 = vmatprep.subr.bf16.mxu0 0
    %167 = vmatpush1.bf16.msra.mxu0 0
    %168 = vmatprep.subr.bf16.mxu0 0
    %169 = vmatpush1.bf16.msra.mxu0 0
    %170 = vmatprep.subr.bf16.mxu0 0
    %171 = vmatpush1.bf16.msra.mxu0 0
    %172 = vmatprep.subr.bf16.mxu0 0
    %173 = vmatpush1.bf16.msra.mxu0 0
    %174 = vmatprep.subr.bf16.mxu0 0
    %175 = vmatpush1.bf16.msra.mxu0 0
    %176 = vmatprep.subr.bf16.mxu0 0
    %177 = vmatpush1.bf16.msra.mxu0 0
    %178 = vmatprep.subr.bf16.mxu0 0
    %179 = vmatpush1.bf16.msra.mxu0 0
    %180 = vmatprep.subr.bf16.mxu0 0
    %181 = vmatpush1.bf16.msra.mxu0 0
    %182 = vmatprep.mubr.bf16.mxu0 0
    %183 = vmatmul.mubr.bf16.gmra.mrb[0].mxu0 %v129
    %v184 = vpop.f32.mrb[0].mxu0
    %v185 = vadd.f32 %v107, %v184
    %v186 = vpop.f32.mrb[0].mxu0
    %v187 = vadd.f32 %v111, %v186
    %v188 = vpop.f32.mrb[0].mxu0
    %v189 = vadd.f32 %v107, %v188
    %v190 = vpop.f32.mrb[0].mxu0
    %v191 = vadd.f32 %v111, %v190
    %192 = vmatprep.mubr.bf16.mxu0 0
    %193 = vmatmul.mubr.bf16.gmra.mrb[0].mxu0 %v132
    %v194 = vpop.f32.mrb[0].mxu0
    %v195 = vadd.f32 %v107, %v194
    %v196 = vpop.f32.mrb[0].mxu0
    %v197 = vadd.f32 %v111, %v196
    %v198 = vpop.f32.mrb[0].mxu0
    %v199 = vadd.f32 %v107, %v198
    %v200 = vpop.f32.mrb[0].mxu0
    %v201 = vadd.f32 %v111, %v200
    %202 = vmatprep.mubr.bf16.mxu0 0
    %203 = vmatmul.mubr.bf16.gmra.mrb[0].mxu0 %v135
    %v204 = vpop.f32.mrb[0].mxu0
    %v205 = vadd.f32 %v107, %v204
    %v206 = vpop.f32.mrb[0].mxu0
    %v207 = vadd.f32 %v111, %v206
    %v208 = vpop.f32.mrb[0].mxu0
    %v209 = vadd.f32 %v107, %v208
    %v210 = vpop.f32.mrb[0].mxu0
    %v211 = vadd.f32 %v111, %v210
    %212 = vmatprep.mubr.bf16.mxu0 0
    %213 = vmatmul.mubr.bf16.gmra.mrb[0].mxu0 %v138
    %v214 = vpop.f32.mrb[0].mxu0
    %v215 = vadd.f32 %v107, %v214
    %v216 = vpop.f32.mrb[0].mxu0
    %v217 = vadd.f32 %v111, %v216
    %v218 = vpop.f32.mrb[0].mxu0
    %v219 = vadd.f32 %v107, %v218
    %v220 = vpop.f32.mrb[0].mxu0
    %v221 = vadd.f32 %v111, %v220
    %222 = vdwg.mxu0
    %223 = vmatprep.subr.bf16.mxu0 0
    %224 = vmatpush1.bf16.msra.mxu0 %v148
    %225 = vmatprep.subr.bf16.mxu0 0
    %226 = vmatpush1.bf16.msra.mxu0 0
    %227 = vmatprep.subr.bf16.mxu0 0
    %228 = vmatpush1.bf16.msra.mxu0 0
    %229 = vmatprep.subr.bf16.mxu0 0
    %230 = vmatpush1.bf16.msra.mxu0 0
    %231 = vmatprep.subr.bf16.mxu0 0
    %232 = vmatpush1.bf16.msra.mxu0 0
    %233 = vmatprep.subr.bf16.mxu0 0
    %234 = vmatpush1.bf16.msra.mxu0 0
    %235 = vmatprep.subr.bf16.mxu0 0
    %236 = vmatpush1.bf16.msra.mxu0 0
    %237 = vmatprep.subr.bf16.mxu0 0
    %238 = vmatpush1.bf16.msra.mxu0 0
    %239 = vmatprep.subr.bf16.mxu0 0
    %240 = vmatpush1.bf16.msra.mxu0 0
    %241 = vmatprep.subr.bf16.mxu0 0
    %242 = vmatpush1.bf16.msra.mxu0 0
    %243 = vmatprep.subr.bf16.mxu0 0
    %244 = vmatpush1.bf16.msra.mxu0 0
    %245 = vmatprep.subr.bf16.mxu0 0
    %246 = vmatpush1.bf16.msra.mxu0 0
    %247 = vmatprep.subr.bf16.mxu0 0
    %248 = vmatpush1.bf16.msra.mxu0 0
    %249 = vmatprep.subr.bf16.mxu0 0
    %250 = vmatpush1.bf16.msra.mxu0 0
    %251 = vmatprep.subr.bf16.mxu0 0
    %252 = vmatpush1.bf16.msra.mxu0 0
    %253 = vmatprep.subr.bf16.mxu0 0
    %254 = vmatpush1.bf16.msra.mxu0 0
    %255 = vmatprep.mubr.bf16.mxu0 0
    %256 = vmatmul.mubr.bf16.gmra.mrb[0].mxu0 %v129
    %v257 = vpop.f32.mrb[0].mxu0
    %v258 = vadd.f32 %v115, %v257
    %v259 = vpop.f32.mrb[0].mxu0
    %v260 = vpop.f32.mrb[0].mxu0
    %v261 = vadd.f32 %v115, %v260
    %v262 = vpop.f32.mrb[0].mxu0
    %263 = vmatprep.mubr.bf16.mxu0 0
    %264 = vmatmul.mubr.bf16.gmra.mrb[0].mxu0 %v132
    %v265 = vpop.f32.mrb[0].mxu0
    %v266 = vadd.f32 %v115, %v265
    %v267 = vpop.f32.mrb[0].mxu0
    %v268 = vpop.f32.mrb[0].mxu0
    %v269 = vadd.f32 %v115, %v268
    %v270 = vpop.f32.mrb[0].mxu0
    %271 = vmatprep.mubr.bf16.mxu0 0
    %272 = vmatmul.mubr.bf16.gmra.mrb[0].mxu0 %v135
    %v273 = vpop.f32.mrb[0].mxu0
    %v274 = vadd.f32 %v115, %v273
    %v275 = vpop.f32.mrb[0].mxu0
    %v276 = vpop.f32.mrb[0].mxu0
    %v277 = vadd.f32 %v115, %v276
    %v278 = vpop.f32.mrb[0].mxu0
    %279 = vmatprep.mubr.bf16.mxu0 0
    %280 = vmatmul.mubr.bf16.gmra.mrb[0].mxu0 %v138
    %v281 = vpop.f32.mrb[0].mxu0
    %v282 = vadd.f32 %v115, %v281
    %v283 = vpop.f32.mrb[0].mxu0
    %v284 = vpop.f32.mrb[0].mxu0
    %v285 = vadd.f32 %v115, %v284
    %v286 = vpop.f32.mrb[0].mxu0
    %287 = vdwg.mxu0
    %288 = vst [vmem:[#allocation2] sm:$0xff] %v185
    %289 = vst [vmem:[#allocation2 + $0x8] sm:$0xff] %v187
    %290 = vst [vmem:[#allocation2 + $0x10] sm:$0xff] %v258
    %291 = vst [vmem:[#allocation2 + $0x18] sm:$0xff] %v189
    %292 = vst [vmem:[#allocation2 + $0x20] sm:$0xff] %v191
    %293 = vst [vmem:[#allocation2 + $0x28] sm:$0xff] %v261
    %294 = vst [vmem:[#allocation2 + $0x30] sm:$0xff] %v195
    %295 = vst [vmem:[#allocation2 + $0x38] sm:$0xff] %v197
    %296 = vst [vmem:[#allocation2 + $0x40] sm:$0xff] %v266
    %297 = vst [vmem:[#allocation2 + $0x48] sm:$0xff] %v199
    %298 = vst [vmem:[#allocation2 + $0x50] sm:$0xff] %v201
    %299 = vst [vmem:[#allocation2 + $0x58] sm:$0xff] %v269
    %300 = vst [vmem:[#allocation2 + $0x60] sm:$0xff] %v205
    %301 = vst [vmem:[#allocation2 + $0x68] sm:$0xff] %v207
    %302 = vst [vmem:[#allocation2 + $0x70] sm:$0xff] %v274
    %303 = vst [vmem:[#allocation2 + $0x78] sm:$0xff] %v209
    %304 = vst [vmem:[#allocation2 + $0x80] sm:$0xff] %v211
    %305 = vst [vmem:[#allocation2 + $0x88] sm:$0xff] %v277
    %306 = vst [vmem:[#allocation2 + $0x90] sm:$0xff] %v215
    %307 = vst [vmem:[#allocation2 + $0x98] sm:$0xff] %v217
    %308 = vst [vmem:[#allocation2 + $0xa0] sm:$0xff] %v282
    %309 = vst [vmem:[#allocation2 + $0xa8] sm:$0xff] %v219
    %310 = vst [vmem:[#allocation2 + $0xb0] sm:$0xff] %v221
    %311 = vst [vmem:[#allocation2 + $0xb8] sm:$0xff] %v285
    %v312 = vld [vmem:[#allocation3] sm:$0xff]
    %s313 = scalar_lea.vmem [#allocation3], 8
    %v314 = vld [vmem:[%s313] sm:$0xff]
    %v315 = vld [vmem:[#allocation2] sm:$0xff]
    %v316 = vld [vmem:[#allocation2 + $0x8] sm:$0xff]
    %v317 = vld [vmem:[#allocation2 + $0x10] sm:$0xff]
    %v318 = vpack.c.bf16 %v312, %v312
    %v319 = vld [vmem:[#allocation5] sm:$0xff]
    %v320 = vld [vmem:[#allocation5 + $0x8] sm:$0xf]
    %v321 = vld [vmem:[#allocation5 + $0xc] sm:$0xff]
    %v322 = vld [vmem:[#allocation5 + $0x14] sm:$0xf]
    %v323 = vld [vmem:[#allocation5 + $0x18] sm:$0xff]
    %v324 = vld [vmem:[#allocation5 + $0x20] sm:$0xf]
    %v325 = vld [vmem:[#allocation5 + $0x24] sm:$0xff]
    %v326 = vld [vmem:[#allocation5 + $0x2c] sm:$0xf]
    %v327 = vld [vmem:[#allocation5 + $0x30] sm:$0xff]
    %v328 = vld [vmem:[#allocation5 + $0x38] sm:$0xf]
    %v329 = vld [vmem:[#allocation5 + $0x3c] sm:$0xff]
    %v330 = vld [vmem:[#allocation5 + $0x44] sm:$0xf]
    %v331 = vld [vmem:[#allocation5 + $0x48] sm:$0xff]
    %v332 = vld [vmem:[#allocation5 + $0x50] sm:$0xf]
    %v333 = vld [vmem:[#allocation5 + $0x54] sm:$0xff]
    %v334 = vld [vmem:[#allocation5 + $0x5c] sm:$0xf]
    %v335 = vld [vmem:[#allocation5 + $0x60] sm:$0xff]
    %v336 = vld [vmem:[#allocation5 + $0x68] sm:$0xf]
    %v337 = vld [vmem:[#allocation5 + $0x6c] sm:$0xff]
    %v338 = vld [vmem:[#allocation5 + $0x74] sm:$0xf]
    %v339 = vld [vmem:[#allocation5 + $0x78] sm:$0xff]
    %v340 = vld [vmem:[#allocation5 + $0x80] sm:$0xf]
    %v341 = vld [vmem:[#allocation5 + $0x84] sm:$0xff]
    %v342 = vld [vmem:[#allocation5 + $0x8c] sm:$0xf]
    %v343 = vld [vmem:[#allocation5 + $0x90] sm:$0xff]
    %v344 = vld [vmem:[#allocation5 + $0x98] sm:$0xf]
    %v345 = vld [vmem:[#allocation5 + $0x9c] sm:$0xff]
    %v346 = vld [vmem:[#allocation5 + $0xa4] sm:$0xf]
    %v347 = vld [vmem:[#allocation5 + $0xa8] sm:$0xff]
    %v348 = vld [vmem:[#allocation5 + $0xb0] sm:$0xf]
    %v349 = vld [vmem:[#allocation5 + $0xb4] sm:$0xff]
    %v350 = vld [vmem:[#allocation5 + $0xbc] sm:$0xf]
    %v383 = vunpack.c.l.b16 %v319
    %v384 = vunpack.c.h.b16 %v319
    %v385 = vunpack.c.l.b16 %v320
    %v386 = vunpack.c.l.b16 %v321
    %v387 = vunpack.c.h.b16 %v321
    %v388 = vunpack.c.l.b16 %v322
    %v389 = vunpack.c.l.b16 %v323
    %v390 = vunpack.c.h.b16 %v323
    %v391 = vunpack.c.l.b16 %v324
    %v392 = vunpack.c.l.b16 %v325
    %v393 = vunpack.c.h.b16 %v325
    %v394 = vunpack.c.l.b16 %v326
    %v395 = vunpack.c.l.b16 %v327
    %v396 = vunpack.c.h.b16 %v327
    %v397 = vunpack.c.l.b16 %v328
    %v398 = vunpack.c.l.b16 %v329
    %v399 = vunpack.c.h.b16 %v329
    %v400 = vunpack.c.l.b16 %v330
    %v401 = vunpack.c.l.b16 %v331
    %v402 = vunpack.c.h.b16 %v331
    %v403 = vunpack.c.l.b16 %v332
    %v404 = vunpack.c.l.b16 %v333
    %v405 = vunpack.c.h.b16 %v333
    %v406 = vunpack.c.l.b16 %v334
    %v407 = vunpack.c.l.b16 %v335
    %v408 = vunpack.c.h.b16 %v335
    %v409 = vunpack.c.l.b16 %v336
    %v410 = vunpack.c.l.b16 %v337
    %v411 = vunpack.c.h.b16 %v337
    %v412 = vunpack.c.l.b16 %v338
    %v413 = vunpack.c.l.b16 %v339
    %v414 = vunpack.c.h.b16 %v339
    %v415 = vunpack.c.l.b16 %v340
    %v416 = vunpack.c.l.b16 %v341
    %v417 = vunpack.c.h.b16 %v341
    %v418 = vunpack.c.l.b16 %v342
    %v419 = vunpack.c.l.b16 %v343
    %v420 = vunpack.c.h.b16 %v343
    %v421 = vunpack.c.l.b16 %v344
    %v422 = vunpack.c.l.b16 %v345
    %v423 = vunpack.c.h.b16 %v345
    %v424 = vunpack.c.l.b16 %v346
    %v425 = vunpack.c.l.b16 %v347
    %v426 = vunpack.c.h.b16 %v347
    %v427 = vunpack.c.l.b16 %v348
    %v428 = vunpack.c.l.b16 %v349
    %v429 = vunpack.c.h.b16 %v349
    %v430 = vunpack.c.l.b16 %v350
    %v431 = vpack.c.b16 %v386, %v383
    %v432 = vpack.c.b16 %v387, %v384
    %v433 = vpack.c.b16 %v388, %v385
    %v434 = vpack.c.b16 %v392, %v389
    %v435 = vpack.c.b16 %v393, %v390
    %v436 = vpack.c.b16 %v394, %v391
    %v437 = vpack.c.b16 %v398, %v395
    %v438 = vpack.c.b16 %v399, %v396
    %v439 = vpack.c.b16 %v400, %v397
    %v440 = vpack.c.b16 %v404, %v401
    %v441 = vpack.c.b16 %v405, %v402
    %v442 = vpack.c.b16 %v406, %v403
    %v443 = vpack.c.b16 %v410, %v407
    %v444 = vpack.c.b16 %v411, %v408
    %v445 = vpack.c.b16 %v412, %v409
    %v446 = vpack.c.b16 %v416, %v413
    %v447 = vpack.c.b16 %v417, %v414
    %v448 = vpack.c.b16 %v418, %v415
    %v449 = vpack.c.b16 %v422, %v419
    %v450 = vpack.c.b16 %v423, %v420
    %v451 = vpack.c.b16 %v424, %v421
    %v452 = vpack.c.b16 %v428, %v425
    %v453 = vpack.c.b16 %v429, %v426
    %v454 = vpack.c.b16 %v430, %v427
    %479 = vmatprep.subr.bf16.mxu0 %v432
    %480 = vmatpush1.bf16.msra.mxu0 %v431
    %481 = vmatprep.subr.bf16.mxu0 %v435
    %482 = vmatpush1.bf16.msra.mxu0 %v434
    %483 = vmatprep.subr.bf16.mxu0 %v438
    %484 = vmatpush1.bf16.msra.mxu0 %v437
    %485 = vmatprep.subr.bf16.mxu0 %v441
    %486 = vmatpush1.bf16.msra.mxu0 %v440
    %487 = vmatprep.subr.bf16.mxu0 %v444
    %488 = vmatpush1.bf16.msra.mxu0 %v443
    %489 = vmatprep.subr.bf16.mxu0 %v447
    %490 = vmatpush1.bf16.msra.mxu0 %v446
    %491 = vmatprep.subr.bf16.mxu0 %v450
    %492 = vmatpush1.bf16.msra.mxu0 %v449
    %493 = vmatprep.subr.bf16.mxu0 %v453
    %494 = vmatpush1.bf16.msra.mxu0 %v452
    %495 = vmatprep.subr.bf16.mxu0 0
    %496 = vmatpush1.bf16.msra.mxu0 0
    %497 = vmatprep.subr.bf16.mxu0 0
    %498 = vmatpush1.bf16.msra.mxu0 0
    %499 = vmatprep.subr.bf16.mxu0 0
    %500 = vmatpush1.bf16.msra.mxu0 0
    %501 = vmatprep.subr.bf16.mxu0 0
    %502 = vmatpush1.bf16.msra.mxu0 0
    %503 = vmatprep.subr.bf16.mxu0 0
    %504 = vmatpush1.bf16.msra.mxu0 0
    %505 = vmatprep.subr.bf16.mxu0 0
    %506 = vmatpush1.bf16.msra.mxu0 0
    %507 = vmatprep.subr.bf16.mxu0 0
    %508 = vmatpush1.bf16.msra.mxu0 0
    %509 = vmatprep.subr.bf16.mxu0 0
    %510 = vmatpush1.bf16.msra.mxu0 0
    %511 = vmatprep.mubr.bf16.mxu0 0
    %512 = vmatmul.mubr.bf16.gmra.mrb[0].mxu0 %v318
    %v513 = vpop.f32.mrb[0].mxu0
    %v514 = vadd.f32 0.0, %v513
    %v515 = vpop.f32.mrb[0].mxu0
    %v516 = vadd.f32 0.0, %v515
    %v517 = vpop.f32.mrb[0].mxu0
    %v518 = vpop.f32.mrb[0].mxu0
    %519 = vdwg.mxu0
    %520 = vmatprep.subr.bf16.mxu0 0
    %521 = vmatpush1.bf16.msra.mxu0 %v433
    %522 = vmatprep.subr.bf16.mxu0 0
    %523 = vmatpush1.bf16.msra.mxu0 %v436
    %524 = vmatprep.subr.bf16.mxu0 0
    %525 = vmatpush1.bf16.msra.mxu0 %v439
    %526 = vmatprep.subr.bf16.mxu0 0
    %527 = vmatpush1.bf16.msra.mxu0 %v442
    %528 = vmatprep.subr.bf16.mxu0 0
    %529 = vmatpush1.bf16.msra.mxu0 %v445
    %530 = vmatprep.subr.bf16.mxu0 0
    %531 = vmatpush1.bf16.msra.mxu0 %v448
    %532 = vmatprep.subr.bf16.mxu0 0
    %533 = vmatpush1.bf16.msra.mxu0 %v451
    %534 = vmatprep.subr.bf16.mxu0 0
    %535 = vmatpush1.bf16.msra.mxu0 %v454
    %536 = vmatprep.subr.bf16.mxu0 0
    %537 = vmatpush1.bf16.msra.mxu0 0
    %538 = vmatprep.subr.bf16.mxu0 0
    %539 = vmatpush1.bf16.msra.mxu0 0
    %540 = vmatprep.subr.bf16.mxu0 0
    %541 = vmatpush1.bf16.msra.mxu0 0
    %542 = vmatprep.subr.bf16.mxu0 0
    %543 = vmatpush1.bf16.msra.mxu0 0
    %544 = vmatprep.subr.bf16.mxu0 0
    %545 = vmatpush1.bf16.msra.mxu0 0
    %546 = vmatprep.subr.bf16.mxu0 0
    %547 = vmatpush1.bf16.msra.mxu0 0
    %548 = vmatprep.subr.bf16.mxu0 0
    %549 = vmatpush1.bf16.msra.mxu0 0
    %550 = vmatprep.subr.bf16.mxu0 0
    %551 = vmatpush1.bf16.msra.mxu0 0
    %552 = vmatprep.mubr.bf16.mxu0 0
    %553 = vmatmul.mubr.bf16.gmra.mrb[0].mxu0 %v318
    %v554 = vpop.f32.mrb[0].mxu0
    %v555 = vadd.f32 0.0, %v554
    %v556 = vpop.f32.mrb[0].mxu0
    %v557 = vpop.f32.mrb[0].mxu0
    %v558 = vpop.f32.mrb[0].mxu0
    %559 = vdwg.mxu0
    %v560 = vadd.f32 %v315, %v514
    %v561 = vxor.u32 %v560, 2147483648
    %v562 = vmul.f32 %v561, 1.442695
    %v563 = vpow.pop %v562
    %v564 = vadd.f32 %v563, 1.0
    %v565 = vrcp.pop %v564
    %v566 = vmul.f32 1.0, %v565
    %v567 = vadd.f32 %v316, %v516
    %v568 = vxor.u32 %v567, 2147483648
    %v569 = vmul.f32 %v568, 1.442695
    %v570 = vpow.pop %v569
    %v571 = vadd.f32 %v570, 1.0
    %v572 = vrcp.pop %v571
    %v573 = vmul.f32 1.0, %v572
    %v574 = vld [vmem:[%s6] sm:$0x1]
    %v576 = vlaneseq
    %v577 = vshrl.u32 %v576, 7
    %v578 = vsub.s32 0, %v577
    %v579 = vrot.slane %v574, %v578
    %v581 = vadd.f32 %v555, %v579
    %v582 = vmul.f32 %v566, %v581
    %v583 = vadd.f32 %v317, %v582
    %v584 = vtanh.pop %v583
    %v585 = vsub.f32 1.0, %v573
    %v586 = vmul.f32 %v585, %v584
    %v587 = vmul.f32 %v573, %v312
    %v588 = vadd.f32 %v586, %v587
    %v589 = vpack.c.bf16 %v588, %v588
    %v590 = vld [vmem:[#allocation7] sm:$0xff]
    %v591 = vld [vmem:[#allocation7 + $0x8] sm:$0xf]
    %v592 = vld [vmem:[#allocation7 + $0xc] sm:$0xff]
    %v593 = vld [vmem:[#allocation7 + $0x14] sm:$0xf]
    %v594 = vld [vmem:[#allocation7 + $0x18] sm:$0xff]
    %v595 = vld [vmem:[#allocation7 + $0x20] sm:$0xf]
    %v596 = vld [vmem:[#allocation7 + $0x24] sm:$0xff]
    %v597 = vld [vmem:[#allocation7 + $0x2c] sm:$0xf]
    %v598 = vld [vmem:[#allocation7 + $0x30] sm:$0xff]
    %v599 = vld [vmem:[#allocation7 + $0x38] sm:$0xf]
    %v600 = vld [vmem:[#allocation7 + $0x3c] sm:$0xff]
    %v601 = vld [vmem:[#allocation7 + $0x44] sm:$0xf]
    %v602 = vld [vmem:[#allocation7 + $0x48] sm:$0xff]
    %v603 = vld [vmem:[#allocation7 + $0x50] sm:$0xf]
    %v604 = vld [vmem:[#allocation7 + $0x54] sm:$0xff]
    %v605 = vld [vmem:[#allocation7 + $0x5c] sm:$0xf]
    %v606 = vld [vmem:[#allocation7 + $0x60] sm:$0xff]
    %v607 = vld [vmem:[#allocation7 + $0x68] sm:$0xf]
    %v608 = vld [vmem:[#allocation7 + $0x6c] sm:$0xff]
    %v609 = vld [vmem:[#allocation7 + $0x74] sm:$0xf]
    %v610 = vld [vmem:[#allocation7 + $0x78] sm:$0xff]
    %v611 = vld [vmem:[#allocation7 + $0x80] sm:$0xf]
    %v612 = vld [vmem:[#allocation7 + $0x84] sm:$0xff]
    %v613 = vld [vmem:[#allocation7 + $0x8c] sm:$0xf]
    %v614 = vld [vmem:[#allocation7 + $0x90] sm:$0xff]
    %v615 = vld [vmem:[#allocation7 + $0x98] sm:$0xf]
    %v616 = vld [vmem:[#allocation7 + $0x9c] sm:$0xff]
    %v617 = vld [vmem:[#allocation7 + $0xa4] sm:$0xf]
    %v618 = vld [vmem:[#allocation7 + $0xa8] sm:$0xff]
    %v619 = vld [vmem:[#allocation7 + $0xb0] sm:$0xf]
    %v620 = vld [vmem:[#allocation7 + $0xb4] sm:$0xff]
    %v621 = vld [vmem:[#allocation7 + $0xbc] sm:$0xf]
    %v622 = vld [vmem:[%s7] sm:$0x7]
    %v624 = vlaneseq
    %v625 = vshrl.u32 %v624, 7
    %v626 = vsub.s32 0, %v625
    %v627 = vrot.slane %v622, %v626
    %v628 = vlaneseq
    %v629 = vshrl.u32 %v628, 7
    %v630 = vsub.s32 1, %v629
    %v631 = vrot.slane %v622, %v630
    %v632 = vlaneseq
    %v633 = vshrl.u32 %v632, 7
    %v634 = vsub.s32 2, %v633
    %v635 = vrot.slane %v622, %v634
    %v671 = vunpack.c.l.b16 %v590
    %v672 = vunpack.c.h.b16 %v590
    %v673 = vunpack.c.l.b16 %v591
    %v674 = vunpack.c.l.b16 %v592
    %v675 = vunpack.c.h.b16 %v592
    %v676 = vunpack.c.l.b16 %v593
    %v677 = vunpack.c.l.b16 %v594
    %v678 = vunpack.c.h.b16 %v594
    %v679 = vunpack.c.l.b16 %v595
    %v680 = vunpack.c.l.b16 %v596
    %v681 = vunpack.c.h.b16 %v596
    %v682 = vunpack.c.l.b16 %v597
    %v683 = vunpack.c.l.b16 %v598
    %v684 = vunpack.c.h.b16 %v598
    %v685 = vunpack.c.l.b16 %v599
    %v686 = vunpack.c.l.b16 %v600
    %v687 = vunpack.c.h.b16 %v600
    %v688 = vunpack.c.l.b16 %v601
    %v689 = vunpack.c.l.b16 %v602
    %v690 = vunpack.c.h.b16 %v602
    %v691 = vunpack.c.l.b16 %v603
    %v692 = vunpack.c.l.b16 %v604
    %v693 = vunpack.c.h.b16 %v604
    %v694 = vunpack.c.l.b16 %v605
    %v695 = vunpack.c.l.b16 %v606
    %v696 = vunpack.c.h.b16 %v606
    %v697 = vunpack.c.l.b16 %v607
    %v698 = vunpack.c.l.b16 %v608
    %v699 = vunpack.c.h.b16 %v608
    %v700 = vunpack.c.l.b16 %v609
    %v701 = vunpack.c.l.b16 %v610
    %v702 = vunpack.c.h.b16 %v610
    %v703 = vunpack.c.l.b16 %v611
    %v704 = vunpack.c.l.b16 %v612
    %v705 = vunpack.c.h.b16 %v612
    %v706 = vunpack.c.l.b16 %v613
    %v707 = vunpack.c.l.b16 %v614
    %v708 = vunpack.c.h.b16 %v614
    %v709 = vunpack.c.l.b16 %v615
    %v710 = vunpack.c.l.b16 %v616
    %v711 = vunpack.c.h.b16 %v616
    %v712 = vunpack.c.l.b16 %v617
    %v713 = vunpack.c.l.b16 %v618
    %v714 = vunpack.c.h.b16 %v618
    %v715 = vunpack.c.l.b16 %v619
    %v716 = vunpack.c.l.b16 %v620
    %v717 = vunpack.c.h.b16 %v620
    %v718 = vunpack.c.l.b16 %v621
    %v719 = vpack.c.b16 %v674, %v671
    %v720 = vpack.c.b16 %v675, %v672
    %v721 = vpack.c.b16 %v676, %v673
    %v722 = vpack.c.b16 %v680, %v677
    %v723 = vpack.c.b16 %v681, %v678
    %v724 = vpack.c.b16 %v682, %v679
    %v725 = vpack.c.b16 %v686, %v683
    %v726 = vpack.c.b16 %v687, %v684
    %v727 = vpack.c.b16 %v688, %v685
    %v728 = vpack.c.b16 %v692, %v689
    %v729 = vpack.c.b16 %v693, %v690
    %v730 = vpack.c.b16 %v694, %v691
    %v731 = vpack.c.b16 %v698, %v695
    %v732 = vpack.c.b16 %v699, %v696
    %v733 = vpack.c.b16 %v700, %v697
    %v734 = vpack.c.b16 %v704, %v701
    %v735 = vpack.c.b16 %v705, %v702
    %v736 = vpack.c.b16 %v706, %v703
    %v737 = vpack.c.b16 %v710, %v707
    %v738 = vpack.c.b16 %v711, %v708
    %v739 = vpack.c.b16 %v712, %v709
    %v740 = vpack.c.b16 %v716, %v713
    %v741 = vpack.c.b16 %v717, %v714
    %v742 = vpack.c.b16 %v718, %v715
    %767 = vmatprep.subr.bf16.mxu0 %v720
    %768 = vmatpush1.bf16.msra.mxu0 %v719
    %769 = vmatprep.subr.bf16.mxu0 %v723
    %770 = vmatpush1.bf16.msra.mxu0 %v722
    %771 = vmatprep.subr.bf16.mxu0 %v726
    %772 = vmatpush1.bf16.msra.mxu0 %v725
    %773 = vmatprep.subr.bf16.mxu0 %v729
    %774 = vmatpush1.bf16.msra.mxu0 %v728
    %775 = vmatprep.subr.bf16.mxu0 %v732
    %776 = vmatpush1.bf16.msra.mxu0 %v731
    %777 = vmatprep.subr.bf16.mxu0 %v735
    %778 = vmatpush1.bf16.msra.mxu0 %v734
    %779 = vmatprep.subr.bf16.mxu0 %v738
    %780 = vmatpush1.bf16.msra.mxu0 %v737
    %781 = vmatprep.subr.bf16.mxu0 %v741
    %782 = vmatpush1.bf16.msra.mxu0 %v740
    %783 = vmatprep.subr.bf16.mxu0 0
    %784 = vmatpush1.bf16.msra.mxu0 0
    %785 = vmatprep.subr.bf16.mxu0 0
    %786 = vmatpush1.bf16.msra.mxu0 0
    %787 = vmatprep.subr.bf16.mxu0 0
    %788 = vmatpush1.bf16.msra.mxu0 0
    %789 = vmatprep.subr.bf16.mxu0 0
    %790 = vmatpush1.bf16.msra.mxu0 0
    %791 = vmatprep.subr.bf16.mxu0 0
    %792 = vmatpush1.bf16.msra.mxu0 0
    %793 = vmatprep.subr.bf16.mxu0 0
    %794 = vmatpush1.bf16.msra.mxu0 0
    %795 = vmatprep.subr.bf16.mxu0 0
    %796 = vmatpush1.bf16.msra.mxu0 0
    %797 = vmatprep.subr.bf16.mxu0 0
    %798 = vmatpush1.bf16.msra.mxu0 0
    %799 = vmatprep.mubr.bf16.mxu0 0
    %800 = vmatmul.mubr.bf16.gmra.mrb[0].mxu0 %v589
    %v801 = vpop.f32.mrb[0].mxu0
    %v802 = vadd.f32 %v627, %v801
    %v803 = vpop.f32.mrb[0].mxu0
    %v804 = vadd.f32 %v631, %v803
    %v805 = vpop.f32.mrb[0].mxu0
    %v806 = vpop.f32.mrb[0].mxu0
    %807 = vdwg.mxu0
    %808 = vmatprep.subr.bf16.mxu0 0
    %809 = vmatpush1.bf16.msra.mxu0 %v721
    %810 = vmatprep.subr.bf16.mxu0 0
    %811 = vmatpush1.bf16.msra.mxu0 %v724
    %812 = vmatprep.subr.bf16.mxu0 0
    %813 = vmatpush1.bf16.msra.mxu0 %v727
    %814 = vmatprep.subr.bf16.mxu0 0
    %815 = vmatpush1.bf16.msra.mxu0 %v730
    %816 = vmatprep.subr.bf16.mxu0 0
    %817 = vmatpush1.bf16.msra.mxu0 %v733
    %818 = vmatprep.subr.bf16.mxu0 0
    %819 = vmatpush1.bf16.msra.mxu0 %v736
    %820 = vmatprep.subr.bf16.mxu0 0
    %821 = vmatpush1.bf16.msra.mxu0 %v739
    %822 = vmatprep.subr.bf16.mxu0 0
    %823 = vmatpush1.bf16.msra.mxu0 %v742
    %824 = vmatprep.subr.bf16.mxu0 0
    %825 = vmatpush1.bf16.msra.mxu0 0
    %826 = vmatprep.subr.bf16.mxu0 0
    %827 = vmatpush1.bf16.msra.mxu0 0
    %828 = vmatprep.subr.bf16.mxu0 0
    %829 = vmatpush1.bf16.msra.mxu0 0
    %830 = vmatprep.subr.bf16.mxu0 0
    %831 = vmatpush1.bf16.msra.mxu0 0
    %832 = vmatprep.subr.bf16.mxu0 0
    %833 = vmatpush1.bf16.msra.mxu0 0
    %834 = vmatprep.subr.bf16.mxu0 0
    %835 = vmatpush1.bf16.msra.mxu0 0
    %836 = vmatprep.subr.bf16.mxu0 0
    %837 = vmatpush1.bf16.msra.mxu0 0
    %838 = vmatprep.subr.bf16.mxu0 0
    %839 = vmatpush1.bf16.msra.mxu0 0
    %840 = vmatprep.mubr.bf16.mxu0 0
    %841 = vmatmul.mubr.bf16.gmra.mrb[0].mxu0 %v589
    %v842 = vpop.f32.mrb[0].mxu0
    %v843 = vadd.f32 %v635, %v842
    %v844 = vpop.f32.mrb[0].mxu0
    %v845 = vpop.f32.mrb[0].mxu0
    %v846 = vpop.f32.mrb[0].mxu0
    %847 = vdwg.mxu0
    %v848 = vpack.c.bf16 %v314, %v314
    %v849 = vld [vmem:[#allocation9] sm:$0xff]
    %v850 = vld [vmem:[#allocation9 + $0x8] sm:$0xf]
    %v851 = vld [vmem:[#allocation9 + $0xc] sm:$0xff]
    %v852 = vld [vmem:[#allocation9 + $0x14] sm:$0xf]
    %v853 = vld [vmem:[#allocation9 + $0x18] sm:$0xff]
    %v854 = vld [vmem:[#allocation9 + $0x20] sm:$0xf]
    %v855 = vld [vmem:[#allocation9 + $0x24] sm:$0xff]
    %v856 = vld [vmem:[#allocation9 + $0x2c] sm:$0xf]
    %v857 = vld [vmem:[#allocation9 + $0x30] sm:$0xff]
    %v858 = vld [vmem:[#allocation9 + $0x38] sm:$0xf]
    %v859 = vld [vmem:[#allocation9 + $0x3c] sm:$0xff]
    %v860 = vld [vmem:[#allocation9 + $0x44] sm:$0xf]
    %v861 = vld [vmem:[#allocation9 + $0x48] sm:$0xff]
    %v862 = vld [vmem:[#allocation9 + $0x50] sm:$0xf]
    %v863 = vld [vmem:[#allocation9 + $0x54] sm:$0xff]
    %v864 = vld [vmem:[#allocation9 + $0x5c] sm:$0xf]
    %v865 = vld [vmem:[#allocation9 + $0x60] sm:$0xff]
    %v866 = vld [vmem:[#allocation9 + $0x68] sm:$0xf]
    %v867 = vld [vmem:[#allocation9 + $0x6c] sm:$0xff]
    %v868 = vld [vmem:[#allocation9 + $0x74] sm:$0xf]
    %v869 = vld [vmem:[#allocation9 + $0x78] sm:$0xff]
    %v870 = vld [vmem:[#allocation9 + $0x80] sm:$0xf]
    %v871 = vld [vmem:[#allocation9 + $0x84] sm:$0xff]
    %v872 = vld [vmem:[#allocation9 + $0x8c] sm:$0xf]
    %v873 = vld [vmem:[#allocation9 + $0x90] sm:$0xff]
    %v874 = vld [vmem:[#allocation9 + $0x98] sm:$0xf]
    %v875 = vld [vmem:[#allocation9 + $0x9c] sm:$0xff]
    %v876 = vld [vmem:[#allocation9 + $0xa4] sm:$0xf]
    %v877 = vld [vmem:[#allocation9 + $0xa8] sm:$0xff]
    %v878 = vld [vmem:[#allocation9 + $0xb0] sm:$0xf]
    %v879 = vld [vmem:[#allocation9 + $0xb4] sm:$0xff]
    %v880 = vld [vmem:[#allocation9 + $0xbc] sm:$0xf]
    %v913 = vunpack.c.l.b16 %v849
    %v914 = vunpack.c.h.b16 %v849
    %v915 = vunpack.c.l.b16 %v850
    %v916 = vunpack.c.l.b16 %v851
    %v917 = vunpack.c.h.b16 %v851
    %v918 = vunpack.c.l.b16 %v852
    %v919 = vunpack.c.l.b16 %v853
    %v920 = vunpack.c.h.b16 %v853
    %v921 = vunpack.c.l.b16 %v854
    %v922 = vunpack.c.l.b16 %v855
    %v923 = vunpack.c.h.b16 %v855
    %v924 = vunpack.c.l.b16 %v856
    %v925 = vunpack.c.l.b16 %v857
    %v926 = vunpack.c.h.b16 %v857
    %v927 = vunpack.c.l.b16 %v858
    %v928 = vunpack.c.l.b16 %v859
    %v929 = vunpack.c.h.b16 %v859
    %v930 = vunpack.c.l.b16 %v860
    %v931 = vunpack.c.l.b16 %v861
    %v932 = vunpack.c.h.b16 %v861
    %v933 = vunpack.c.l.b16 %v862
    %v934 = vunpack.c.l.b16 %v863
    %v935 = vunpack.c.h.b16 %v863
    %v936 = vunpack.c.l.b16 %v864
    %v937 = vunpack.c.l.b16 %v865
    %v938 = vunpack.c.h.b16 %v865
    %v939 = vunpack.c.l.b16 %v866
    %v940 = vunpack.c.l.b16 %v867
    %v941 = vunpack.c.h.b16 %v867
    %v942 = vunpack.c.l.b16 %v868
    %v943 = vunpack.c.l.b16 %v869
    %v944 = vunpack.c.h.b16 %v869
    %v945 = vunpack.c.l.b16 %v870
    %v946 = vunpack.c.l.b16 %v871
    %v947 = vunpack.c.h.b16 %v871
    %v948 = vunpack.c.l.b16 %v872
    %v949 = vunpack.c.l.b16 %v873
    %v950 = vunpack.c.h.b16 %v873
    %v951 = vunpack.c.l.b16 %v874
    %v952 = vunpack.c.l.b16 %v875
    %v953 = vunpack.c.h.b16 %v875
    %v954 = vunpack.c.l.b16 %v876
    %v955 = vunpack.c.l.b16 %v877
    %v956 = vunpack.c.h.b16 %v877
    %v957 = vunpack.c.l.b16 %v878
    %v958 = vunpack.c.l.b16 %v879
    %v959 = vunpack.c.h.b16 %v879
    %v960 = vunpack.c.l.b16 %v880
    %v961 = vpack.c.b16 %v916, %v913
    %v962 = vpack.c.b16 %v917, %v914
    %v963 = vpack.c.b16 %v918, %v915
    %v964 = vpack.c.b16 %v922, %v919
    %v965 = vpack.c.b16 %v923, %v920
    %v966 = vpack.c.b16 %v924, %v921
    %v967 = vpack.c.b16 %v928, %v925
    %v968 = vpack.c.b16 %v929, %v926
    %v969 = vpack.c.b16 %v930, %v927
    %v970 = vpack.c.b16 %v934, %v931
    %v971 = vpack.c.b16 %v935, %v932
    %v972 = vpack.c.b16 %v936, %v933
    %v973 = vpack.c.b16 %v940, %v937
    %v974 = vpack.c.b16 %v941, %v938
    %v975 = vpack.c.b16 %v942, %v939
    %v976 = vpack.c.b16 %v946, %v943
    %v977 = vpack.c.b16 %v947, %v944
    %v978 = vpack.c.b16 %v948, %v945
    %v979 = vpack.c.b16 %v952, %v949
    %v980 = vpack.c.b16 %v953, %v950
    %v981 = vpack.c.b16 %v954, %v951
    %v982 = vpack.c.b16 %v958, %v955
    %v983 = vpack.c.b16 %v959, %v956
    %v984 = vpack.c.b16 %v960, %v957
    %1009 = vmatprep.subr.bf16.mxu0 %v962
    %1010 = vmatpush1.bf16.msra.mxu0 %v961
    %1011 = vmatprep.subr.bf16.mxu0 %v965
    %1012 = vmatpush1.bf16.msra.mxu0 %v964
    %1013 = vmatprep.subr.bf16.mxu0 %v968
    %1014 = vmatpush1.bf16.msra.mxu0 %v967
    %1015 = vmatprep.subr.bf16.mxu0 %v971
    %1016 = vmatpush1.bf16.msra.mxu0 %v970
    %1017 = vmatprep.subr.bf16.mxu0 %v974
    %1018 = vmatpush1.bf16.msra.mxu0 %v973
    %1019 = vmatprep.subr.bf16.mxu0 %v977
    %1020 = vmatpush1.bf16.msra.mxu0 %v976
    %1021 = vmatprep.subr.bf16.mxu0 %v980
    %1022 = vmatpush1.bf16.msra.mxu0 %v979
    %1023 = vmatprep.subr.bf16.mxu0 %v983
    %1024 = vmatpush1.bf16.msra.mxu0 %v982
    %1025 = vmatprep.subr.bf16.mxu0 0
    %1026 = vmatpush1.bf16.msra.mxu0 0
    %1027 = vmatprep.subr.bf16.mxu0 0
    %1028 = vmatpush1.bf16.msra.mxu0 0
    %1029 = vmatprep.subr.bf16.mxu0 0
    %1030 = vmatpush1.bf16.msra.mxu0 0
    %1031 = vmatprep.subr.bf16.mxu0 0
    %1032 = vmatpush1.bf16.msra.mxu0 0
    %1033 = vmatprep.subr.bf16.mxu0 0
    %1034 = vmatpush1.bf16.msra.mxu0 0
    %1035 = vmatprep.subr.bf16.mxu0 0
    %1036 = vmatpush1.bf16.msra.mxu0 0
    %1037 = vmatprep.subr.bf16.mxu0 0
    %1038 = vmatpush1.bf16.msra.mxu0 0
    %1039 = vmatprep.subr.bf16.mxu0 0
    %1040 = vmatpush1.bf16.msra.mxu0 0
    %1041 = vmatprep.mubr.bf16.mxu0 0
    %1042 = vmatmul.mubr.bf16.gmra.mrb[0].mxu0 %v848
    %v1043 = vpop.f32.mrb[0].mxu0
    %v1044 = vadd.f32 0.0, %v1043
    %v1045 = vpop.f32.mrb[0].mxu0
    %v1046 = vadd.f32 0.0, %v1045
    %v1047 = vpop.f32.mrb[0].mxu0
    %v1048 = vpop.f32.mrb[0].mxu0
    %1049 = vdwg.mxu0
    %1050 = vmatprep.subr.bf16.mxu0 0
    %1051 = vmatpush1.bf16.msra.mxu0 %v963
    %1052 = vmatprep.subr.bf16.mxu0 0
    %1053 = vmatpush1.bf16.msra.mxu0 %v966
    %1054 = vmatprep.subr.bf16.mxu0 0
    %1055 = vmatpush1.bf16.msra.mxu0 %v969
    %1056 = vmatprep.subr.bf16.mxu0 0
    %1057 = vmatpush1.bf16.msra.mxu0 %v972
    %1058 = vmatprep.subr.bf16.mxu0 0
    %1059 = vmatpush1.bf16.msra.mxu0 %v975
    %1060 = vmatprep.subr.bf16.mxu0 0
    %1061 = vmatpush1.bf16.msra.mxu0 %v978
    %1062 = vmatprep.subr.bf16.mxu0 0
    %1063 = vmatpush1.bf16.msra.mxu0 %v981
    %1064 = vmatprep.subr.bf16.mxu0 0
    %1065 = vmatpush1.bf16.msra.mxu0 %v984
    %1066 = vmatprep.subr.bf16.mxu0 0
    %1067 = vmatpush1.bf16.msra.mxu0 0
    %1068 = vmatprep.subr.bf16.mxu0 0
    %1069 = vmatpush1.bf16.msra.mxu0 0
    %1070 = vmatprep.subr.bf16.mxu0 0
    %1071 = vmatpush1.bf16.msra.mxu0 0
    %1072 = vmatprep.subr.bf16.mxu0 0
    %1073 = vmatpush1.bf16.msra.mxu0 0
    %1074 = vmatprep.subr.bf16.mxu0 0
    %1075 = vmatpush1.bf16.msra.mxu0 0
    %1076 = vmatprep.subr.bf16.mxu0 0
    %1077 = vmatpush1.bf16.msra.mxu0 0
    %1078 = vmatprep.subr.bf16.mxu0 0
    %1079 = vmatpush1.bf16.msra.mxu0 0
    %1080 = vmatprep.subr.bf16.mxu0 0
    %1081 = vmatpush1.bf16.msra.mxu0 0
    %1082 = vmatprep.mubr.bf16.mxu0 0
    %1083 = vmatmul.mubr.bf16.gmra.mrb[0].mxu0 %v848
    %v1084 = vpop.f32.mrb[0].mxu0
    %v1085 = vadd.f32 0.0, %v1084
    %v1086 = vpop.f32.mrb[0].mxu0
    %v1087 = vpop.f32.mrb[0].mxu0
    %v1088 = vpop.f32.mrb[0].mxu0
    %1089 = vdwg.mxu0
    %v1090 = vadd.f32 %v802, %v1044
    %v1091 = vxor.u32 %v1090, 2147483648
    %v1092 = vmul.f32 %v1091, 1.442695
    %v1093 = vpow.pop %v1092
    %v1094 = vadd.f32 %v1093, 1.0
    %v1095 = vrcp.pop %v1094
    %v1096 = vmul.f32 1.0, %v1095
    %v1097 = vadd.f32 %v804, %v1046
    %v1098 = vxor.u32 %v1097, 2147483648
    %v1099 = vmul.f32 %v1098, 1.442695
    %v1100 = vpow.pop %v1099
    %v1101 = vadd.f32 %v1100, 1.0
    %v1102 = vrcp.pop %v1101
    %v1103 = vmul.f32 1.0, %v1102
    %v1104 = vld [vmem:[%s8] sm:$0x1]
    %v1106 = vlaneseq
    %v1107 = vshrl.u32 %v1106, 7
    %v1108 = vsub.s32 0, %v1107
    %v1109 = vrot.slane %v1104, %v1108
    %v1111 = vadd.f32 %v1085, %v1109
    %v1112 = vmul.f32 %v1096, %v1111
    %v1113 = vadd.f32 %v843, %v1112
    %v1114 = vtanh.pop %v1113
    %v1115 = vsub.f32 1.0, %v1103
    %v1116 = vmul.f32 %v1115, %v1114
    %v1117 = vmul.f32 %v1103, %v314
    %v1118 = vadd.f32 %v1116, %v1117
    %s1119 = scalar_lea.vmem [#allocation2], 24
    %v1120 = vld [vmem:[%s1119] sm:$0xff]
    %v1121 = vld [vmem:[%s1119 + $0x8] sm:$0xff]
    %v1122 = vld [vmem:[%s1119 + $0x10] sm:$0xff]
    %1123 = vmatprep.subr.bf16.mxu0 %v432
    %1124 = vmatpush1.bf16.msra.mxu0 %v431
    %1125 = vmatprep.subr.bf16.mxu0 %v435
    %1126 = vmatpush1.bf16.msra.mxu0 %v434
    %1127 = vmatprep.subr.bf16.mxu0 %v438
    %1128 = vmatpush1.bf16.msra.mxu0 %v437
    %1129 = vmatprep.subr.bf16.mxu0 %v441
    %1130 = vmatpush1.bf16.msra.mxu0 %v440
    %1131 = vmatprep.subr.bf16.mxu0 %v444
    %1132 = vmatpush1.bf16.msra.mxu0 %v443
    %1133 = vmatprep.subr.bf16.mxu0 %v447
    %1134 = vmatpush1.bf16.msra.mxu0 %v446
    %1135 = vmatprep.subr.bf16.mxu0 %v450
    %1136 = vmatpush1.bf16.msra.mxu0 %v449
    %1137 = vmatprep.subr.bf16.mxu0 %v453
    %1138 = vmatpush1.bf16.msra.mxu0 %v452
    %1139 = vmatprep.subr.bf16.mxu0 0
    %1140 = vmatpush1.bf16.msra.mxu0 0
    %1141 = vmatprep.subr.bf16.mxu0 0
    %1142 = vmatpush1.bf16.msra.mxu0 0
    %1143 = vmatprep.subr.bf16.mxu0 0
    %1144 = vmatpush1.bf16.msra.mxu0 0
    %1145 = vmatprep.subr.bf16.mxu0 0
    %1146 = vmatpush1.bf16.msra.mxu0 0
    %1147 = vmatprep.subr.bf16.mxu0 0
    %1148 = vmatpush1.bf16.msra.mxu0 0
    %1149 = vmatprep.subr.bf16.mxu0 0
    %1150 = vmatpush1.bf16.msra.mxu0 0
    %1151 = vmatprep.subr.bf16.mxu0 0
    %1152 = vmatpush1.bf16.msra.mxu0 0
    %1153 = vmatprep.subr.bf16.mxu0 0
    %1154 = vmatpush1.bf16.msra.mxu0 0
    %1155 = vmatprep.mubr.bf16.mxu0 0
    %1156 = vmatmul.mubr.bf16.gmra.mrb[0].mxu0 %v589
    %v1157 = vpop.f32.mrb[0].mxu0
    %v1158 = vadd.f32 0.0, %v1157
    %v1159 = vpop.f32.mrb[0].mxu0
    %v1160 = vadd.f32 0.0, %v1159
    %v1161 = vpop.f32.mrb[0].mxu0
    %v1162 = vpop.f32.mrb[0].mxu0
    %1163 = vdwg.mxu0
    %1164 = vmatprep.subr.bf16.mxu0 0
    %1165 = vmatpush1.bf16.msra.mxu0 %v433
    %1166 = vmatprep.subr.bf16.mxu0 0
    %1167 = vmatpush1.bf16.msra.mxu0 %v436
    %1168 = vmatprep.subr.bf16.mxu0 0
    %1169 = vmatpush1.bf16.msra.mxu0 %v439
    %1170 = vmatprep.subr.bf16.mxu0 0
    %1171 = vmatpush1.bf16.msra.mxu0 %v442
    %1172 = vmatprep.subr.bf16.mxu0 0
    %1173 = vmatpush1.bf16.msra.mxu0 %v445
    %1174 = vmatprep.subr.bf16.mxu0 0
    %1175 = vmatpush1.bf16.msra.mxu0 %v448
    %1176 = vmatprep.subr.bf16.mxu0 0
    %1177 = vmatpush1.bf16.msra.mxu0 %v451
    %1178 = vmatprep.subr.bf16.mxu0 0
    %1179 = vmatpush1.bf16.msra.mxu0 %v454
    %1180 = vmatprep.subr.bf16.mxu0 0
    %1181 = vmatpush1.bf16.msra.mxu0 0
    %1182 = vmatprep.subr.bf16.mxu0 0
    %1183 = vmatpush1.bf16.msra.mxu0 0
    %1184 = vmatprep.subr.bf16.mxu0 0
    %1185 = vmatpush1.bf16.msra.mxu0 0
    %1186 = vmatprep.subr.bf16.mxu0 0
    %1187 = vmatpush1.bf16.msra.mxu0 0
    %1188 = vmatprep.subr.bf16.mxu0 0
    %1189 = vmatpush1.bf16.msra.mxu0 0
    %1190 = vmatprep.subr.bf16.mxu0 0
    %1191 = vmatpush1.bf16.msra.mxu0 0
    %1192 = vmatprep.subr.bf16.mxu0 0
    %1193 = vmatpush1.bf16.msra.mxu0 0
    %1194 = vmatprep.subr.bf16.mxu0 0
    %1195 = vmatpush1.bf16.msra.mxu0 0
    %1196 = vmatprep.mubr.bf16.mxu0 0
    %1197 = vmatmul.mubr.bf16.gmra.mrb[0].mxu0 %v589
    %v1198 = vpop.f32.mrb[0].mxu0
    %v1199 = vadd.f32 0.0, %v1198
    %v1200 = vpop.f32.mrb[0].mxu0
    %v1201 = vpop.f32.mrb[0].mxu0
    %v1202 = vpop.f32.mrb[0].mxu0
    %1203 = vdwg.mxu0
    %v1204 = vadd.f32 %v1120, %v1158
    %v1205 = vxor.u32 %v1204, 2147483648
    %v1206 = vmul.f32 %v1205, 1.442695
    %v1207 = vpow.pop %v1206
    %v1208 = vadd.f32 %v1207, 1.0
    %v1209 = vrcp.pop %v1208
    %v1210 = vmul.f32 1.0, %v1209
    %v1211 = vadd.f32 %v1121, %v1160
    %v1212 = vxor.u32 %v1211, 2147483648
    %v1213 = vmul.f32 %v1212, 1.442695
    %v1214 = vpow.pop %v1213
    %v1215 = vadd.f32 %v1214, 1.0
    %v1216 = vrcp.pop %v1215
    %v1217 = vmul.f32 1.0, %v1216
    %v1218 = vadd.f32 %v1199, %v579
    %v1219 = vmul.f32 %v1210, %v1218
    %v1220 = vadd.f32 %v1122, %v1219
    %v1221 = vtanh.pop %v1220
    %v1222 = vsub.f32 1.0, %v1217
    %v1223 = vmul.f32 %v1222, %v1221
    %v1224 = vmul.f32 %v1217, %v588
    %v1225 = vadd.f32 %v1223, %v1224
    %v1226 = vpack.c.bf16 %v1225, %v1225
    %1227 = vmatprep.subr.bf16.mxu0 %v720
    %1228 = vmatpush1.bf16.msra.mxu0 %v719
    %1229 = vmatprep.subr.bf16.mxu0 %v723
    %1230 = vmatpush1.bf16.msra.mxu0 %v722
    %1231 = vmatprep.subr.bf16.mxu0 %v726
    %1232 = vmatpush1.bf16.msra.mxu0 %v725
    %1233 = vmatprep.subr.bf16.mxu0 %v729
    %1234 = vmatpush1.bf16.msra.mxu0 %v728
    %1235 = vmatprep.subr.bf16.mxu0 %v732
    %1236 = vmatpush1.bf16.msra.mxu0 %v731
    %1237 = vmatprep.subr.bf16.mxu0 %v735
    %1238 = vmatpush1.bf16.msra.mxu0 %v734
    %1239 = vmatprep.subr.bf16.mxu0 %v738
    %1240 = vmatpush1.bf16.msra.mxu0 %v737
    %1241 = vmatprep.subr.bf16.mxu0 %v741
    %1242 = vmatpush1.bf16.msra.mxu0 %v740
    %1243 = vmatprep.subr.bf16.mxu0 0
    %1244 = vmatpush1.bf16.msra.mxu0 0
    %1245 = vmatprep.subr.bf16.mxu0 0
    %1246 = vmatpush1.bf16.msra.mxu0 0
    %1247 = vmatprep.subr.bf16.mxu0 0
    %1248 = vmatpush1.bf16.msra.mxu0 0
    %1249 = vmatprep.subr.bf16.mxu0 0
    %1250 = vmatpush1.bf16.msra.mxu0 0
    %1251 = vmatprep.subr.bf16.mxu0 0
    %1252 = vmatpush1.bf16.msra.mxu0 0
    %1253 = vmatprep.subr.bf16.mxu0 0
    %1254 = vmatpush1.bf16.msra.mxu0 0
    %1255 = vmatprep.subr.bf16.mxu0 0
    %1256 = vmatpush1.bf16.msra.mxu0 0
    %1257 = vmatprep.subr.bf16.mxu0 0
    %1258 = vmatpush1.bf16.msra.mxu0 0
    %1259 = vmatprep.mubr.bf16.mxu0 0
    %1260 = vmatmul.mubr.bf16.gmra.mrb[0].mxu0 %v1226
    %v1261 = vpop.f32.mrb[0].mxu0
    %v1262 = vadd.f32 %v627, %v1261
    %v1263 = vpop.f32.mrb[0].mxu0
    %v1264 = vadd.f32 %v631, %v1263
    %v1265 = vpop.f32.mrb[0].mxu0
    %v1266 = vpop.f32.mrb[0].mxu0
    %1267 = vdwg.mxu0
    %1268 = vmatprep.subr.bf16.mxu0 0
    %1269 = vmatpush1.bf16.msra.mxu0 %v721
    %1270 = vmatprep.subr.bf16.mxu0 0
    %1271 = vmatpush1.bf16.msra.mxu0 %v724
    %1272 = vmatprep.subr.bf16.mxu0 0
    %1273 = vmatpush1.bf16.msra.mxu0 %v727
    %1274 = vmatprep.subr.bf16.mxu0 0
    %1275 = vmatpush1.bf16.msra.mxu0 %v730
    %1276 = vmatprep.subr.bf16.mxu0 0
    %1277 = vmatpush1.bf16.msra.mxu0 %v733
    %1278 = vmatprep.subr.bf16.mxu0 0
    %1279 = vmatpush1.bf16.msra.mxu0 %v736
    %1280 = vmatprep.subr.bf16.mxu0 0
    %1281 = vmatpush1.bf16.msra.mxu0 %v739
    %1282 = vmatprep.subr.bf16.mxu0 0
    %1283 = vmatpush1.bf16.msra.mxu0 %v742
    %1284 = vmatprep.subr.bf16.mxu0 0
    %1285 = vmatpush1.bf16.msra.mxu0 0
    %1286 = vmatprep.subr.bf16.mxu0 0
    %1287 = vmatpush1.bf16.msra.mxu0 0
    %1288 = vmatprep.subr.bf16.mxu0 0
    %1289 = vmatpush1.bf16.msra.mxu0 0
    %1290 = vmatprep.subr.bf16.mxu0 0
    %1291 = vmatpush1.bf16.msra.mxu0 0
    %1292 = vmatprep.subr.bf16.mxu0 0
    %1293 = vmatpush1.bf16.msra.mxu0 0
    %1294 = vmatprep.subr.bf16.mxu0 0
    %1295 = vmatpush1.bf16.msra.mxu0 0
    %1296 = vmatprep.subr.bf16.mxu0 0
    %1297 = vmatpush1.bf16.msra.mxu0 0
    %1298 = vmatprep.subr.bf16.mxu0 0
    %1299 = vmatpush1.bf16.msra.mxu0 0
    %1300 = vmatprep.mubr.bf16.mxu0 0
    %1301 = vmatmul.mubr.bf16.gmra.mrb[0].mxu0 %v1226
    %v1302 = vpop.f32.mrb[0].mxu0
    %v1303 = vadd.f32 %v635, %v1302
    %v1304 = vpop.f32.mrb[0].mxu0
    %v1305 = vpop.f32.mrb[0].mxu0
    %v1306 = vpop.f32.mrb[0].mxu0
    %1307 = vdwg.mxu0
    %v1308 = vpack.c.bf16 %v1118, %v1118
    %1309 = vmatprep.subr.bf16.mxu0 %v962
    %1310 = vmatpush1.bf16.msra.mxu0 %v961
    %1311 = vmatprep.subr.bf16.mxu0 %v965
    %1312 = vmatpush1.bf16.msra.mxu0 %v964
    %1313 = vmatprep.subr.bf16.mxu0 %v968
    %1314 = vmatpush1.bf16.msra.mxu0 %v967
    %1315 = vmatprep.subr.bf16.mxu0 %v971
    %1316 = vmatpush1.bf16.msra.mxu0 %v970
    %1317 = vmatprep.subr.bf16.mxu0 %v974
    %1318 = vmatpush1.bf16.msra.mxu0 %v973
    %1319 = vmatprep.subr.bf16.mxu0 %v977
    %1320 = vmatpush1.bf16.msra.mxu0 %v976
    %1321 = vmatprep.subr.bf16.mxu0 %v980
    %1322 = vmatpush1.bf16.msra.mxu0 %v979
    %1323 = vmatprep.subr.bf16.mxu0 %v983
    %1324 = vmatpush1.bf16.msra.mxu0 %v982
    %1325 = vmatprep.subr.bf16.mxu0 0
    %1326 = vmatpush1.bf16.msra.mxu0 0
    %1327 = vmatprep.subr.bf16.mxu0 0
    %1328 = vmatpush1.bf16.msra.mxu0 0
    %1329 = vmatprep.subr.bf16.mxu0 0
    %1330 = vmatpush1.bf16.msra.mxu0 0
    %1331 = vmatprep.subr.bf16.mxu0 0
    %1332 = vmatpush1.bf16.msra.mxu0 0
    %1333 = vmatprep.subr.bf16.mxu0 0
    %1334 = vmatpush1.bf16.msra.mxu0 0
    %1335 = vmatprep.subr.bf16.mxu0 0
    %1336 = vmatpush1.bf16.msra.mxu0 0
    %1337 = vmatprep.subr.bf16.mxu0 0
    %1338 = vmatpush1.bf16.msra.mxu0 0
    %1339 = vmatprep.subr.bf16.mxu0 0
    %1340 = vmatpush1.bf16.msra.mxu0 0
    %1341 = vmatprep.mubr.bf16.mxu0 0
    %1342 = vmatmul.mubr.bf16.gmra.mrb[0].mxu0 %v1308
    %v1343 = vpop.f32.mrb[0].mxu0
    %v1344 = vadd.f32 0.0, %v1343
    %v1345 = vpop.f32.mrb[0].mxu0
    %v1346 = vadd.f32 0.0, %v1345
    %v1347 = vpop.f32.mrb[0].mxu0
    %v1348 = vpop.f32.mrb[0].mxu0
    %1349 = vdwg.mxu0
    %1350 = vmatprep.subr.bf16.mxu0 0
    %1351 = vmatpush1.bf16.msra.mxu0 %v963
    %1352 = vmatprep.subr.bf16.mxu0 0
    %1353 = vmatpush1.bf16.msra.mxu0 %v966
    %1354 = vmatprep.subr.bf16.mxu0 0
    %1355 = vmatpush1.bf16.msra.mxu0 %v969
    %1356 = vmatprep.subr.bf16.mxu0 0
    %1357 = vmatpush1.bf16.msra.mxu0 %v972
    %1358 = vmatprep.subr.bf16.mxu0 0
    %1359 = vmatpush1.bf16.msra.mxu0 %v975
    %1360 = vmatprep.subr.bf16.mxu0 0
    %1361 = vmatpush1.bf16.msra.mxu0 %v978
    %1362 = vmatprep.subr.bf16.mxu0 0
    %1363 = vmatpush1.bf16.msra.mxu0 %v981
    %1364 = vmatprep.subr.bf16.mxu0 0
    %1365 = vmatpush1.bf16.msra.mxu0 %v984
    %1366 = vmatprep.subr.bf16.mxu0 0
    %1367 = vmatpush1.bf16.msra.mxu0 0
    %1368 = vmatprep.subr.bf16.mxu0 0
    %1369 = vmatpush1.bf16.msra.mxu0 0
    %1370 = vmatprep.subr.bf16.mxu0 0
    %1371 = vmatpush1.bf16.msra.mxu0 0
    %1372 = vmatprep.subr.bf16.mxu0 0
    %1373 = vmatpush1.bf16.msra.mxu0 0
    %1374 = vmatprep.subr.bf16.mxu0 0
    %1375 = vmatpush1.bf16.msra.mxu0 0
    %1376 = vmatprep.subr.bf16.mxu0 0
    %1377 = vmatpush1.bf16.msra.mxu0 0
    %1378 = vmatprep.subr.bf16.mxu0 0
    %1379 = vmatpush1.bf16.msra.mxu0 0
    %1380 = vmatprep.subr.bf16.mxu0 0
    %1381 = vmatpush1.bf16.msra.mxu0 0
    %1382 = vmatprep.mubr.bf16.mxu0 0
    %1383 = vmatmul.mubr.bf16.gmra.mrb[0].mxu0 %v1308
    %v1384 = vpop.f32.mrb[0].mxu0
    %v1385 = vadd.f32 0.0, %v1384
    %v1386 = vpop.f32.mrb[0].mxu0
    %v1387 = vpop.f32.mrb[0].mxu0
    %v1388 = vpop.f32.mrb[0].mxu0
    %1389 = vdwg.mxu0
    %v1390 = vadd.f32 %v1262, %v1344
    %v1391 = vxor.u32 %v1390, 2147483648
    %v1392 = vmul.f32 %v1391, 1.442695
    %v1393 = vpow.pop %v1392
    %v1394 = vadd.f32 %v1393, 1.0
    %v1395 = vrcp.pop %v1394
    %v1396 = vmul.f32 1.0, %v1395
    %v1397 = vadd.f32 %v1264, %v1346
    %v1398 = vxor.u32 %v1397, 2147483648
    %v1399 = vmul.f32 %v1398, 1.442695
    %v1400 = vpow.pop %v1399
    %v1401 = vadd.f32 %v1400, 1.0
    %v1402 = vrcp.pop %v1401
    %v1403 = vmul.f32 1.0, %v1402
    %v1404 = vadd.f32 %v1385, %v1109
    %v1405 = vmul.f32 %v1396, %v1404
    %v1406 = vadd.f32 %v1303, %v1405
    %v1407 = vtanh.pop %v1406
    %v1408 = vsub.f32 1.0, %v1403
    %v1409 = vmul.f32 %v1408, %v1407
    %v1410 = vmul.f32 %v1403, %v1118
    %v1411 = vadd.f32 %v1409, %v1410
    %s1412 = scalar_lea.vmem [#allocation2], 48
    %v1413 = vld [vmem:[%s1412] sm:$0xff]
    %v1414 = vld [vmem:[%s1412 + $0x8] sm:$0xff]
    %v1415 = vld [vmem:[%s1412 + $0x10] sm:$0xff]
    %1416 = vmatprep.subr.bf16.mxu0 %v432
    %1417 = vmatpush1.bf16.msra.mxu0 %v431
    %1418 = vmatprep.subr.bf16.mxu0 %v435
    %1419 = vmatpush1.bf16.msra.mxu0 %v434
    %1420 = vmatprep.subr.bf16.mxu0 %v438
    %1421 = vmatpush1.bf16.msra.mxu0 %v437
    %1422 = vmatprep.subr.bf16.mxu0 %v441
    %1423 = vmatpush1.bf16.msra.mxu0 %v440
    %1424 = vmatprep.subr.bf16.mxu0 %v444
    %1425 = vmatpush1.bf16.msra.mxu0 %v443
    %1426 = vmatprep.subr.bf16.mxu0 %v447
    %1427 = vmatpush1.bf16.msra.mxu0 %v446
    %1428 = vmatprep.subr.bf16.mxu0 %v450
    %1429 = vmatpush1.bf16.msra.mxu0 %v449
    %1430 = vmatprep.subr.bf16.mxu0 %v453
    %1431 = vmatpush1.bf16.msra.mxu0 %v452
    %1432 = vmatprep.subr.bf16.mxu0 0
    %1433 = vmatpush1.bf16.msra.mxu0 0
    %1434 = vmatprep.subr.bf16.mxu0 0
    %1435 = vmatpush1.bf16.msra.mxu0 0
    %1436 = vmatprep.subr.bf16.mxu0 0
    %1437 = vmatpush1.bf16.msra.mxu0 0
    %1438 = vmatprep.subr.bf16.mxu0 0
    %1439 = vmatpush1.bf16.msra.mxu0 0
    %1440 = vmatprep.subr.bf16.mxu0 0
    %1441 = vmatpush1.bf16.msra.mxu0 0
    %1442 = vmatprep.subr.bf16.mxu0 0
    %1443 = vmatpush1.bf16.msra.mxu0 0
    %1444 = vmatprep.subr.bf16.mxu0 0
    %1445 = vmatpush1.bf16.msra.mxu0 0
    %1446 = vmatprep.subr.bf16.mxu0 0
    %1447 = vmatpush1.bf16.msra.mxu0 0
    %1448 = vmatprep.mubr.bf16.mxu0 0
    %1449 = vmatmul.mubr.bf16.gmra.mrb[0].mxu0 %v1226
    %v1450 = vpop.f32.mrb[0].mxu0
    %v1451 = vadd.f32 0.0, %v1450
    %v1452 = vpop.f32.mrb[0].mxu0
    %v1453 = vadd.f32 0.0, %v1452
    %v1454 = vpop.f32.mrb[0].mxu0
    %v1455 = vpop.f32.mrb[0].mxu0
    %1456 = vdwg.mxu0
    %1457 = vmatprep.subr.bf16.mxu0 0
    %1458 = vmatpush1.bf16.msra.mxu0 %v433
    %1459 = vmatprep.subr.bf16.mxu0 0
    %1460 = vmatpush1.bf16.msra.mxu0 %v436
    %1461 = vmatprep.subr.bf16.mxu0 0
    %1462 = vmatpush1.bf16.msra.mxu0 %v439
    %1463 = vmatprep.subr.bf16.mxu0 0
    %1464 = vmatpush1.bf16.msra.mxu0 %v442
    %1465 = vmatprep.subr.bf16.mxu0 0
    %1466 = vmatpush1.bf16.msra.mxu0 %v445
    %1467 = vmatprep.subr.bf16.mxu0 0
    %1468 = vmatpush1.bf16.msra.mxu0 %v448
    %1469 = vmatprep.subr.bf16.mxu0 0
    %1470 = vmatpush1.bf16.msra.mxu0 %v451
    %1471 = vmatprep.subr.bf16.mxu0 0
    %1472 = vmatpush1.bf16.msra.mxu0 %v454
    %1473 = vmatprep.subr.bf16.mxu0 0
    %1474 = vmatpush1.bf16.msra.mxu0 0
    %1475 = vmatprep.subr.bf16.mxu0 0
    %1476 = vmatpush1.bf16.msra.mxu0 0
    %1477 = vmatprep.subr.bf16.mxu0 0
    %1478 = vmatpush1.bf16.msra.mxu0 0
    %1479 = vmatprep.subr.bf16.mxu0 0
    %1480 = vmatpush1.bf16.msra.mxu0 0
    %1481 = vmatprep.subr.bf16.mxu0 0
    %1482 = vmatpush1.bf16.msra.mxu0 0
    %1483 = vmatprep.subr.bf16.mxu0 0
    %1484 = vmatpush1.bf16.msra.mxu0 0
    %1485 = vmatprep.subr.bf16.mxu0 0
    %1486 = vmatpush1.bf16.msra.mxu0 0
    %1487 = vmatprep.subr.bf16.mxu0 0
    %1488 = vmatpush1.bf16.msra.mxu0 0
    %1489 = vmatprep.mubr.bf16.mxu0 0
    %1490 = vmatmul.mubr.bf16.gmra.mrb[0].mxu0 %v1226
    %v1491 = vpop.f32.mrb[0].mxu0
    %v1492 = vadd.f32 0.0, %v1491
    %v1493 = vpop.f32.mrb[0].mxu0
    %v1494 = vpop.f32.mrb[0].mxu0
    %v1495 = vpop.f32.mrb[0].mxu0
    %1496 = vdwg.mxu0
    %v1497 = vadd.f32 %v1413, %v1451
    %v1498 = vxor.u32 %v1497, 2147483648
    %v1499 = vmul.f32 %v1498, 1.442695
    %v1500 = vpow.pop %v1499
    %v1501 = vadd.f32 %v1500, 1.0
    %v1502 = vrcp.pop %v1501
    %v1503 = vmul.f32 1.0, %v1502
    %v1504 = vadd.f32 %v1414, %v1453
    %v1505 = vxor.u32 %v1504, 2147483648
    %v1506 = vmul.f32 %v1505, 1.442695
    %v1507 = vpow.pop %v1506
    %v1508 = vadd.f32 %v1507, 1.0
    %v1509 = vrcp.pop %v1508
    %v1510 = vmul.f32 1.0, %v1509
    %v1511 = vadd.f32 %v1492, %v579
    %v1512 = vmul.f32 %v1503, %v1511
    %v1513 = vadd.f32 %v1415, %v1512
    %v1514 = vtanh.pop %v1513
    %v1515 = vsub.f32 1.0, %v1510
    %v1516 = vmul.f32 %v1515, %v1514
    %v1517 = vmul.f32 %v1510, %v1225
    %v1518 = vadd.f32 %v1516, %v1517
    %v1519 = vpack.c.bf16 %v1518, %v1518
    %1520 = vmatprep.subr.bf16.mxu0 %v720
    %1521 = vmatpush1.bf16.msra.mxu0 %v719
    %1522 = vmatprep.subr.bf16.mxu0 %v723
    %1523 = vmatpush1.bf16.msra.mxu0 %v722
    %1524 = vmatprep.subr.bf16.mxu0 %v726
    %1525 = vmatpush1.bf16.msra.mxu0 %v725
    %1526 = vmatprep.subr.bf16.mxu0 %v729
    %1527 = vmatpush1.bf16.msra.mxu0 %v728
    %1528 = vmatprep.subr.bf16.mxu0 %v732
    %1529 = vmatpush1.bf16.msra.mxu0 %v731
    %1530 = vmatprep.subr.bf16.mxu0 %v735
    %1531 = vmatpush1.bf16.msra.mxu0 %v734
    %1532 = vmatprep.subr.bf16.mxu0 %v738
    %1533 = vmatpush1.bf16.msra.mxu0 %v737
    %1534 = vmatprep.subr.bf16.mxu0 %v741
    %1535 = vmatpush1.bf16.msra.mxu0 %v740
    %1536 = vmatprep.subr.bf16.mxu0 0
    %1537 = vmatpush1.bf16.msra.mxu0 0
    %1538 = vmatprep.subr.bf16.mxu0 0
    %1539 = vmatpush1.bf16.msra.mxu0 0
    %1540 = vmatprep.subr.bf16.mxu0 0
    %1541 = vmatpush1.bf16.msra.mxu0 0
    %1542 = vmatprep.subr.bf16.mxu0 0
    %1543 = vmatpush1.bf16.msra.mxu0 0
    %1544 = vmatprep.subr.bf16.mxu0 0
    %1545 = vmatpush1.bf16.msra.mxu0 0
    %1546 = vmatprep.subr.bf16.mxu0 0
    %1547 = vmatpush1.bf16.msra.mxu0 0
    %1548 = vmatprep.subr.bf16.mxu0 0
    %1549 = vmatpush1.bf16.msra.mxu0 0
    %1550 = vmatprep.subr.bf16.mxu0 0
    %1551 = vmatpush1.bf16.msra.mxu0 0
    %1552 = vmatprep.mubr.bf16.mxu0 0
    %1553 = vmatmul.mubr.bf16.gmra.mrb[0].mxu0 %v1519
    %v1554 = vpop.f32.mrb[0].mxu0
    %v1555 = vadd.f32 %v627, %v1554
    %v1556 = vpop.f32.mrb[0].mxu0
    %v1557 = vadd.f32 %v631, %v1556
    %v1558 = vpop.f32.mrb[0].mxu0
    %v1559 = vpop.f32.mrb[0].mxu0
    %1560 = vdwg.mxu0
    %1561 = vmatprep.subr.bf16.mxu0 0
    %1562 = vmatpush1.bf16.msra.mxu0 %v721
    %1563 = vmatprep.subr.bf16.mxu0 0
    %1564 = vmatpush1.bf16.msra.mxu0 %v724
    %1565 = vmatprep.subr.bf16.mxu0 0
    %1566 = vmatpush1.bf16.msra.mxu0 %v727
    %1567 = vmatprep.subr.bf16.mxu0 0
    %1568 = vmatpush1.bf16.msra.mxu0 %v730
    %1569 = vmatprep.subr.bf16.mxu0 0
    %1570 = vmatpush1.bf16.msra.mxu0 %v733
    %1571 = vmatprep.subr.bf16.mxu0 0
    %1572 = vmatpush1.bf16.msra.mxu0 %v736
    %1573 = vmatprep.subr.bf16.mxu0 0
    %1574 = vmatpush1.bf16.msra.mxu0 %v739
    %1575 = vmatprep.subr.bf16.mxu0 0
    %1576 = vmatpush1.bf16.msra.mxu0 %v742
    %1577 = vmatprep.subr.bf16.mxu0 0
    %1578 = vmatpush1.bf16.msra.mxu0 0
    %1579 = vmatprep.subr.bf16.mxu0 0
    %1580 = vmatpush1.bf16.msra.mxu0 0
    %1581 = vmatprep.subr.bf16.mxu0 0
    %1582 = vmatpush1.bf16.msra.mxu0 0
    %1583 = vmatprep.subr.bf16.mxu0 0
    %1584 = vmatpush1.bf16.msra.mxu0 0
    %1585 = vmatprep.subr.bf16.mxu0 0
    %1586 = vmatpush1.bf16.msra.mxu0 0
    %1587 = vmatprep.subr.bf16.mxu0 0
    %1588 = vmatpush1.bf16.msra.mxu0 0
    %1589 = vmatprep.subr.bf16.mxu0 0
    %1590 = vmatpush1.bf16.msra.mxu0 0
    %1591 = vmatprep.subr.bf16.mxu0 0
    %1592 = vmatpush1.bf16.msra.mxu0 0
    %1593 = vmatprep.mubr.bf16.mxu0 0
    %1594 = vmatmul.mubr.bf16.gmra.mrb[0].mxu0 %v1519
    %v1595 = vpop.f32.mrb[0].mxu0
    %v1596 = vadd.f32 %v635, %v1595
    %v1597 = vpop.f32.mrb[0].mxu0
    %v1598 = vpop.f32.mrb[0].mxu0
    %v1599 = vpop.f32.mrb[0].mxu0
    %1600 = vdwg.mxu0
    %v1601 = vpack.c.bf16 %v1411, %v1411
    %1602 = vmatprep.subr.bf16.mxu0 %v962
    %1603 = vmatpush1.bf16.msra.mxu0 %v961
    %1604 = vmatprep.subr.bf16.mxu0 %v965
    %1605 = vmatpush1.bf16.msra.mxu0 %v964
    %1606 = vmatprep.subr.bf16.mxu0 %v968
    %1607 = vmatpush1.bf16.msra.mxu0 %v967
    %1608 = vmatprep.subr.bf16.mxu0 %v971
    %1609 = vmatpush1.bf16.msra.mxu0 %v970
    %1610 = vmatprep.subr.bf16.mxu0 %v974
    %1611 = vmatpush1.bf16.msra.mxu0 %v973
    %1612 = vmatprep.subr.bf16.mxu0 %v977
    %1613 = vmatpush1.bf16.msra.mxu0 %v976
    %1614 = vmatprep.subr.bf16.mxu0 %v980
    %1615 = vmatpush1.bf16.msra.mxu0 %v979
    %1616 = vmatprep.subr.bf16.mxu0 %v983
    %1617 = vmatpush1.bf16.msra.mxu0 %v982
    %1618 = vmatprep.subr.bf16.mxu0 0
    %1619 = vmatpush1.bf16.msra.mxu0 0
    %1620 = vmatprep.subr.bf16.mxu0 0
    %1621 = vmatpush1.bf16.msra.mxu0 0
    %1622 = vmatprep.subr.bf16.mxu0 0
    %1623 = vmatpush1.bf16.msra.mxu0 0
    %1624 = vmatprep.subr.bf16.mxu0 0
    %1625 = vmatpush1.bf16.msra.mxu0 0
    %1626 = vmatprep.subr.bf16.mxu0 0
    %1627 = vmatpush1.bf16.msra.mxu0 0
    %1628 = vmatprep.subr.bf16.mxu0 0
    %1629 = vmatpush1.bf16.msra.mxu0 0
    %1630 = vmatprep.subr.bf16.mxu0 0
    %1631 = vmatpush1.bf16.msra.mxu0 0
    %1632 = vmatprep.subr.bf16.mxu0 0
    %1633 = vmatpush1.bf16.msra.mxu0 0
    %1634 = vmatprep.mubr.bf16.mxu0 0
    %1635 = vmatmul.mubr.bf16.gmra.mrb[0].mxu0 %v1601
    %v1636 = vpop.f32.mrb[0].mxu0
    %v1637 = vadd.f32 0.0, %v1636
    %v1638 = vpop.f32.mrb[0].mxu0
    %v1639 = vadd.f32 0.0, %v1638
    %v1640 = vpop.f32.mrb[0].mxu0
    %v1641 = vpop.f32.mrb[0].mxu0
    %1642 = vdwg.mxu0
    %1643 = vmatprep.subr.bf16.mxu0 0
    %1644 = vmatpush1.bf16.msra.mxu0 %v963
    %1645 = vmatprep.subr.bf16.mxu0 0
    %1646 = vmatpush1.bf16.msra.mxu0 %v966
    %1647 = vmatprep.subr.bf16.mxu0 0
    %1648 = vmatpush1.bf16.msra.mxu0 %v969
    %1649 = vmatprep.subr.bf16.mxu0 0
    %1650 = vmatpush1.bf16.msra.mxu0 %v972
    %1651 = vmatprep.subr.bf16.mxu0 0
    %1652 = vmatpush1.bf16.msra.mxu0 %v975
    %1653 = vmatprep.subr.bf16.mxu0 0
    %1654 = vmatpush1.bf16.msra.mxu0 %v978
    %1655 = vmatprep.subr.bf16.mxu0 0
    %1656 = vmatpush1.bf16.msra.mxu0 %v981
    %1657 = vmatprep.subr.bf16.mxu0 0
    %1658 = vmatpush1.bf16.msra.mxu0 %v984
    %1659 = vmatprep.subr.bf16.mxu0 0
    %1660 = vmatpush1.bf16.msra.mxu0 0
    %1661 = vmatprep.subr.bf16.mxu0 0
    %1662 = vmatpush1.bf16.msra.mxu0 0
    %1663 = vmatprep.subr.bf16.mxu0 0
    %1664 = vmatpush1.bf16.msra.mxu0 0
    %1665 = vmatprep.subr.bf16.mxu0 0
    %1666 = vmatpush1.bf16.msra.mxu0 0
    %1667 = vmatprep.subr.bf16.mxu0 0
    %1668 = vmatpush1.bf16.msra.mxu0 0
    %1669 = vmatprep.subr.bf16.mxu0 0
    %1670 = vmatpush1.bf16.msra.mxu0 0
    %1671 = vmatprep.subr.bf16.mxu0 0
    %1672 = vmatpush1.bf16.msra.mxu0 0
    %1673 = vmatprep.subr.bf16.mxu0 0
    %1674 = vmatpush1.bf16.msra.mxu0 0
    %1675 = vmatprep.mubr.bf16.mxu0 0
    %1676 = vmatmul.mubr.bf16.gmra.mrb[0].mxu0 %v1601
    %v1677 = vpop.f32.mrb[0].mxu0
    %v1678 = vadd.f32 0.0, %v1677
    %v1679 = vpop.f32.mrb[0].mxu0
    %v1680 = vpop.f32.mrb[0].mxu0
    %v1681 = vpop.f32.mrb[0].mxu0
    %1682 = vdwg.mxu0
    %v1683 = vadd.f32 %v1555, %v1637
    %v1684 = vxor.u32 %v1683, 2147483648
    %v1685 = vmul.f32 %v1684, 1.442695
    %v1686 = vpow.pop %v1685
    %v1687 = vadd.f32 %v1686, 1.0
    %v1688 = vrcp.pop %v1687
    %v1689 = vmul.f32 1.0, %v1688
    %v1690 = vadd.f32 %v1557, %v1639
    %v1691 = vxor.u32 %v1690, 2147483648
    %v1692 = vmul.f32 %v1691, 1.442695
    %v1693 = vpow.pop %v1692
    %v1694 = vadd.f32 %v1693, 1.0
    %v1695 = vrcp.pop %v1694
    %v1696 = vmul.f32 1.0, %v1695
    %v1697 = vadd.f32 %v1678, %v1109
    %v1698 = vmul.f32 %v1689, %v1697
    %v1699 = vadd.f32 %v1596, %v1698
    %v1700 = vtanh.pop %v1699
    %v1701 = vsub.f32 1.0, %v1696
    %v1702 = vmul.f32 %v1701, %v1700
    %v1703 = vmul.f32 %v1696, %v1411
    %v1704 = vadd.f32 %v1702, %v1703
    %s1705 = scalar_lea.vmem [#allocation2], 72
    %v1706 = vld [vmem:[%s1705] sm:$0xff]
    %v1707 = vld [vmem:[%s1705 + $0x8] sm:$0xff]
    %v1708 = vld [vmem:[%s1705 + $0x10] sm:$0xff]
    %1709 = vmatprep.subr.bf16.mxu0 %v432
    %1710 = vmatpush1.bf16.msra.mxu0 %v431
    %1711 = vmatprep.subr.bf16.mxu0 %v435
    %1712 = vmatpush1.bf16.msra.mxu0 %v434
    %1713 = vmatprep.subr.bf16.mxu0 %v438
    %1714 = vmatpush1.bf16.msra.mxu0 %v437
    %1715 = vmatprep.subr.bf16.mxu0 %v441
    %1716 = vmatpush1.bf16.msra.mxu0 %v440
    %1717 = vmatprep.subr.bf16.mxu0 %v444
    %1718 = vmatpush1.bf16.msra.mxu0 %v443
    %1719 = vmatprep.subr.bf16.mxu0 %v447
    %1720 = vmatpush1.bf16.msra.mxu0 %v446
    %1721 = vmatprep.subr.bf16.mxu0 %v450
    %1722 = vmatpush1.bf16.msra.mxu0 %v449
    %1723 = vmatprep.subr.bf16.mxu0 %v453
    %1724 = vmatpush1.bf16.msra.mxu0 %v452
    %1725 = vmatprep.subr.bf16.mxu0 0
    %1726 = vmatpush1.bf16.msra.mxu0 0
    %1727 = vmatprep.subr.bf16.mxu0 0
    %1728 = vmatpush1.bf16.msra.mxu0 0
    %1729 = vmatprep.subr.bf16.mxu0 0
    %1730 = vmatpush1.bf16.msra.mxu0 0
    %1731 = vmatprep.subr.bf16.mxu0 0
    %1732 = vmatpush1.bf16.msra.mxu0 0
    %1733 = vmatprep.subr.bf16.mxu0 0
    %1734 = vmatpush1.bf16.msra.mxu0 0
    %1735 = vmatprep.subr.bf16.mxu0 0
    %1736 = vmatpush1.bf16.msra.mxu0 0
    %1737 = vmatprep.subr.bf16.mxu0 0
    %1738 = vmatpush1.bf16.msra.mxu0 0
    %1739 = vmatprep.subr.bf16.mxu0 0
    %1740 = vmatpush1.bf16.msra.mxu0 0
    %1741 = vmatprep.mubr.bf16.mxu0 0
    %1742 = vmatmul.mubr.bf16.gmra.mrb[0].mxu0 %v1519
    %v1743 = vpop.f32.mrb[0].mxu0
    %v1744 = vadd.f32 0.0, %v1743
    %v1745 = vpop.f32.mrb[0].mxu0
    %v1746 = vadd.f32 0.0, %v1745
    %v1747 = vpop.f32.mrb[0].mxu0
    %v1748 = vpop.f32.mrb[0].mxu0
    %1749 = vdwg.mxu0
    %1750 = vmatprep.subr.bf16.mxu0 0
    %1751 = vmatpush1.bf16.msra.mxu0 %v433
    %1752 = vmatprep.subr.bf16.mxu0 0
    %1753 = vmatpush1.bf16.msra.mxu0 %v436
    %1754 = vmatprep.subr.bf16.mxu0 0
    %1755 = vmatpush1.bf16.msra.mxu0 %v439
    %1756 = vmatprep.subr.bf16.mxu0 0
    %1757 = vmatpush1.bf16.msra.mxu0 %v442
    %1758 = vmatprep.subr.bf16.mxu0 0
    %1759 = vmatpush1.bf16.msra.mxu0 %v445
    %1760 = vmatprep.subr.bf16.mxu0 0
    %1761 = vmatpush1.bf16.msra.mxu0 %v448
    %1762 = vmatprep.subr.bf16.mxu0 0
    %1763 = vmatpush1.bf16.msra.mxu0 %v451
    %1764 = vmatprep.subr.bf16.mxu0 0
    %1765 = vmatpush1.bf16.msra.mxu0 %v454
    %1766 = vmatprep.subr.bf16.mxu0 0
    %1767 = vmatpush1.bf16.msra.mxu0 0
    %1768 = vmatprep.subr.bf16.mxu0 0
    %1769 = vmatpush1.bf16.msra.mxu0 0
    %1770 = vmatprep.subr.bf16.mxu0 0
    %1771 = vmatpush1.bf16.msra.mxu0 0
    %1772 = vmatprep.subr.bf16.mxu0 0
    %1773 = vmatpush1.bf16.msra.mxu0 0
    %1774 = vmatprep.subr.bf16.mxu0 0
    %1775 = vmatpush1.bf16.msra.mxu0 0
    %1776 = vmatprep.subr.bf16.mxu0 0
    %1777 = vmatpush1.bf16.msra.mxu0 0
    %1778 = vmatprep.subr.bf16.mxu0 0
    %1779 = vmatpush1.bf16.msra.mxu0 0
    %1780 = vmatprep.subr.bf16.mxu0 0
    %1781 = vmatpush1.bf16.msra.mxu0 0
    %1782 = vmatprep.mubr.bf16.mxu0 0
    %1783 = vmatmul.mubr.bf16.gmra.mrb[0].mxu0 %v1519
    %v1784 = vpop.f32.mrb[0].mxu0
    %v1785 = vadd.f32 0.0, %v1784
    %v1786 = vpop.f32.mrb[0].mxu0
    %v1787 = vpop.f32.mrb[0].mxu0
    %v1788 = vpop.f32.mrb[0].mxu0
    %1789 = vdwg.mxu0
    %v1790 = vadd.f32 %v1706, %v1744
    %v1791 = vxor.u32 %v1790, 2147483648
    %v1792 = vmul.f32 %v1791, 1.442695
    %v1793 = vpow.pop %v1792
    %v1794 = vadd.f32 %v1793, 1.0
    %v1795 = vrcp.pop %v1794
    %v1796 = vmul.f32 1.0, %v1795
    %v1797 = vadd.f32 %v1707, %v1746
    %v1798 = vxor.u32 %v1797, 2147483648
    %v1799 = vmul.f32 %v1798, 1.442695
    %v1800 = vpow.pop %v1799
    %v1801 = vadd.f32 %v1800, 1.0
    %v1802 = vrcp.pop %v1801
    %v1803 = vmul.f32 1.0, %v1802
    %v1804 = vadd.f32 %v1785, %v579
    %v1805 = vmul.f32 %v1796, %v1804
    %v1806 = vadd.f32 %v1708, %v1805
    %v1807 = vtanh.pop %v1806
    %v1808 = vsub.f32 1.0, %v1803
    %v1809 = vmul.f32 %v1808, %v1807
    %v1810 = vmul.f32 %v1803, %v1518
    %v1811 = vadd.f32 %v1809, %v1810
    %v1812 = vpack.c.bf16 %v1811, %v1811
    %1813 = vmatprep.subr.bf16.mxu0 %v720
    %1814 = vmatpush1.bf16.msra.mxu0 %v719
    %1815 = vmatprep.subr.bf16.mxu0 %v723
    %1816 = vmatpush1.bf16.msra.mxu0 %v722
    %1817 = vmatprep.subr.bf16.mxu0 %v726
    %1818 = vmatpush1.bf16.msra.mxu0 %v725
    %1819 = vmatprep.subr.bf16.mxu0 %v729
    %1820 = vmatpush1.bf16.msra.mxu0 %v728
    %1821 = vmatprep.subr.bf16.mxu0 %v732
    %1822 = vmatpush1.bf16.msra.mxu0 %v731
    %1823 = vmatprep.subr.bf16.mxu0 %v735
    %1824 = vmatpush1.bf16.msra.mxu0 %v734
    %1825 = vmatprep.subr.bf16.mxu0 %v738
    %1826 = vmatpush1.bf16.msra.mxu0 %v737
    %1827 = vmatprep.subr.bf16.mxu0 %v741
    %1828 = vmatpush1.bf16.msra.mxu0 %v740
    %1829 = vmatprep.subr.bf16.mxu0 0
    %1830 = vmatpush1.bf16.msra.mxu0 0
    %1831 = vmatprep.subr.bf16.mxu0 0
    %1832 = vmatpush1.bf16.msra.mxu0 0
    %1833 = vmatprep.subr.bf16.mxu0 0
    %1834 = vmatpush1.bf16.msra.mxu0 0
    %1835 = vmatprep.subr.bf16.mxu0 0
    %1836 = vmatpush1.bf16.msra.mxu0 0
    %1837 = vmatprep.subr.bf16.mxu0 0
    %1838 = vmatpush1.bf16.msra.mxu0 0
    %1839 = vmatprep.subr.bf16.mxu0 0
    %1840 = vmatpush1.bf16.msra.mxu0 0
    %1841 = vmatprep.subr.bf16.mxu0 0
    %1842 = vmatpush1.bf16.msra.mxu0 0
    %1843 = vmatprep.subr.bf16.mxu0 0
    %1844 = vmatpush1.bf16.msra.mxu0 0
    %1845 = vmatprep.mubr.bf16.mxu0 0
    %1846 = vmatmul.mubr.bf16.gmra.mrb[0].mxu0 %v1812
    %v1847 = vpop.f32.mrb[0].mxu0
    %v1848 = vadd.f32 %v627, %v1847
    %v1849 = vpop.f32.mrb[0].mxu0
    %v1850 = vadd.f32 %v631, %v1849
    %v1851 = vpop.f32.mrb[0].mxu0
    %v1852 = vpop.f32.mrb[0].mxu0
    %1853 = vdwg.mxu0
    %1854 = vmatprep.subr.bf16.mxu0 0
    %1855 = vmatpush1.bf16.msra.mxu0 %v721
    %1856 = vmatprep.subr.bf16.mxu0 0
    %1857 = vmatpush1.bf16.msra.mxu0 %v724
    %1858 = vmatprep.subr.bf16.mxu0 0
    %1859 = vmatpush1.bf16.msra.mxu0 %v727
    %1860 = vmatprep.subr.bf16.mxu0 0
    %1861 = vmatpush1.bf16.msra.mxu0 %v730
    %1862 = vmatprep.subr.bf16.mxu0 0
    %1863 = vmatpush1.bf16.msra.mxu0 %v733
    %1864 = vmatprep.subr.bf16.mxu0 0
    %1865 = vmatpush1.bf16.msra.mxu0 %v736
    %1866 = vmatprep.subr.bf16.mxu0 0
    %1867 = vmatpush1.bf16.msra.mxu0 %v739
    %1868 = vmatprep.subr.bf16.mxu0 0
    %1869 = vmatpush1.bf16.msra.mxu0 %v742
    %1870 = vmatprep.subr.bf16.mxu0 0
    %1871 = vmatpush1.bf16.msra.mxu0 0
    %1872 = vmatprep.subr.bf16.mxu0 0
    %1873 = vmatpush1.bf16.msra.mxu0 0
    %1874 = vmatprep.subr.bf16.mxu0 0
    %1875 = vmatpush1.bf16.msra.mxu0 0
    %1876 = vmatprep.subr.bf16.mxu0 0
    %1877 = vmatpush1.bf16.msra.mxu0 0
    %1878 = vmatprep.subr.bf16.mxu0 0
    %1879 = vmatpush1.bf16.msra.mxu0 0
    %1880 = vmatprep.subr.bf16.mxu0 0
    %1881 = vmatpush1.bf16.msra.mxu0 0
    %1882 = vmatprep.subr.bf16.mxu0 0
    %1883 = vmatpush1.bf16.msra.mxu0 0
    %1884 = vmatprep.subr.bf16.mxu0 0
    %1885 = vmatpush1.bf16.msra.mxu0 0
    %1886 = vmatprep.mubr.bf16.mxu0 0
    %1887 = vmatmul.mubr.bf16.gmra.mrb[0].mxu0 %v1812
    %v1888 = vpop.f32.mrb[0].mxu0
    %v1889 = vadd.f32 %v635, %v1888
    %v1890 = vpop.f32.mrb[0].mxu0
    %v1891 = vpop.f32.mrb[0].mxu0
    %v1892 = vpop.f32.mrb[0].mxu0
    %1893 = vdwg.mxu0
    %v1894 = vpack.c.bf16 %v1704, %v1704
    %1895 = vmatprep.subr.bf16.mxu0 %v962
    %1896 = vmatpush1.bf16.msra.mxu0 %v961
    %1897 = vmatprep.subr.bf16.mxu0 %v965
    %1898 = vmatpush1.bf16.msra.mxu0 %v964
    %1899 = vmatprep.subr.bf16.mxu0 %v968
    %1900 = vmatpush1.bf16.msra.mxu0 %v967
    %1901 = vmatprep.subr.bf16.mxu0 %v971
    %1902 = vmatpush1.bf16.msra.mxu0 %v970
    %1903 = vmatprep.subr.bf16.mxu0 %v974
    %1904 = vmatpush1.bf16.msra.mxu0 %v973
    %1905 = vmatprep.subr.bf16.mxu0 %v977
    %1906 = vmatpush1.bf16.msra.mxu0 %v976
    %1907 = vmatprep.subr.bf16.mxu0 %v980
    %1908 = vmatpush1.bf16.msra.mxu0 %v979
    %1909 = vmatprep.subr.bf16.mxu0 %v983
    %1910 = vmatpush1.bf16.msra.mxu0 %v982
    %1911 = vmatprep.subr.bf16.mxu0 0
    %1912 = vmatpush1.bf16.msra.mxu0 0
    %1913 = vmatprep.subr.bf16.mxu0 0
    %1914 = vmatpush1.bf16.msra.mxu0 0
    %1915 = vmatprep.subr.bf16.mxu0 0
    %1916 = vmatpush1.bf16.msra.mxu0 0
    %1917 = vmatprep.subr.bf16.mxu0 0
    %1918 = vmatpush1.bf16.msra.mxu0 0
    %1919 = vmatprep.subr.bf16.mxu0 0
    %1920 = vmatpush1.bf16.msra.mxu0 0
    %1921 = vmatprep.subr.bf16.mxu0 0
    %1922 = vmatpush1.bf16.msra.mxu0 0
    %1923 = vmatprep.subr.bf16.mxu0 0
    %1924 = vmatpush1.bf16.msra.mxu0 0
    %1925 = vmatprep.subr.bf16.mxu0 0
    %1926 = vmatpush1.bf16.msra.mxu0 0
    %1927 = vmatprep.mubr.bf16.mxu0 0
    %1928 = vmatmul.mubr.bf16.gmra.mrb[0].mxu0 %v1894
    %v1929 = vpop.f32.mrb[0].mxu0
    %v1930 = vadd.f32 0.0, %v1929
    %v1931 = vpop.f32.mrb[0].mxu0
    %v1932 = vadd.f32 0.0, %v1931
    %v1933 = vpop.f32.mrb[0].mxu0
    %v1934 = vpop.f32.mrb[0].mxu0
    %1935 = vdwg.mxu0
    %1936 = vmatprep.subr.bf16.mxu0 0
    %1937 = vmatpush1.bf16.msra.mxu0 %v963
    %1938 = vmatprep.subr.bf16.mxu0 0
    %1939 = vmatpush1.bf16.msra.mxu0 %v966
    %1940 = vmatprep.subr.bf16.mxu0 0
    %1941 = vmatpush1.bf16.msra.mxu0 %v969
    %1942 = vmatprep.subr.bf16.mxu0 0
    %1943 = vmatpush1.bf16.msra.mxu0 %v972
    %1944 = vmatprep.subr.bf16.mxu0 0
    %1945 = vmatpush1.bf16.msra.mxu0 %v975
    %1946 = vmatprep.subr.bf16.mxu0 0
    %1947 = vmatpush1.bf16.msra.mxu0 %v978
    %1948 = vmatprep.subr.bf16.mxu0 0
    %1949 = vmatpush1.bf16.msra.mxu0 %v981
    %1950 = vmatprep.subr.bf16.mxu0 0
    %1951 = vmatpush1.bf16.msra.mxu0 %v984
    %1952 = vmatprep.subr.bf16.mxu0 0
    %1953 = vmatpush1.bf16.msra.mxu0 0
    %1954 = vmatprep.subr.bf16.mxu0 0
    %1955 = vmatpush1.bf16.msra.mxu0 0
    %1956 = vmatprep.subr.bf16.mxu0 0
    %1957 = vmatpush1.bf16.msra.mxu0 0
    %1958 = vmatprep.subr.bf16.mxu0 0
    %1959 = vmatpush1.bf16.msra.mxu0 0
    %1960 = vmatprep.subr.bf16.mxu0 0
    %1961 = vmatpush1.bf16.msra.mxu0 0
    %1962 = vmatprep.subr.bf16.mxu0 0
    %1963 = vmatpush1.bf16.msra.mxu0 0
    %1964 = vmatprep.subr.bf16.mxu0 0
    %1965 = vmatpush1.bf16.msra.mxu0 0
    %1966 = vmatprep.subr.bf16.mxu0 0
    %1967 = vmatpush1.bf16.msra.mxu0 0
    %1968 = vmatprep.mubr.bf16.mxu0 0
    %1969 = vmatmul.mubr.bf16.gmra.mrb[0].mxu0 %v1894
    %v1970 = vpop.f32.mrb[0].mxu0
    %v1971 = vadd.f32 0.0, %v1970
    %v1972 = vpop.f32.mrb[0].mxu0
    %v1973 = vpop.f32.mrb[0].mxu0
    %v1974 = vpop.f32.mrb[0].mxu0
    %1975 = vdwg.mxu0
    %v1976 = vadd.f32 %v1848, %v1930
    %v1977 = vxor.u32 %v1976, 2147483648
    %v1978 = vmul.f32 %v1977, 1.442695
    %v1979 = vpow.pop %v1978
    %v1980 = vadd.f32 %v1979, 1.0
    %v1981 = vrcp.pop %v1980
    %v1982 = vmul.f32 1.0, %v1981
    %v1983 = vadd.f32 %v1850, %v1932
    %v1984 = vxor.u32 %v1983, 2147483648
    %v1985 = vmul.f32 %v1984, 1.442695
    %v1986 = vpow.pop %v1985
    %v1987 = vadd.f32 %v1986, 1.0
    %v1988 = vrcp.pop %v1987
    %v1989 = vmul.f32 1.0, %v1988
    %v1990 = vadd.f32 %v1971, %v1109
    %v1991 = vmul.f32 %v1982, %v1990
    %v1992 = vadd.f32 %v1889, %v1991
    %v1993 = vtanh.pop %v1992
    %v1994 = vsub.f32 1.0, %v1989
    %v1995 = vmul.f32 %v1994, %v1993
    %v1996 = vmul.f32 %v1989, %v1704
    %v1997 = vadd.f32 %v1995, %v1996
    %s1998 = scalar_lea.vmem [#allocation2], 96
    %v1999 = vld [vmem:[%s1998] sm:$0xff]
    %v2000 = vld [vmem:[%s1998 + $0x8] sm:$0xff]
    %v2001 = vld [vmem:[%s1998 + $0x10] sm:$0xff]
    %2002 = vmatprep.subr.bf16.mxu0 %v432
    %2003 = vmatpush1.bf16.msra.mxu0 %v431
    %2004 = vmatprep.subr.bf16.mxu0 %v435
    %2005 = vmatpush1.bf16.msra.mxu0 %v434
    %2006 = vmatprep.subr.bf16.mxu0 %v438
    %2007 = vmatpush1.bf16.msra.mxu0 %v437
    %2008 = vmatprep.subr.bf16.mxu0 %v441
    %2009 = vmatpush1.bf16.msra.mxu0 %v440
    %2010 = vmatprep.subr.bf16.mxu0 %v444
    %2011 = vmatpush1.bf16.msra.mxu0 %v443
    %2012 = vmatprep.subr.bf16.mxu0 %v447
    %2013 = vmatpush1.bf16.msra.mxu0 %v446
    %2014 = vmatprep.subr.bf16.mxu0 %v450
    %2015 = vmatpush1.bf16.msra.mxu0 %v449
    %2016 = vmatprep.subr.bf16.mxu0 %v453
    %2017 = vmatpush1.bf16.msra.mxu0 %v452
    %2018 = vmatprep.subr.bf16.mxu0 0
    %2019 = vmatpush1.bf16.msra.mxu0 0
    %2020 = vmatprep.subr.bf16.mxu0 0
    %2021 = vmatpush1.bf16.msra.mxu0 0
    %2022 = vmatprep.subr.bf16.mxu0 0
    %2023 = vmatpush1.bf16.msra.mxu0 0
    %2024 = vmatprep.subr.bf16.mxu0 0
    %2025 = vmatpush1.bf16.msra.mxu0 0
    %2026 = vmatprep.subr.bf16.mxu0 0
    %2027 = vmatpush1.bf16.msra.mxu0 0
    %2028 = vmatprep.subr.bf16.mxu0 0
    %2029 = vmatpush1.bf16.msra.mxu0 0
    %2030 = vmatprep.subr.bf16.mxu0 0
    %2031 = vmatpush1.bf16.msra.mxu0 0
    %2032 = vmatprep.subr.bf16.mxu0 0
    %2033 = vmatpush1.bf16.msra.mxu0 0
    %2034 = vmatprep.mubr.bf16.mxu0 0
    %2035 = vmatmul.mubr.bf16.gmra.mrb[0].mxu0 %v1812
    %v2036 = vpop.f32.mrb[0].mxu0
    %v2037 = vadd.f32 0.0, %v2036
    %v2038 = vpop.f32.mrb[0].mxu0
    %v2039 = vadd.f32 0.0, %v2038
    %v2040 = vpop.f32.mrb[0].mxu0
    %v2041 = vpop.f32.mrb[0].mxu0
    %2042 = vdwg.mxu0
    %2043 = vmatprep.subr.bf16.mxu0 0
    %2044 = vmatpush1.bf16.msra.mxu0 %v433
    %2045 = vmatprep.subr.bf16.mxu0 0
    %2046 = vmatpush1.bf16.msra.mxu0 %v436
    %2047 = vmatprep.subr.bf16.mxu0 0
    %2048 = vmatpush1.bf16.msra.mxu0 %v439
    %2049 = vmatprep.subr.bf16.mxu0 0
    %2050 = vmatpush1.bf16.msra.mxu0 %v442
    %2051 = vmatprep.subr.bf16.mxu0 0
    %2052 = vmatpush1.bf16.msra.mxu0 %v445
    %2053 = vmatprep.subr.bf16.mxu0 0
    %2054 = vmatpush1.bf16.msra.mxu0 %v448
    %2055 = vmatprep.subr.bf16.mxu0 0
    %2056 = vmatpush1.bf16.msra.mxu0 %v451
    %2057 = vmatprep.subr.bf16.mxu0 0
    %2058 = vmatpush1.bf16.msra.mxu0 %v454
    %2059 = vmatprep.subr.bf16.mxu0 0
    %2060 = vmatpush1.bf16.msra.mxu0 0
    %2061 = vmatprep.subr.bf16.mxu0 0
    %2062 = vmatpush1.bf16.msra.mxu0 0
    %2063 = vmatprep.subr.bf16.mxu0 0
    %2064 = vmatpush1.bf16.msra.mxu0 0
    %2065 = vmatprep.subr.bf16.mxu0 0
    %2066 = vmatpush1.bf16.msra.mxu0 0
    %2067 = vmatprep.subr.bf16.mxu0 0
    %2068 = vmatpush1.bf16.msra.mxu0 0
    %2069 = vmatprep.subr.bf16.mxu0 0
    %2070 = vmatpush1.bf16.msra.mxu0 0
    %2071 = vmatprep.subr.bf16.mxu0 0
    %2072 = vmatpush1.bf16.msra.mxu0 0
    %2073 = vmatprep.subr.bf16.mxu0 0
    %2074 = vmatpush1.bf16.msra.mxu0 0
    %2075 = vmatprep.mubr.bf16.mxu0 0
    %2076 = vmatmul.mubr.bf16.gmra.mrb[0].mxu0 %v1812
    %v2077 = vpop.f32.mrb[0].mxu0
    %v2078 = vadd.f32 0.0, %v2077
    %v2079 = vpop.f32.mrb[0].mxu0
    %v2080 = vpop.f32.mrb[0].mxu0
    %v2081 = vpop.f32.mrb[0].mxu0
    %2082 = vdwg.mxu0
    %v2083 = vadd.f32 %v1999, %v2037
    %v2084 = vxor.u32 %v2083, 2147483648
    %v2085 = vmul.f32 %v2084, 1.442695
    %v2086 = vpow.pop %v2085
    %v2087 = vadd.f32 %v2086, 1.0
    %v2088 = vrcp.pop %v2087
    %v2089 = vmul.f32 1.0, %v2088
    %v2090 = vadd.f32 %v2000, %v2039
    %v2091 = vxor.u32 %v2090, 2147483648
    %v2092 = vmul.f32 %v2091, 1.442695
    %v2093 = vpow.pop %v2092
    %v2094 = vadd.f32 %v2093, 1.0
    %v2095 = vrcp.pop %v2094
    %v2096 = vmul.f32 1.0, %v2095
    %v2097 = vadd.f32 %v2078, %v579
    %v2098 = vmul.f32 %v2089, %v2097
    %v2099 = vadd.f32 %v2001, %v2098
    %v2100 = vtanh.pop %v2099
    %v2101 = vsub.f32 1.0, %v2096
    %v2102 = vmul.f32 %v2101, %v2100
    %v2103 = vmul.f32 %v2096, %v1811
    %v2104 = vadd.f32 %v2102, %v2103
    %v2105 = vpack.c.bf16 %v2104, %v2104
    %2106 = vmatprep.subr.bf16.mxu0 %v720
    %2107 = vmatpush1.bf16.msra.mxu0 %v719
    %2108 = vmatprep.subr.bf16.mxu0 %v723
    %2109 = vmatpush1.bf16.msra.mxu0 %v722
    %2110 = vmatprep.subr.bf16.mxu0 %v726
    %2111 = vmatpush1.bf16.msra.mxu0 %v725
    %2112 = vmatprep.subr.bf16.mxu0 %v729
    %2113 = vmatpush1.bf16.msra.mxu0 %v728
    %2114 = vmatprep.subr.bf16.mxu0 %v732
    %2115 = vmatpush1.bf16.msra.mxu0 %v731
    %2116 = vmatprep.subr.bf16.mxu0 %v735
    %2117 = vmatpush1.bf16.msra.mxu0 %v734
    %2118 = vmatprep.subr.bf16.mxu0 %v738
    %2119 = vmatpush1.bf16.msra.mxu0 %v737
    %2120 = vmatprep.subr.bf16.mxu0 %v741
    %2121 = vmatpush1.bf16.msra.mxu0 %v740
    %2122 = vmatprep.subr.bf16.mxu0 0
    %2123 = vmatpush1.bf16.msra.mxu0 0
    %2124 = vmatprep.subr.bf16.mxu0 0
    %2125 = vmatpush1.bf16.msra.mxu0 0
    %2126 = vmatprep.subr.bf16.mxu0 0
    %2127 = vmatpush1.bf16.msra.mxu0 0
    %2128 = vmatprep.subr.bf16.mxu0 0
    %2129 = vmatpush1.bf16.msra.mxu0 0
    %2130 = vmatprep.subr.bf16.mxu0 0
    %2131 = vmatpush1.bf16.msra.mxu0 0
    %2132 = vmatprep.subr.bf16.mxu0 0
    %2133 = vmatpush1.bf16.msra.mxu0 0
    %2134 = vmatprep.subr.bf16.mxu0 0
    %2135 = vmatpush1.bf16.msra.mxu0 0
    %2136 = vmatprep.subr.bf16.mxu0 0
    %2137 = vmatpush1.bf16.msra.mxu0 0
    %2138 = vmatprep.mubr.bf16.mxu0 0
    %2139 = vmatmul.mubr.bf16.gmra.mrb[0].mxu0 %v2105
    %v2140 = vpop.f32.mrb[0].mxu0
    %v2141 = vadd.f32 %v627, %v2140
    %v2142 = vpop.f32.mrb[0].mxu0
    %v2143 = vadd.f32 %v631, %v2142
    %v2144 = vpop.f32.mrb[0].mxu0
    %v2145 = vpop.f32.mrb[0].mxu0
    %2146 = vdwg.mxu0
    %2147 = vmatprep.subr.bf16.mxu0 0
    %2148 = vmatpush1.bf16.msra.mxu0 %v721
    %2149 = vmatprep.subr.bf16.mxu0 0
    %2150 = vmatpush1.bf16.msra.mxu0 %v724
    %2151 = vmatprep.subr.bf16.mxu0 0
    %2152 = vmatpush1.bf16.msra.mxu0 %v727
    %2153 = vmatprep.subr.bf16.mxu0 0
    %2154 = vmatpush1.bf16.msra.mxu0 %v730
    %2155 = vmatprep.subr.bf16.mxu0 0
    %2156 = vmatpush1.bf16.msra.mxu0 %v733
    %2157 = vmatprep.subr.bf16.mxu0 0
    %2158 = vmatpush1.bf16.msra.mxu0 %v736
    %2159 = vmatprep.subr.bf16.mxu0 0
    %2160 = vmatpush1.bf16.msra.mxu0 %v739
    %2161 = vmatprep.subr.bf16.mxu0 0
    %2162 = vmatpush1.bf16.msra.mxu0 %v742
    %2163 = vmatprep.subr.bf16.mxu0 0
    %2164 = vmatpush1.bf16.msra.mxu0 0
    %2165 = vmatprep.subr.bf16.mxu0 0
    %2166 = vmatpush1.bf16.msra.mxu0 0
    %2167 = vmatprep.subr.bf16.mxu0 0
    %2168 = vmatpush1.bf16.msra.mxu0 0
    %2169 = vmatprep.subr.bf16.mxu0 0
    %2170 = vmatpush1.bf16.msra.mxu0 0
    %2171 = vmatprep.subr.bf16.mxu0 0
    %2172 = vmatpush1.bf16.msra.mxu0 0
    %2173 = vmatprep.subr.bf16.mxu0 0
    %2174 = vmatpush1.bf16.msra.mxu0 0
    %2175 = vmatprep.subr.bf16.mxu0 0
    %2176 = vmatpush1.bf16.msra.mxu0 0
    %2177 = vmatprep.subr.bf16.mxu0 0
    %2178 = vmatpush1.bf16.msra.mxu0 0
    %2179 = vmatprep.mubr.bf16.mxu0 0
    %2180 = vmatmul.mubr.bf16.gmra.mrb[0].mxu0 %v2105
    %v2181 = vpop.f32.mrb[0].mxu0
    %v2182 = vadd.f32 %v635, %v2181
    %v2183 = vpop.f32.mrb[0].mxu0
    %v2184 = vpop.f32.mrb[0].mxu0
    %v2185 = vpop.f32.mrb[0].mxu0
    %2186 = vdwg.mxu0
    %v2187 = vpack.c.bf16 %v1997, %v1997
    %2188 = vmatprep.subr.bf16.mxu0 %v962
    %2189 = vmatpush1.bf16.msra.mxu0 %v961
    %2190 = vmatprep.subr.bf16.mxu0 %v965
    %2191 = vmatpush1.bf16.msra.mxu0 %v964
    %2192 = vmatprep.subr.bf16.mxu0 %v968
    %2193 = vmatpush1.bf16.msra.mxu0 %v967
    %2194 = vmatprep.subr.bf16.mxu0 %v971
    %2195 = vmatpush1.bf16.msra.mxu0 %v970
    %2196 = vmatprep.subr.bf16.mxu0 %v974
    %2197 = vmatpush1.bf16.msra.mxu0 %v973
    %2198 = vmatprep.subr.bf16.mxu0 %v977
    %2199 = vmatpush1.bf16.msra.mxu0 %v976
    %2200 = vmatprep.subr.bf16.mxu0 %v980
    %2201 = vmatpush1.bf16.msra.mxu0 %v979
    %2202 = vmatprep.subr.bf16.mxu0 %v983
    %2203 = vmatpush1.bf16.msra.mxu0 %v982
    %2204 = vmatprep.subr.bf16.mxu0 0
    %2205 = vmatpush1.bf16.msra.mxu0 0
    %2206 = vmatprep.subr.bf16.mxu0 0
    %2207 = vmatpush1.bf16.msra.mxu0 0
    %2208 = vmatprep.subr.bf16.mxu0 0
    %2209 = vmatpush1.bf16.msra.mxu0 0
    %2210 = vmatprep.subr.bf16.mxu0 0
    %2211 = vmatpush1.bf16.msra.mxu0 0
    %2212 = vmatprep.subr.bf16.mxu0 0
    %2213 = vmatpush1.bf16.msra.mxu0 0
    %2214 = vmatprep.subr.bf16.mxu0 0
    %2215 = vmatpush1.bf16.msra.mxu0 0
    %2216 = vmatprep.subr.bf16.mxu0 0
    %2217 = vmatpush1.bf16.msra.mxu0 0
    %2218 = vmatprep.subr.bf16.mxu0 0
    %2219 = vmatpush1.bf16.msra.mxu0 0
    %2220 = vmatprep.mubr.bf16.mxu0 0
    %2221 = vmatmul.mubr.bf16.gmra.mrb[0].mxu0 %v2187
    %v2222 = vpop.f32.mrb[0].mxu0
    %v2223 = vadd.f32 0.0, %v2222
    %v2224 = vpop.f32.mrb[0].mxu0
    %v2225 = vadd.f32 0.0, %v2224
    %v2226 = vpop.f32.mrb[0].mxu0
    %v2227 = vpop.f32.mrb[0].mxu0
    %2228 = vdwg.mxu0
    %2229 = vmatprep.subr.bf16.mxu0 0
    %2230 = vmatpush1.bf16.msra.mxu0 %v963
    %2231 = vmatprep.subr.bf16.mxu0 0
    %2232 = vmatpush1.bf16.msra.mxu0 %v966
    %2233 = vmatprep.subr.bf16.mxu0 0
    %2234 = vmatpush1.bf16.msra.mxu0 %v969
    %2235 = vmatprep.subr.bf16.mxu0 0
    %2236 = vmatpush1.bf16.msra.mxu0 %v972
    %2237 = vmatprep.subr.bf16.mxu0 0
    %2238 = vmatpush1.bf16.msra.mxu0 %v975
    %2239 = vmatprep.subr.bf16.mxu0 0
    %2240 = vmatpush1.bf16.msra.mxu0 %v978
    %2241 = vmatprep.subr.bf16.mxu0 0
    %2242 = vmatpush1.bf16.msra.mxu0 %v981
    %2243 = vmatprep.subr.bf16.mxu0 0
    %2244 = vmatpush1.bf16.msra.mxu0 %v984
    %2245 = vmatprep.subr.bf16.mxu0 0
    %2246 = vmatpush1.bf16.msra.mxu0 0
    %2247 = vmatprep.subr.bf16.mxu0 0
    %2248 = vmatpush1.bf16.msra.mxu0 0
    %2249 = vmatprep.subr.bf16.mxu0 0
    %2250 = vmatpush1.bf16.msra.mxu0 0
    %2251 = vmatprep.subr.bf16.mxu0 0
    %2252 = vmatpush1.bf16.msra.mxu0 0
    %2253 = vmatprep.subr.bf16.mxu0 0
    %2254 = vmatpush1.bf16.msra.mxu0 0
    %2255 = vmatprep.subr.bf16.mxu0 0
    %2256 = vmatpush1.bf16.msra.mxu0 0
    %2257 = vmatprep.subr.bf16.mxu0 0
    %2258 = vmatpush1.bf16.msra.mxu0 0
    %2259 = vmatprep.subr.bf16.mxu0 0
    %2260 = vmatpush1.bf16.msra.mxu0 0
    %2261 = vmatprep.mubr.bf16.mxu0 0
    %2262 = vmatmul.mubr.bf16.gmra.mrb[0].mxu0 %v2187
    %v2263 = vpop.f32.mrb[0].mxu0
    %v2264 = vadd.f32 0.0, %v2263
    %v2265 = vpop.f32.mrb[0].mxu0
    %v2266 = vpop.f32.mrb[0].mxu0
    %v2267 = vpop.f32.mrb[0].mxu0
    %2268 = vdwg.mxu0
    %v2269 = vadd.f32 %v2141, %v2223
    %v2270 = vxor.u32 %v2269, 2147483648
    %v2271 = vmul.f32 %v2270, 1.442695
    %v2272 = vpow.pop %v2271
    %v2273 = vadd.f32 %v2272, 1.0
    %v2274 = vrcp.pop %v2273
    %v2275 = vmul.f32 1.0, %v2274
    %v2276 = vadd.f32 %v2143, %v2225
    %v2277 = vxor.u32 %v2276, 2147483648
    %v2278 = vmul.f32 %v2277, 1.442695
    %v2279 = vpow.pop %v2278
    %v2280 = vadd.f32 %v2279, 1.0
    %v2281 = vrcp.pop %v2280
    %v2282 = vmul.f32 1.0, %v2281
    %v2283 = vadd.f32 %v2264, %v1109
    %v2284 = vmul.f32 %v2275, %v2283
    %v2285 = vadd.f32 %v2182, %v2284
    %v2286 = vtanh.pop %v2285
    %v2287 = vsub.f32 1.0, %v2282
    %v2288 = vmul.f32 %v2287, %v2286
    %v2289 = vmul.f32 %v2282, %v1997
    %v2290 = vadd.f32 %v2288, %v2289
    %s2291 = scalar_lea.vmem [#allocation2], 120
    %v2292 = vld [vmem:[%s2291] sm:$0xff]
    %v2293 = vld [vmem:[%s2291 + $0x8] sm:$0xff]
    %v2294 = vld [vmem:[%s2291 + $0x10] sm:$0xff]
    %2295 = vmatprep.subr.bf16.mxu0 %v432
    %2296 = vmatpush1.bf16.msra.mxu0 %v431
    %2297 = vmatprep.subr.bf16.mxu0 %v435
    %2298 = vmatpush1.bf16.msra.mxu0 %v434
    %2299 = vmatprep.subr.bf16.mxu0 %v438
    %2300 = vmatpush1.bf16.msra.mxu0 %v437
    %2301 = vmatprep.subr.bf16.mxu0 %v441
    %2302 = vmatpush1.bf16.msra.mxu0 %v440
    %2303 = vmatprep.subr.bf16.mxu0 %v444
    %2304 = vmatpush1.bf16.msra.mxu0 %v443
    %2305 = vmatprep.subr.bf16.mxu0 %v447
    %2306 = vmatpush1.bf16.msra.mxu0 %v446
    %2307 = vmatprep.subr.bf16.mxu0 %v450
    %2308 = vmatpush1.bf16.msra.mxu0 %v449
    %2309 = vmatprep.subr.bf16.mxu0 %v453
    %2310 = vmatpush1.bf16.msra.mxu0 %v452
    %2311 = vmatprep.subr.bf16.mxu0 0
    %2312 = vmatpush1.bf16.msra.mxu0 0
    %2313 = vmatprep.subr.bf16.mxu0 0
    %2314 = vmatpush1.bf16.msra.mxu0 0
    %2315 = vmatprep.subr.bf16.mxu0 0
    %2316 = vmatpush1.bf16.msra.mxu0 0
    %2317 = vmatprep.subr.bf16.mxu0 0
    %2318 = vmatpush1.bf16.msra.mxu0 0
    %2319 = vmatprep.subr.bf16.mxu0 0
    %2320 = vmatpush1.bf16.msra.mxu0 0
    %2321 = vmatprep.subr.bf16.mxu0 0
    %2322 = vmatpush1.bf16.msra.mxu0 0
    %2323 = vmatprep.subr.bf16.mxu0 0
    %2324 = vmatpush1.bf16.msra.mxu0 0
    %2325 = vmatprep.subr.bf16.mxu0 0
    %2326 = vmatpush1.bf16.msra.mxu0 0
    %2327 = vmatprep.mubr.bf16.mxu0 0
    %2328 = vmatmul.mubr.bf16.gmra.mrb[0].mxu0 %v2105
    %v2329 = vpop.f32.mrb[0].mxu0
    %v2330 = vadd.f32 0.0, %v2329
    %v2331 = vpop.f32.mrb[0].mxu0
    %v2332 = vadd.f32 0.0, %v2331
    %v2333 = vpop.f32.mrb[0].mxu0
    %v2334 = vpop.f32.mrb[0].mxu0
    %2335 = vdwg.mxu0
    %2336 = vmatprep.subr.bf16.mxu0 0
    %2337 = vmatpush1.bf16.msra.mxu0 %v433
    %2338 = vmatprep.subr.bf16.mxu0 0
    %2339 = vmatpush1.bf16.msra.mxu0 %v436
    %2340 = vmatprep.subr.bf16.mxu0 0
    %2341 = vmatpush1.bf16.msra.mxu0 %v439
    %2342 = vmatprep.subr.bf16.mxu0 0
    %2343 = vmatpush1.bf16.msra.mxu0 %v442
    %2344 = vmatprep.subr.bf16.mxu0 0
    %2345 = vmatpush1.bf16.msra.mxu0 %v445
    %2346 = vmatprep.subr.bf16.mxu0 0
    %2347 = vmatpush1.bf16.msra.mxu0 %v448
    %2348 = vmatprep.subr.bf16.mxu0 0
    %2349 = vmatpush1.bf16.msra.mxu0 %v451
    %2350 = vmatprep.subr.bf16.mxu0 0
    %2351 = vmatpush1.bf16.msra.mxu0 %v454
    %2352 = vmatprep.subr.bf16.mxu0 0
    %2353 = vmatpush1.bf16.msra.mxu0 0
    %2354 = vmatprep.subr.bf16.mxu0 0
    %2355 = vmatpush1.bf16.msra.mxu0 0
    %2356 = vmatprep.subr.bf16.mxu0 0
    %2357 = vmatpush1.bf16.msra.mxu0 0
    %2358 = vmatprep.subr.bf16.mxu0 0
    %2359 = vmatpush1.bf16.msra.mxu0 0
    %2360 = vmatprep.subr.bf16.mxu0 0
    %2361 = vmatpush1.bf16.msra.mxu0 0
    %2362 = vmatprep.subr.bf16.mxu0 0
    %2363 = vmatpush1.bf16.msra.mxu0 0
    %2364 = vmatprep.subr.bf16.mxu0 0
    %2365 = vmatpush1.bf16.msra.mxu0 0
    %2366 = vmatprep.subr.bf16.mxu0 0
    %2367 = vmatpush1.bf16.msra.mxu0 0
    %2368 = vmatprep.mubr.bf16.mxu0 0
    %2369 = vmatmul.mubr.bf16.gmra.mrb[0].mxu0 %v2105
    %v2370 = vpop.f32.mrb[0].mxu0
    %v2371 = vadd.f32 0.0, %v2370
    %v2372 = vpop.f32.mrb[0].mxu0
    %v2373 = vpop.f32.mrb[0].mxu0
    %v2374 = vpop.f32.mrb[0].mxu0
    %2375 = vdwg.mxu0
    %v2376 = vadd.f32 %v2292, %v2330
    %v2377 = vxor.u32 %v2376, 2147483648
    %v2378 = vmul.f32 %v2377, 1.442695
    %v2379 = vpow.pop %v2378
    %v2380 = vadd.f32 %v2379, 1.0
    %v2381 = vrcp.pop %v2380
    %v2382 = vmul.f32 1.0, %v2381
    %v2383 = vadd.f32 %v2293, %v2332
    %v2384 = vxor.u32 %v2383, 2147483648
    %v2385 = vmul.f32 %v2384, 1.442695
    %v2386 = vpow.pop %v2385
    %v2387 = vadd.f32 %v2386, 1.0
    %v2388 = vrcp.pop %v2387
    %v2389 = vmul.f32 1.0, %v2388
    %v2390 = vadd.f32 %v2371, %v579
    %v2391 = vmul.f32 %v2382, %v2390
    %v2392 = vadd.f32 %v2294, %v2391
    %v2393 = vtanh.pop %v2392
    %v2394 = vsub.f32 1.0, %v2389
    %v2395 = vmul.f32 %v2394, %v2393
    %v2396 = vmul.f32 %v2389, %v2104
    %v2397 = vadd.f32 %v2395, %v2396
    %v2398 = vpack.c.bf16 %v2397, %v2397
    %2399 = vmatprep.subr.bf16.mxu0 %v720
    %2400 = vmatpush1.bf16.msra.mxu0 %v719
    %2401 = vmatprep.subr.bf16.mxu0 %v723
    %2402 = vmatpush1.bf16.msra.mxu0 %v722
    %2403 = vmatprep.subr.bf16.mxu0 %v726
    %2404 = vmatpush1.bf16.msra.mxu0 %v725
    %2405 = vmatprep.subr.bf16.mxu0 %v729
    %2406 = vmatpush1.bf16.msra.mxu0 %v728
    %2407 = vmatprep.subr.bf16.mxu0 %v732
    %2408 = vmatpush1.bf16.msra.mxu0 %v731
    %2409 = vmatprep.subr.bf16.mxu0 %v735
    %2410 = vmatpush1.bf16.msra.mxu0 %v734
    %2411 = vmatprep.subr.bf16.mxu0 %v738
    %2412 = vmatpush1.bf16.msra.mxu0 %v737
    %2413 = vmatprep.subr.bf16.mxu0 %v741
    %2414 = vmatpush1.bf16.msra.mxu0 %v740
    %2415 = vmatprep.subr.bf16.mxu0 0
    %2416 = vmatpush1.bf16.msra.mxu0 0
    %2417 = vmatprep.subr.bf16.mxu0 0
    %2418 = vmatpush1.bf16.msra.mxu0 0
    %2419 = vmatprep.subr.bf16.mxu0 0
    %2420 = vmatpush1.bf16.msra.mxu0 0
    %2421 = vmatprep.subr.bf16.mxu0 0
    %2422 = vmatpush1.bf16.msra.mxu0 0
    %2423 = vmatprep.subr.bf16.mxu0 0
    %2424 = vmatpush1.bf16.msra.mxu0 0
    %2425 = vmatprep.subr.bf16.mxu0 0
    %2426 = vmatpush1.bf16.msra.mxu0 0
    %2427 = vmatprep.subr.bf16.mxu0 0
    %2428 = vmatpush1.bf16.msra.mxu0 0
    %2429 = vmatprep.subr.bf16.mxu0 0
    %2430 = vmatpush1.bf16.msra.mxu0 0
    %2431 = vmatprep.mubr.bf16.mxu0 0
    %2432 = vmatmul.mubr.bf16.gmra.mrb[0].mxu0 %v2398
    %v2433 = vpop.f32.mrb[0].mxu0
    %v2434 = vadd.f32 %v627, %v2433
    %v2435 = vpop.f32.mrb[0].mxu0
    %v2436 = vadd.f32 %v631, %v2435
    %v2437 = vpop.f32.mrb[0].mxu0
    %v2438 = vpop.f32.mrb[0].mxu0
    %2439 = vdwg.mxu0
    %2440 = vmatprep.subr.bf16.mxu0 0
    %2441 = vmatpush1.bf16.msra.mxu0 %v721
    %2442 = vmatprep.subr.bf16.mxu0 0
    %2443 = vmatpush1.bf16.msra.mxu0 %v724
    %2444 = vmatprep.subr.bf16.mxu0 0
    %2445 = vmatpush1.bf16.msra.mxu0 %v727
    %2446 = vmatprep.subr.bf16.mxu0 0
    %2447 = vmatpush1.bf16.msra.mxu0 %v730
    %2448 = vmatprep.subr.bf16.mxu0 0
    %2449 = vmatpush1.bf16.msra.mxu0 %v733
    %2450 = vmatprep.subr.bf16.mxu0 0
    %2451 = vmatpush1.bf16.msra.mxu0 %v736
    %2452 = vmatprep.subr.bf16.mxu0 0
    %2453 = vmatpush1.bf16.msra.mxu0 %v739
    %2454 = vmatprep.subr.bf16.mxu0 0
    %2455 = vmatpush1.bf16.msra.mxu0 %v742
    %2456 = vmatprep.subr.bf16.mxu0 0
    %2457 = vmatpush1.bf16.msra.mxu0 0
    %2458 = vmatprep.subr.bf16.mxu0 0
    %2459 = vmatpush1.bf16.msra.mxu0 0
    %2460 = vmatprep.subr.bf16.mxu0 0
    %2461 = vmatpush1.bf16.msra.mxu0 0
    %2462 = vmatprep.subr.bf16.mxu0 0
    %2463 = vmatpush1.bf16.msra.mxu0 0
    %2464 = vmatprep.subr.bf16.mxu0 0
    %2465 = vmatpush1.bf16.msra.mxu0 0
    %2466 = vmatprep.subr.bf16.mxu0 0
    %2467 = vmatpush1.bf16.msra.mxu0 0
    %2468 = vmatprep.subr.bf16.mxu0 0
    %2469 = vmatpush1.bf16.msra.mxu0 0
    %2470 = vmatprep.subr.bf16.mxu0 0
    %2471 = vmatpush1.bf16.msra.mxu0 0
    %2472 = vmatprep.mubr.bf16.mxu0 0
    %2473 = vmatmul.mubr.bf16.gmra.mrb[0].mxu0 %v2398
    %v2474 = vpop.f32.mrb[0].mxu0
    %v2475 = vadd.f32 %v635, %v2474
    %v2476 = vpop.f32.mrb[0].mxu0
    %v2477 = vpop.f32.mrb[0].mxu0
    %v2478 = vpop.f32.mrb[0].mxu0
    %2479 = vdwg.mxu0
    %v2480 = vpack.c.bf16 %v2290, %v2290
    %2481 = vmatprep.subr.bf16.mxu0 %v962
    %2482 = vmatpush1.bf16.msra.mxu0 %v961
    %2483 = vmatprep.subr.bf16.mxu0 %v965
    %2484 = vmatpush1.bf16.msra.mxu0 %v964
    %2485 = vmatprep.subr.bf16.mxu0 %v968
    %2486 = vmatpush1.bf16.msra.mxu0 %v967
    %2487 = vmatprep.subr.bf16.mxu0 %v971
    %2488 = vmatpush1.bf16.msra.mxu0 %v970
    %2489 = vmatprep.subr.bf16.mxu0 %v974
    %2490 = vmatpush1.bf16.msra.mxu0 %v973
    %2491 = vmatprep.subr.bf16.mxu0 %v977
    %2492 = vmatpush1.bf16.msra.mxu0 %v976
    %2493 = vmatprep.subr.bf16.mxu0 %v980
    %2494 = vmatpush1.bf16.msra.mxu0 %v979
    %2495 = vmatprep.subr.bf16.mxu0 %v983
    %2496 = vmatpush1.bf16.msra.mxu0 %v982
    %2497 = vmatprep.subr.bf16.mxu0 0
    %2498 = vmatpush1.bf16.msra.mxu0 0
    %2499 = vmatprep.subr.bf16.mxu0 0
    %2500 = vmatpush1.bf16.msra.mxu0 0
    %2501 = vmatprep.subr.bf16.mxu0 0
    %2502 = vmatpush1.bf16.msra.mxu0 0
    %2503 = vmatprep.subr.bf16.mxu0 0
    %2504 = vmatpush1.bf16.msra.mxu0 0
    %2505 = vmatprep.subr.bf16.mxu0 0
    %2506 = vmatpush1.bf16.msra.mxu0 0
    %2507 = vmatprep.subr.bf16.mxu0 0
    %2508 = vmatpush1.bf16.msra.mxu0 0
    %2509 = vmatprep.subr.bf16.mxu0 0
    %2510 = vmatpush1.bf16.msra.mxu0 0
    %2511 = vmatprep.subr.bf16.mxu0 0
    %2512 = vmatpush1.bf16.msra.mxu0 0
    %2513 = vmatprep.mubr.bf16.mxu0 0
    %2514 = vmatmul.mubr.bf16.gmra.mrb[0].mxu0 %v2480
    %v2515 = vpop.f32.mrb[0].mxu0
    %v2516 = vadd.f32 0.0, %v2515
    %v2517 = vpop.f32.mrb[0].mxu0
    %v2518 = vadd.f32 0.0, %v2517
    %v2519 = vpop.f32.mrb[0].mxu0
    %v2520 = vpop.f32.mrb[0].mxu0
    %2521 = vdwg.mxu0
    %2522 = vmatprep.subr.bf16.mxu0 0
    %2523 = vmatpush1.bf16.msra.mxu0 %v963
    %2524 = vmatprep.subr.bf16.mxu0 0
    %2525 = vmatpush1.bf16.msra.mxu0 %v966
    %2526 = vmatprep.subr.bf16.mxu0 0
    %2527 = vmatpush1.bf16.msra.mxu0 %v969
    %2528 = vmatprep.subr.bf16.mxu0 0
    %2529 = vmatpush1.bf16.msra.mxu0 %v972
    %2530 = vmatprep.subr.bf16.mxu0 0
    %2531 = vmatpush1.bf16.msra.mxu0 %v975
    %2532 = vmatprep.subr.bf16.mxu0 0
    %2533 = vmatpush1.bf16.msra.mxu0 %v978
    %2534 = vmatprep.subr.bf16.mxu0 0
    %2535 = vmatpush1.bf16.msra.mxu0 %v981
    %2536 = vmatprep.subr.bf16.mxu0 0
    %2537 = vmatpush1.bf16.msra.mxu0 %v984
    %2538 = vmatprep.subr.bf16.mxu0 0
    %2539 = vmatpush1.bf16.msra.mxu0 0
    %2540 = vmatprep.subr.bf16.mxu0 0
    %2541 = vmatpush1.bf16.msra.mxu0 0
    %2542 = vmatprep.subr.bf16.mxu0 0
    %2543 = vmatpush1.bf16.msra.mxu0 0
    %2544 = vmatprep.subr.bf16.mxu0 0
    %2545 = vmatpush1.bf16.msra.mxu0 0
    %2546 = vmatprep.subr.bf16.mxu0 0
    %2547 = vmatpush1.bf16.msra.mxu0 0
    %2548 = vmatprep.subr.bf16.mxu0 0
    %2549 = vmatpush1.bf16.msra.mxu0 0
    %2550 = vmatprep.subr.bf16.mxu0 0
    %2551 = vmatpush1.bf16.msra.mxu0 0
    %2552 = vmatprep.subr.bf16.mxu0 0
    %2553 = vmatpush1.bf16.msra.mxu0 0
    %2554 = vmatprep.mubr.bf16.mxu0 0
    %2555 = vmatmul.mubr.bf16.gmra.mrb[0].mxu0 %v2480
    %v2556 = vpop.f32.mrb[0].mxu0
    %v2557 = vadd.f32 0.0, %v2556
    %v2558 = vpop.f32.mrb[0].mxu0
    %v2559 = vpop.f32.mrb[0].mxu0
    %v2560 = vpop.f32.mrb[0].mxu0
    %2561 = vdwg.mxu0
    %v2562 = vadd.f32 %v2434, %v2516
    %v2563 = vxor.u32 %v2562, 2147483648
    %v2564 = vmul.f32 %v2563, 1.442695
    %v2565 = vpow.pop %v2564
    %v2566 = vadd.f32 %v2565, 1.0
    %v2567 = vrcp.pop %v2566
    %v2568 = vmul.f32 1.0, %v2567
    %v2569 = vadd.f32 %v2436, %v2518
    %v2570 = vxor.u32 %v2569, 2147483648
    %v2571 = vmul.f32 %v2570, 1.442695
    %v2572 = vpow.pop %v2571
    %v2573 = vadd.f32 %v2572, 1.0
    %v2574 = vrcp.pop %v2573
    %v2575 = vmul.f32 1.0, %v2574
    %v2576 = vadd.f32 %v2557, %v1109
    %v2577 = vmul.f32 %v2568, %v2576
    %v2578 = vadd.f32 %v2475, %v2577
    %v2579 = vtanh.pop %v2578
    %v2580 = vsub.f32 1.0, %v2575
    %v2581 = vmul.f32 %v2580, %v2579
    %v2582 = vmul.f32 %v2575, %v2290
    %v2583 = vadd.f32 %v2581, %v2582
    %s2584 = scalar_lea.vmem [#allocation2], 144
    %v2585 = vld [vmem:[%s2584] sm:$0xff]
    %v2586 = vld [vmem:[%s2584 + $0x8] sm:$0xff]
    %v2587 = vld [vmem:[%s2584 + $0x10] sm:$0xff]
    %2588 = vmatprep.subr.bf16.mxu0 %v432
    %2589 = vmatpush1.bf16.msra.mxu0 %v431
    %2590 = vmatprep.subr.bf16.mxu0 %v435
    %2591 = vmatpush1.bf16.msra.mxu0 %v434
    %2592 = vmatprep.subr.bf16.mxu0 %v438
    %2593 = vmatpush1.bf16.msra.mxu0 %v437
    %2594 = vmatprep.subr.bf16.mxu0 %v441
    %2595 = vmatpush1.bf16.msra.mxu0 %v440
    %2596 = vmatprep.subr.bf16.mxu0 %v444
    %2597 = vmatpush1.bf16.msra.mxu0 %v443
    %2598 = vmatprep.subr.bf16.mxu0 %v447
    %2599 = vmatpush1.bf16.msra.mxu0 %v446
    %2600 = vmatprep.subr.bf16.mxu0 %v450
    %2601 = vmatpush1.bf16.msra.mxu0 %v449
    %2602 = vmatprep.subr.bf16.mxu0 %v453
    %2603 = vmatpush1.bf16.msra.mxu0 %v452
    %2604 = vmatprep.subr.bf16.mxu0 0
    %2605 = vmatpush1.bf16.msra.mxu0 0
    %2606 = vmatprep.subr.bf16.mxu0 0
    %2607 = vmatpush1.bf16.msra.mxu0 0
    %2608 = vmatprep.subr.bf16.mxu0 0
    %2609 = vmatpush1.bf16.msra.mxu0 0
    %2610 = vmatprep.subr.bf16.mxu0 0
    %2611 = vmatpush1.bf16.msra.mxu0 0
    %2612 = vmatprep.subr.bf16.mxu0 0
    %2613 = vmatpush1.bf16.msra.mxu0 0
    %2614 = vmatprep.subr.bf16.mxu0 0
    %2615 = vmatpush1.bf16.msra.mxu0 0
    %2616 = vmatprep.subr.bf16.mxu0 0
    %2617 = vmatpush1.bf16.msra.mxu0 0
    %2618 = vmatprep.subr.bf16.mxu0 0
    %2619 = vmatpush1.bf16.msra.mxu0 0
    %2620 = vmatprep.mubr.bf16.mxu0 0
    %2621 = vmatmul.mubr.bf16.gmra.mrb[0].mxu0 %v2398
    %v2622 = vpop.f32.mrb[0].mxu0
    %v2623 = vadd.f32 0.0, %v2622
    %v2624 = vpop.f32.mrb[0].mxu0
    %v2625 = vadd.f32 0.0, %v2624
    %v2626 = vpop.f32.mrb[0].mxu0
    %v2627 = vpop.f32.mrb[0].mxu0
    %2628 = vdwg.mxu0
    %2629 = vmatprep.subr.bf16.mxu0 0
    %2630 = vmatpush1.bf16.msra.mxu0 %v433
    %2631 = vmatprep.subr.bf16.mxu0 0
    %2632 = vmatpush1.bf16.msra.mxu0 %v436
    %2633 = vmatprep.subr.bf16.mxu0 0
    %2634 = vmatpush1.bf16.msra.mxu0 %v439
    %2635 = vmatprep.subr.bf16.mxu0 0
    %2636 = vmatpush1.bf16.msra.mxu0 %v442
    %2637 = vmatprep.subr.bf16.mxu0 0
    %2638 = vmatpush1.bf16.msra.mxu0 %v445
    %2639 = vmatprep.subr.bf16.mxu0 0
    %2640 = vmatpush1.bf16.msra.mxu0 %v448
    %2641 = vmatprep.subr.bf16.mxu0 0
    %2642 = vmatpush1.bf16.msra.mxu0 %v451
    %2643 = vmatprep.subr.bf16.mxu0 0
    %2644 = vmatpush1.bf16.msra.mxu0 %v454
    %2645 = vmatprep.subr.bf16.mxu0 0
    %2646 = vmatpush1.bf16.msra.mxu0 0
    %2647 = vmatprep.subr.bf16.mxu0 0
    %2648 = vmatpush1.bf16.msra.mxu0 0
    %2649 = vmatprep.subr.bf16.mxu0 0
    %2650 = vmatpush1.bf16.msra.mxu0 0
    %2651 = vmatprep.subr.bf16.mxu0 0
    %2652 = vmatpush1.bf16.msra.mxu0 0
    %2653 = vmatprep.subr.bf16.mxu0 0
    %2654 = vmatpush1.bf16.msra.mxu0 0
    %2655 = vmatprep.subr.bf16.mxu0 0
    %2656 = vmatpush1.bf16.msra.mxu0 0
    %2657 = vmatprep.subr.bf16.mxu0 0
    %2658 = vmatpush1.bf16.msra.mxu0 0
    %2659 = vmatprep.subr.bf16.mxu0 0
    %2660 = vmatpush1.bf16.msra.mxu0 0
    %2661 = vmatprep.mubr.bf16.mxu0 0
    %2662 = vmatmul.mubr.bf16.gmra.mrb[0].mxu0 %v2398
    %v2663 = vpop.f32.mrb[0].mxu0
    %v2664 = vadd.f32 0.0, %v2663
    %v2665 = vpop.f32.mrb[0].mxu0
    %v2666 = vpop.f32.mrb[0].mxu0
    %v2667 = vpop.f32.mrb[0].mxu0
    %2668 = vdwg.mxu0
    %v2669 = vadd.f32 %v2585, %v2623
    %v2670 = vxor.u32 %v2669, 2147483648
    %v2671 = vmul.f32 %v2670, 1.442695
    %v2672 = vpow.pop %v2671
    %v2673 = vadd.f32 %v2672, 1.0
    %v2674 = vrcp.pop %v2673
    %v2675 = vmul.f32 1.0, %v2674
    %v2676 = vadd.f32 %v2586, %v2625
    %v2677 = vxor.u32 %v2676, 2147483648
    %v2678 = vmul.f32 %v2677, 1.442695
    %v2679 = vpow.pop %v2678
    %v2680 = vadd.f32 %v2679, 1.0
    %v2681 = vrcp.pop %v2680
    %v2682 = vmul.f32 1.0, %v2681
    %v2683 = vadd.f32 %v2664, %v579
    %v2684 = vmul.f32 %v2675, %v2683
    %v2685 = vadd.f32 %v2587, %v2684
    %v2686 = vtanh.pop %v2685
    %v2687 = vsub.f32 1.0, %v2682
    %v2688 = vmul.f32 %v2687, %v2686
    %v2689 = vmul.f32 %v2682, %v2397
    %v2690 = vadd.f32 %v2688, %v2689
    %v2691 = vpack.c.bf16 %v2690, %v2690
    %2692 = vmatprep.subr.bf16.mxu0 %v720
    %2693 = vmatpush1.bf16.msra.mxu0 %v719
    %2694 = vmatprep.subr.bf16.mxu0 %v723
    %2695 = vmatpush1.bf16.msra.mxu0 %v722
    %2696 = vmatprep.subr.bf16.mxu0 %v726
    %2697 = vmatpush1.bf16.msra.mxu0 %v725
    %2698 = vmatprep.subr.bf16.mxu0 %v729
    %2699 = vmatpush1.bf16.msra.mxu0 %v728
    %2700 = vmatprep.subr.bf16.mxu0 %v732
    %2701 = vmatpush1.bf16.msra.mxu0 %v731
    %2702 = vmatprep.subr.bf16.mxu0 %v735
    %2703 = vmatpush1.bf16.msra.mxu0 %v734
    %2704 = vmatprep.subr.bf16.mxu0 %v738
    %2705 = vmatpush1.bf16.msra.mxu0 %v737
    %2706 = vmatprep.subr.bf16.mxu0 %v741
    %2707 = vmatpush1.bf16.msra.mxu0 %v740
    %2708 = vmatprep.subr.bf16.mxu0 0
    %2709 = vmatpush1.bf16.msra.mxu0 0
    %2710 = vmatprep.subr.bf16.mxu0 0
    %2711 = vmatpush1.bf16.msra.mxu0 0
    %2712 = vmatprep.subr.bf16.mxu0 0
    %2713 = vmatpush1.bf16.msra.mxu0 0
    %2714 = vmatprep.subr.bf16.mxu0 0
    %2715 = vmatpush1.bf16.msra.mxu0 0
    %2716 = vmatprep.subr.bf16.mxu0 0
    %2717 = vmatpush1.bf16.msra.mxu0 0
    %2718 = vmatprep.subr.bf16.mxu0 0
    %2719 = vmatpush1.bf16.msra.mxu0 0
    %2720 = vmatprep.subr.bf16.mxu0 0
    %2721 = vmatpush1.bf16.msra.mxu0 0
    %2722 = vmatprep.subr.bf16.mxu0 0
    %2723 = vmatpush1.bf16.msra.mxu0 0
    %2724 = vmatprep.mubr.bf16.mxu0 0
    %2725 = vmatmul.mubr.bf16.gmra.mrb[0].mxu0 %v2691
    %v2726 = vpop.f32.mrb[0].mxu0
    %v2727 = vadd.f32 %v627, %v2726
    %v2728 = vpop.f32.mrb[0].mxu0
    %v2729 = vadd.f32 %v631, %v2728
    %v2730 = vpop.f32.mrb[0].mxu0
    %v2731 = vpop.f32.mrb[0].mxu0
    %2732 = vdwg.mxu0
    %2733 = vmatprep.subr.bf16.mxu0 0
    %2734 = vmatpush1.bf16.msra.mxu0 %v721
    %2735 = vmatprep.subr.bf16.mxu0 0
    %2736 = vmatpush1.bf16.msra.mxu0 %v724
    %2737 = vmatprep.subr.bf16.mxu0 0
    %2738 = vmatpush1.bf16.msra.mxu0 %v727
    %2739 = vmatprep.subr.bf16.mxu0 0
    %2740 = vmatpush1.bf16.msra.mxu0 %v730
    %2741 = vmatprep.subr.bf16.mxu0 0
    %2742 = vmatpush1.bf16.msra.mxu0 %v733
    %2743 = vmatprep.subr.bf16.mxu0 0
    %2744 = vmatpush1.bf16.msra.mxu0 %v736
    %2745 = vmatprep.subr.bf16.mxu0 0
    %2746 = vmatpush1.bf16.msra.mxu0 %v739
    %2747 = vmatprep.subr.bf16.mxu0 0
    %2748 = vmatpush1.bf16.msra.mxu0 %v742
    %2749 = vmatprep.subr.bf16.mxu0 0
    %2750 = vmatpush1.bf16.msra.mxu0 0
    %2751 = vmatprep.subr.bf16.mxu0 0
    %2752 = vmatpush1.bf16.msra.mxu0 0
    %2753 = vmatprep.subr.bf16.mxu0 0
    %2754 = vmatpush1.bf16.msra.mxu0 0
    %2755 = vmatprep.subr.bf16.mxu0 0
    %2756 = vmatpush1.bf16.msra.mxu0 0
    %2757 = vmatprep.subr.bf16.mxu0 0
    %2758 = vmatpush1.bf16.msra.mxu0 0
    %2759 = vmatprep.subr.bf16.mxu0 0
    %2760 = vmatpush1.bf16.msra.mxu0 0
    %2761 = vmatprep.subr.bf16.mxu0 0
    %2762 = vmatpush1.bf16.msra.mxu0 0
    %2763 = vmatprep.subr.bf16.mxu0 0
    %2764 = vmatpush1.bf16.msra.mxu0 0
    %2765 = vmatprep.mubr.bf16.mxu0 0
    %2766 = vmatmul.mubr.bf16.gmra.mrb[0].mxu0 %v2691
    %v2767 = vpop.f32.mrb[0].mxu0
    %v2768 = vadd.f32 %v635, %v2767
    %v2769 = vpop.f32.mrb[0].mxu0
    %v2770 = vpop.f32.mrb[0].mxu0
    %v2771 = vpop.f32.mrb[0].mxu0
    %2772 = vdwg.mxu0
    %v2773 = vpack.c.bf16 %v2583, %v2583
    %2774 = vmatprep.subr.bf16.mxu0 %v962
    %2775 = vmatpush1.bf16.msra.mxu0 %v961
    %2776 = vmatprep.subr.bf16.mxu0 %v965
    %2777 = vmatpush1.bf16.msra.mxu0 %v964
    %2778 = vmatprep.subr.bf16.mxu0 %v968
    %2779 = vmatpush1.bf16.msra.mxu0 %v967
    %2780 = vmatprep.subr.bf16.mxu0 %v971
    %2781 = vmatpush1.bf16.msra.mxu0 %v970
    %2782 = vmatprep.subr.bf16.mxu0 %v974
    %2783 = vmatpush1.bf16.msra.mxu0 %v973
    %2784 = vmatprep.subr.bf16.mxu0 %v977
    %2785 = vmatpush1.bf16.msra.mxu0 %v976
    %2786 = vmatprep.subr.bf16.mxu0 %v980
    %2787 = vmatpush1.bf16.msra.mxu0 %v979
    %2788 = vmatprep.subr.bf16.mxu0 %v983
    %2789 = vmatpush1.bf16.msra.mxu0 %v982
    %2790 = vmatprep.subr.bf16.mxu0 0
    %2791 = vmatpush1.bf16.msra.mxu0 0
    %2792 = vmatprep.subr.bf16.mxu0 0
    %2793 = vmatpush1.bf16.msra.mxu0 0
    %2794 = vmatprep.subr.bf16.mxu0 0
    %2795 = vmatpush1.bf16.msra.mxu0 0
    %2796 = vmatprep.subr.bf16.mxu0 0
    %2797 = vmatpush1.bf16.msra.mxu0 0
    %2798 = vmatprep.subr.bf16.mxu0 0
    %2799 = vmatpush1.bf16.msra.mxu0 0
    %2800 = vmatprep.subr.bf16.mxu0 0
    %2801 = vmatpush1.bf16.msra.mxu0 0
    %2802 = vmatprep.subr.bf16.mxu0 0
    %2803 = vmatpush1.bf16.msra.mxu0 0
    %2804 = vmatprep.subr.bf16.mxu0 0
    %2805 = vmatpush1.bf16.msra.mxu0 0
    %2806 = vmatprep.mubr.bf16.mxu0 0
    %2807 = vmatmul.mubr.bf16.gmra.mrb[0].mxu0 %v2773
    %v2808 = vpop.f32.mrb[0].mxu0
    %v2809 = vadd.f32 0.0, %v2808
    %v2810 = vpop.f32.mrb[0].mxu0
    %v2811 = vadd.f32 0.0, %v2810
    %v2812 = vpop.f32.mrb[0].mxu0
    %v2813 = vpop.f32.mrb[0].mxu0
    %2814 = vdwg.mxu0
    %2815 = vmatprep.subr.bf16.mxu0 0
    %2816 = vmatpush1.bf16.msra.mxu0 %v963
    %2817 = vmatprep.subr.bf16.mxu0 0
    %2818 = vmatpush1.bf16.msra.mxu0 %v966
    %2819 = vmatprep.subr.bf16.mxu0 0
    %2820 = vmatpush1.bf16.msra.mxu0 %v969
    %2821 = vmatprep.subr.bf16.mxu0 0
    %2822 = vmatpush1.bf16.msra.mxu0 %v972
    %2823 = vmatprep.subr.bf16.mxu0 0
    %2824 = vmatpush1.bf16.msra.mxu0 %v975
    %2825 = vmatprep.subr.bf16.mxu0 0
    %2826 = vmatpush1.bf16.msra.mxu0 %v978
    %2827 = vmatprep.subr.bf16.mxu0 0
    %2828 = vmatpush1.bf16.msra.mxu0 %v981
    %2829 = vmatprep.subr.bf16.mxu0 0
    %2830 = vmatpush1.bf16.msra.mxu0 %v984
    %2831 = vmatprep.subr.bf16.mxu0 0
    %2832 = vmatpush1.bf16.msra.mxu0 0
    %2833 = vmatprep.subr.bf16.mxu0 0
    %2834 = vmatpush1.bf16.msra.mxu0 0
    %2835 = vmatprep.subr.bf16.mxu0 0
    %2836 = vmatpush1.bf16.msra.mxu0 0
    %2837 = vmatprep.subr.bf16.mxu0 0
    %2838 = vmatpush1.bf16.msra.mxu0 0
    %2839 = vmatprep.subr.bf16.mxu0 0
    %2840 = vmatpush1.bf16.msra.mxu0 0
    %2841 = vmatprep.subr.bf16.mxu0 0
    %2842 = vmatpush1.bf16.msra.mxu0 0
    %2843 = vmatprep.subr.bf16.mxu0 0
    %2844 = vmatpush1.bf16.msra.mxu0 0
    %2845 = vmatprep.subr.bf16.mxu0 0
    %2846 = vmatpush1.bf16.msra.mxu0 0
    %2847 = vmatprep.mubr.bf16.mxu0 0
    %2848 = vmatmul.mubr.bf16.gmra.mrb[0].mxu0 %v2773
    %v2849 = vpop.f32.mrb[0].mxu0
    %v2850 = vadd.f32 0.0, %v2849
    %v2851 = vpop.f32.mrb[0].mxu0
    %v2852 = vpop.f32.mrb[0].mxu0
    %v2853 = vpop.f32.mrb[0].mxu0
    %2854 = vdwg.mxu0
    %v2855 = vadd.f32 %v2727, %v2809
    %v2856 = vxor.u32 %v2855, 2147483648
    %v2857 = vmul.f32 %v2856, 1.442695
    %v2858 = vpow.pop %v2857
    %v2859 = vadd.f32 %v2858, 1.0
    %v2860 = vrcp.pop %v2859
    %v2861 = vmul.f32 1.0, %v2860
    %v2862 = vadd.f32 %v2729, %v2811
    %v2863 = vxor.u32 %v2862, 2147483648
    %v2864 = vmul.f32 %v2863, 1.442695
    %v2865 = vpow.pop %v2864
    %v2866 = vadd.f32 %v2865, 1.0
    %v2867 = vrcp.pop %v2866
    %v2868 = vmul.f32 1.0, %v2867
    %v2869 = vadd.f32 %v2850, %v1109
    %v2870 = vmul.f32 %v2861, %v2869
    %v2871 = vadd.f32 %v2768, %v2870
    %v2872 = vtanh.pop %v2871
    %v2873 = vsub.f32 1.0, %v2868
    %v2874 = vmul.f32 %v2873, %v2872
    %v2875 = vmul.f32 %v2868, %v2583
    %v2876 = vadd.f32 %v2874, %v2875
    %s2877 = scalar_lea.vmem [#allocation2], 168
    %v2878 = vld [vmem:[%s2877] sm:$0xff]
    %v2879 = vld [vmem:[%s2877 + $0x8] sm:$0xff]
    %v2880 = vld [vmem:[%s2877 + $0x10] sm:$0xff]
    %2881 = vmatprep.subr.bf16.mxu0 %v432
    %2882 = vmatpush1.bf16.msra.mxu0 %v431
    %2883 = vmatprep.subr.bf16.mxu0 %v435
    %2884 = vmatpush1.bf16.msra.mxu0 %v434
    %2885 = vmatprep.subr.bf16.mxu0 %v438
    %2886 = vmatpush1.bf16.msra.mxu0 %v437
    %2887 = vmatprep.subr.bf16.mxu0 %v441
    %2888 = vmatpush1.bf16.msra.mxu0 %v440
    %2889 = vmatprep.subr.bf16.mxu0 %v444
    %2890 = vmatpush1.bf16.msra.mxu0 %v443
    %2891 = vmatprep.subr.bf16.mxu0 %v447
    %2892 = vmatpush1.bf16.msra.mxu0 %v446
    %2893 = vmatprep.subr.bf16.mxu0 %v450
    %2894 = vmatpush1.bf16.msra.mxu0 %v449
    %2895 = vmatprep.subr.bf16.mxu0 %v453
    %2896 = vmatpush1.bf16.msra.mxu0 %v452
    %2897 = vmatprep.subr.bf16.mxu0 0
    %2898 = vmatpush1.bf16.msra.mxu0 0
    %2899 = vmatprep.subr.bf16.mxu0 0
    %2900 = vmatpush1.bf16.msra.mxu0 0
    %2901 = vmatprep.subr.bf16.mxu0 0
    %2902 = vmatpush1.bf16.msra.mxu0 0
    %2903 = vmatprep.subr.bf16.mxu0 0
    %2904 = vmatpush1.bf16.msra.mxu0 0
    %2905 = vmatprep.subr.bf16.mxu0 0
    %2906 = vmatpush1.bf16.msra.mxu0 0
    %2907 = vmatprep.subr.bf16.mxu0 0
    %2908 = vmatpush1.bf16.msra.mxu0 0
    %2909 = vmatprep.subr.bf16.mxu0 0
    %2910 = vmatpush1.bf16.msra.mxu0 0
    %2911 = vmatprep.subr.bf16.mxu0 0
    %2912 = vmatpush1.bf16.msra.mxu0 0
    %2913 = vmatprep.mubr.bf16.mxu0 0
    %2914 = vmatmul.mubr.bf16.gmra.mrb[0].mxu0 %v2691
    %v2915 = vpop.f32.mrb[0].mxu0
    %v2916 = vadd.f32 0.0, %v2915
    %v2917 = vpop.f32.mrb[0].mxu0
    %v2918 = vadd.f32 0.0, %v2917
    %v2919 = vpop.f32.mrb[0].mxu0
    %v2920 = vpop.f32.mrb[0].mxu0
    %2921 = vdwg.mxu0
    %2922 = vmatprep.subr.bf16.mxu0 0
    %2923 = vmatpush1.bf16.msra.mxu0 %v433
    %2924 = vmatprep.subr.bf16.mxu0 0
    %2925 = vmatpush1.bf16.msra.mxu0 %v436
    %2926 = vmatprep.subr.bf16.mxu0 0
    %2927 = vmatpush1.bf16.msra.mxu0 %v439
    %2928 = vmatprep.subr.bf16.mxu0 0
    %2929 = vmatpush1.bf16.msra.mxu0 %v442
    %2930 = vmatprep.subr.bf16.mxu0 0
    %2931 = vmatpush1.bf16.msra.mxu0 %v445
    %2932 = vmatprep.subr.bf16.mxu0 0
    %2933 = vmatpush1.bf16.msra.mxu0 %v448
    %2934 = vmatprep.subr.bf16.mxu0 0
    %2935 = vmatpush1.bf16.msra.mxu0 %v451
    %2936 = vmatprep.subr.bf16.mxu0 0
    %2937 = vmatpush1.bf16.msra.mxu0 %v454
    %2938 = vmatprep.subr.bf16.mxu0 0
    %2939 = vmatpush1.bf16.msra.mxu0 0
    %2940 = vmatprep.subr.bf16.mxu0 0
    %2941 = vmatpush1.bf16.msra.mxu0 0
    %2942 = vmatprep.subr.bf16.mxu0 0
    %2943 = vmatpush1.bf16.msra.mxu0 0
    %2944 = vmatprep.subr.bf16.mxu0 0
    %2945 = vmatpush1.bf16.msra.mxu0 0
    %2946 = vmatprep.subr.bf16.mxu0 0
    %2947 = vmatpush1.bf16.msra.mxu0 0
    %2948 = vmatprep.subr.bf16.mxu0 0
    %2949 = vmatpush1.bf16.msra.mxu0 0
    %2950 = vmatprep.subr.bf16.mxu0 0
    %2951 = vmatpush1.bf16.msra.mxu0 0
    %2952 = vmatprep.subr.bf16.mxu0 0
    %2953 = vmatpush1.bf16.msra.mxu0 0
    %2954 = vmatprep.mubr.bf16.mxu0 0
    %2955 = vmatmul.mubr.bf16.gmra.mrb[0].mxu0 %v2691
    %v2956 = vpop.f32.mrb[0].mxu0
    %v2957 = vadd.f32 0.0, %v2956
    %v2958 = vpop.f32.mrb[0].mxu0
    %v2959 = vpop.f32.mrb[0].mxu0
    %v2960 = vpop.f32.mrb[0].mxu0
    %2961 = vdwg.mxu0
    %v2962 = vadd.f32 %v2878, %v2916
    %v2963 = vxor.u32 %v2962, 2147483648
    %v2964 = vmul.f32 %v2963, 1.442695
    %v2965 = vpow.pop %v2964
    %v2966 = vadd.f32 %v2965, 1.0
    %v2967 = vrcp.pop %v2966
    %v2968 = vmul.f32 1.0, %v2967
    %v2969 = vadd.f32 %v2879, %v2918
    %v2970 = vxor.u32 %v2969, 2147483648
    %v2971 = vmul.f32 %v2970, 1.442695
    %v2972 = vpow.pop %v2971
    %v2973 = vadd.f32 %v2972, 1.0
    %v2974 = vrcp.pop %v2973
    %v2975 = vmul.f32 1.0, %v2974
    %v2976 = vadd.f32 %v2957, %v579
    %v2977 = vmul.f32 %v2968, %v2976
    %v2978 = vadd.f32 %v2880, %v2977
    %v2979 = vtanh.pop %v2978
    %v2980 = vsub.f32 1.0, %v2975
    %v2981 = vmul.f32 %v2980, %v2979
    %v2982 = vmul.f32 %v2975, %v2690
    %v2983 = vadd.f32 %v2981, %v2982
    %v2984 = vpack.c.bf16 %v2983, %v2983
    %2985 = vmatprep.subr.bf16.mxu0 %v720
    %2986 = vmatpush1.bf16.msra.mxu0 %v719
    %2987 = vmatprep.subr.bf16.mxu0 %v723
    %2988 = vmatpush1.bf16.msra.mxu0 %v722
    %2989 = vmatprep.subr.bf16.mxu0 %v726
    %2990 = vmatpush1.bf16.msra.mxu0 %v725
    %2991 = vmatprep.subr.bf16.mxu0 %v729
    %2992 = vmatpush1.bf16.msra.mxu0 %v728
    %2993 = vmatprep.subr.bf16.mxu0 %v732
    %2994 = vmatpush1.bf16.msra.mxu0 %v731
    %2995 = vmatprep.subr.bf16.mxu0 %v735
    %2996 = vmatpush1.bf16.msra.mxu0 %v734
    %2997 = vmatprep.subr.bf16.mxu0 %v738
    %2998 = vmatpush1.bf16.msra.mxu0 %v737
    %2999 = vmatprep.subr.bf16.mxu0 %v741
    %3000 = vmatpush1.bf16.msra.mxu0 %v740
    %3001 = vmatprep.subr.bf16.mxu0 0
    %3002 = vmatpush1.bf16.msra.mxu0 0
    %3003 = vmatprep.subr.bf16.mxu0 0
    %3004 = vmatpush1.bf16.msra.mxu0 0
    %3005 = vmatprep.subr.bf16.mxu0 0
    %3006 = vmatpush1.bf16.msra.mxu0 0
    %3007 = vmatprep.subr.bf16.mxu0 0
    %3008 = vmatpush1.bf16.msra.mxu0 0
    %3009 = vmatprep.subr.bf16.mxu0 0
    %3010 = vmatpush1.bf16.msra.mxu0 0
    %3011 = vmatprep.subr.bf16.mxu0 0
    %3012 = vmatpush1.bf16.msra.mxu0 0
    %3013 = vmatprep.subr.bf16.mxu0 0
    %3014 = vmatpush1.bf16.msra.mxu0 0
    %3015 = vmatprep.subr.bf16.mxu0 0
    %3016 = vmatpush1.bf16.msra.mxu0 0
    %3017 = vmatprep.mubr.bf16.mxu0 0
    %3018 = vmatmul.mubr.bf16.gmra.mrb[0].mxu0 %v2984
    %v3019 = vpop.f32.mrb[0].mxu0
    %v3020 = vadd.f32 %v627, %v3019
    %v3021 = vpop.f32.mrb[0].mxu0
    %v3022 = vadd.f32 %v631, %v3021
    %v3023 = vpop.f32.mrb[0].mxu0
    %v3024 = vpop.f32.mrb[0].mxu0
    %3025 = vdwg.mxu0
    %3026 = vmatprep.subr.bf16.mxu0 0
    %3027 = vmatpush1.bf16.msra.mxu0 %v721
    %3028 = vmatprep.subr.bf16.mxu0 0
    %3029 = vmatpush1.bf16.msra.mxu0 %v724
    %3030 = vmatprep.subr.bf16.mxu0 0
    %3031 = vmatpush1.bf16.msra.mxu0 %v727
    %3032 = vmatprep.subr.bf16.mxu0 0
    %3033 = vmatpush1.bf16.msra.mxu0 %v730
    %3034 = vmatprep.subr.bf16.mxu0 0
    %3035 = vmatpush1.bf16.msra.mxu0 %v733
    %3036 = vmatprep.subr.bf16.mxu0 0
    %3037 = vmatpush1.bf16.msra.mxu0 %v736
    %3038 = vmatprep.subr.bf16.mxu0 0
    %3039 = vmatpush1.bf16.msra.mxu0 %v739
    %3040 = vmatprep.subr.bf16.mxu0 0
    %3041 = vmatpush1.bf16.msra.mxu0 %v742
    %3042 = vmatprep.subr.bf16.mxu0 0
    %3043 = vmatpush1.bf16.msra.mxu0 0
    %3044 = vmatprep.subr.bf16.mxu0 0
    %3045 = vmatpush1.bf16.msra.mxu0 0
    %3046 = vmatprep.subr.bf16.mxu0 0
    %3047 = vmatpush1.bf16.msra.mxu0 0
    %3048 = vmatprep.subr.bf16.mxu0 0
    %3049 = vmatpush1.bf16.msra.mxu0 0
    %3050 = vmatprep.subr.bf16.mxu0 0
    %3051 = vmatpush1.bf16.msra.mxu0 0
    %3052 = vmatprep.subr.bf16.mxu0 0
    %3053 = vmatpush1.bf16.msra.mxu0 0
    %3054 = vmatprep.subr.bf16.mxu0 0
    %3055 = vmatpush1.bf16.msra.mxu0 0
    %3056 = vmatprep.subr.bf16.mxu0 0
    %3057 = vmatpush1.bf16.msra.mxu0 0
    %3058 = vmatprep.mubr.bf16.mxu0 0
    %3059 = vmatmul.mubr.bf16.gmra.mrb[0].mxu0 %v2984
    %v3060 = vpop.f32.mrb[0].mxu0
    %v3061 = vadd.f32 %v635, %v3060
    %v3062 = vpop.f32.mrb[0].mxu0
    %v3063 = vpop.f32.mrb[0].mxu0
    %v3064 = vpop.f32.mrb[0].mxu0
    %3065 = vdwg.mxu0
    %v3066 = vpack.c.bf16 %v2876, %v2876
    %3067 = vmatprep.subr.bf16.mxu0 %v962
    %3068 = vmatpush1.bf16.msra.mxu0 %v961
    %3069 = vmatprep.subr.bf16.mxu0 %v965
    %3070 = vmatpush1.bf16.msra.mxu0 %v964
    %3071 = vmatprep.subr.bf16.mxu0 %v968
    %3072 = vmatpush1.bf16.msra.mxu0 %v967
    %3073 = vmatprep.subr.bf16.mxu0 %v971
    %3074 = vmatpush1.bf16.msra.mxu0 %v970
    %3075 = vmatprep.subr.bf16.mxu0 %v974
    %3076 = vmatpush1.bf16.msra.mxu0 %v973
    %3077 = vmatprep.subr.bf16.mxu0 %v977
    %3078 = vmatpush1.bf16.msra.mxu0 %v976
    %3079 = vmatprep.subr.bf16.mxu0 %v980
    %3080 = vmatpush1.bf16.msra.mxu0 %v979
    %3081 = vmatprep.subr.bf16.mxu0 %v983
    %3082 = vmatpush1.bf16.msra.mxu0 %v982
    %3083 = vmatprep.subr.bf16.mxu0 0
    %3084 = vmatpush1.bf16.msra.mxu0 0
    %3085 = vmatprep.subr.bf16.mxu0 0
    %3086 = vmatpush1.bf16.msra.mxu0 0
    %3087 = vmatprep.subr.bf16.mxu0 0
    %3088 = vmatpush1.bf16.msra.mxu0 0
    %3089 = vmatprep.subr.bf16.mxu0 0
    %3090 = vmatpush1.bf16.msra.mxu0 0
    %3091 = vmatprep.subr.bf16.mxu0 0
    %3092 = vmatpush1.bf16.msra.mxu0 0
    %3093 = vmatprep.subr.bf16.mxu0 0
    %3094 = vmatpush1.bf16.msra.mxu0 0
    %3095 = vmatprep.subr.bf16.mxu0 0
    %3096 = vmatpush1.bf16.msra.mxu0 0
    %3097 = vmatprep.subr.bf16.mxu0 0
    %3098 = vmatpush1.bf16.msra.mxu0 0
    %3099 = vmatprep.mubr.bf16.mxu0 0
    %3100 = vmatmul.mubr.bf16.gmra.mrb[0].mxu0 %v3066
    %v3101 = vpop.f32.mrb[0].mxu0
    %v3102 = vadd.f32 0.0, %v3101
    %v3103 = vpop.f32.mrb[0].mxu0
    %v3104 = vadd.f32 0.0, %v3103
    %v3105 = vpop.f32.mrb[0].mxu0
    %v3106 = vpop.f32.mrb[0].mxu0
    %3107 = vdwg.mxu0
    %3108 = vmatprep.subr.bf16.mxu0 0
    %3109 = vmatpush1.bf16.msra.mxu0 %v963
    %3110 = vmatprep.subr.bf16.mxu0 0
    %3111 = vmatpush1.bf16.msra.mxu0 %v966
    %3112 = vmatprep.subr.bf16.mxu0 0
    %3113 = vmatpush1.bf16.msra.mxu0 %v969
    %3114 = vmatprep.subr.bf16.mxu0 0
    %3115 = vmatpush1.bf16.msra.mxu0 %v972
    %3116 = vmatprep.subr.bf16.mxu0 0
    %3117 = vmatpush1.bf16.msra.mxu0 %v975
    %3118 = vmatprep.subr.bf16.mxu0 0
    %3119 = vmatpush1.bf16.msra.mxu0 %v978
    %3120 = vmatprep.subr.bf16.mxu0 0
    %3121 = vmatpush1.bf16.msra.mxu0 %v981
    %3122 = vmatprep.subr.bf16.mxu0 0
    %3123 = vmatpush1.bf16.msra.mxu0 %v984
    %3124 = vmatprep.subr.bf16.mxu0 0
    %3125 = vmatpush1.bf16.msra.mxu0 0
    %3126 = vmatprep.subr.bf16.mxu0 0
    %3127 = vmatpush1.bf16.msra.mxu0 0
    %3128 = vmatprep.subr.bf16.mxu0 0
    %3129 = vmatpush1.bf16.msra.mxu0 0
    %3130 = vmatprep.subr.bf16.mxu0 0
    %3131 = vmatpush1.bf16.msra.mxu0 0
    %3132 = vmatprep.subr.bf16.mxu0 0
    %3133 = vmatpush1.bf16.msra.mxu0 0
    %3134 = vmatprep.subr.bf16.mxu0 0
    %3135 = vmatpush1.bf16.msra.mxu0 0
    %3136 = vmatprep.subr.bf16.mxu0 0
    %3137 = vmatpush1.bf16.msra.mxu0 0
    %3138 = vmatprep.subr.bf16.mxu0 0
    %3139 = vmatpush1.bf16.msra.mxu0 0
    %3140 = vmatprep.mubr.bf16.mxu0 0
    %3141 = vmatmul.mubr.bf16.gmra.mrb[0].mxu0 %v3066
    %v3142 = vpop.f32.mrb[0].mxu0
    %v3143 = vadd.f32 0.0, %v3142
    %v3144 = vpop.f32.mrb[0].mxu0
    %v3145 = vpop.f32.mrb[0].mxu0
    %v3146 = vpop.f32.mrb[0].mxu0
    %3147 = vdwg.mxu0
    %v3148 = vadd.f32 %v3020, %v3102
    %v3149 = vxor.u32 %v3148, 2147483648
    %v3150 = vmul.f32 %v3149, 1.442695
    %v3151 = vpow.pop %v3150
    %v3152 = vadd.f32 %v3151, 1.0
    %v3153 = vrcp.pop %v3152
    %v3154 = vmul.f32 1.0, %v3153
    %v3155 = vadd.f32 %v3022, %v3104
    %v3156 = vxor.u32 %v3155, 2147483648
    %v3157 = vmul.f32 %v3156, 1.442695
    %v3158 = vpow.pop %v3157
    %v3159 = vadd.f32 %v3158, 1.0
    %v3160 = vrcp.pop %v3159
    %v3161 = vmul.f32 1.0, %v3160
    %v3162 = vadd.f32 %v3143, %v1109
    %v3163 = vmul.f32 %v3154, %v3162
    %v3164 = vadd.f32 %v3061, %v3163
    %v3165 = vtanh.pop %v3164
    %v3166 = vsub.f32 1.0, %v3161
    %v3167 = vmul.f32 %v3166, %v3165
    %v3168 = vmul.f32 %v3161, %v2876
    %v3169 = vadd.f32 %v3167, %v3168
    %3170 = vst [vmem:[#allocation3] sm:$0xff] %v2983
    %3171 = vst [vmem:[%s313] sm:$0xff] %v3169
    // Predicated region
    $region62: #{gru_model_forward.1} parent=1 // pred_check
      %p3172 = pneg %p82
    $region63: #{gru_model_forward.1} parent=1 // pred_check_branch
      %3174 = sbr.rel (%p3172) target = $region65
    $region64: #{gru_model_forward.1} parent=1 // pred_region
      %v3175 = vld [vmem:[%s9] sm:$0x1]
      %v3177 = vlaneseq
      %v3178 = vshrl.u32 %v3177, 7
      %v3179 = vsub.s32 0, %v3178
      %v3180 = vrot.slane %v3175, %v3179
      %v3182 = vmul.f32 %v3169, %v3180
      %3183 = vadd.xlane.f32.xlu0 %v3182
      %v3184 = vpop.xlane.xlu0 %3183
      %v3185 = vld [vmem:[#allocation4] sm:$0x1]
      %v3187 = vlaneseq
      %v3188 = vshrl.u32 %v3187, 7
      %v3189 = vsub.s32 0, %v3188
      %v3190 = vrot.slane %v3185, %v3189
      %v3192 = vadd.f32 %v3184, %v3190
      %vm3193 = vcmask 7168
      %3194 = vst.msk [vmem:[%s11] sm:$0xff] %vm3193, %v3192
    $region65: #{gru_model_forward.1} parent=1 // pred_fallthru
      _
    // Predicated region
    $region66: #{gru_model_forward.1} parent=1 // pred_check
      _
    $region67: #{gru_model_forward.1} parent=1 // pred_check_branch
      %3196 = sbr.rel (0) target = $region69
    $region68: #{gru_model_forward.1} parent=1 // pred_region
      _
    $region69: #{gru_model_forward.1} parent=1 // pred_fallthru
      _
    // Predicated region
    $region70: #{gru_model_forward.1} parent=1 // pred_check
      _
    $region71: #{gru_model_forward.1} parent=1 // pred_check_branch
      %3198 = sbr.rel (0) target = $region73
    $region72: #{gru_model_forward.1} parent=1 // pred_region
      _
    $region73: #{gru_model_forward.1} parent=1 // pred_fallthru
      _
    %3199 = vsyncpa [#allocation6], 1
    %3200 = vsyncpa [#allocation8], 1

</llo_original>
